<compile_context>
chip_gen: v7x
topology: tpu7x:2x2x1
jax: 0.10.0
libtpu: 0.0.40
codegen_flags: <defaults>
</compile_context>

<pallas_src>
import math

import jax
import jax.numpy as jnp
import numpy as np
from jax import lax
from jax.experimental import pallas as pl
from jax.experimental.pallas import tpu as pltpu

KSIZE = 7
PAD = (KSIZE - 1) // 2

BLOCK_B = 8      # one f32 sublane group of batch rows per grid step
HW_CHUNK = 128   # lane-aligned pixel chunk for the in-kernel phase loops


def _sammafb_kernel(x_ref, w1t_ref, b1_ref, w2t_ref, b2_ref, m_ref, bnp_ref,
                    o_ref, lhs_scr, s_scr):
    blk_b, C, HW = x_ref.shape
    inv_hw = 1.0 / float(HW)
    inv_c = 1.0 / float(C)

    hw_chunk = HW_CHUNK if HW % HW_CHUNK == 0 else HW
    n_hw = HW // hw_chunk

    # ---------------- Phase 1: ChannelGate pooling ----------------
    # avg / max over HW, chunked along lanes: only a (Bb, C, hw_chunk) slab
    # is live at a time; accumulators are a single (Bb, C) vreg each.
    def pool_step(i, carry):
        s_acc, m_acc = carry
        p0 = pl.multiple_of(i * hw_chunk, hw_chunk)
        xs = x_ref[:, :, pl.ds(p0, hw_chunk)].astype(jnp.float32)
        return (s_acc + jnp.sum(xs, axis=2),
                jnp.maximum(m_acc, jnp.max(xs, axis=2)))

    sum_c, max_c = lax.fori_loop(
        0, n_hw, pool_step,
        (jnp.zeros((blk_b, C), jnp.float32),
         jnp.full((blk_b, C), -jnp.inf, jnp.float32)))

    # Both pooling branches share the MLP -> evaluate it once on (2*Bb, C).
    pooled = jnp.concatenate([sum_c * inv_hw, max_c], axis=0)         # (2Bb, C)
    h = jnp.dot(pooled, w1t_ref[...], preferred_element_type=jnp.float32)
    h = jnp.maximum(h + b1_ref[...], 0.0)
    att = (jnp.dot(h, w2t_ref[...], preferred_element_type=jnp.float32)
           + b2_ref[...])                                             # (2Bb, C)
    c_scale = jax.nn.sigmoid(att[:blk_b] + att[blk_b:])               # (Bb, C)
    # Channels move lanes -> sublanes exactly once, hoisted out of the loops.
    c_scale_b = c_scale[:, :, None]                                   # (Bb,C,1)

    # ---------------- Phase 2: channel max/mean of the gated map ----------------
    # Writes the conv LHS [cmax | cmean] into a VMEM scratch at 128-aligned
    # lane offsets; the gated (Bb, C, HW) map is never materialized.
    def cpool_step(i, carry):
        p0 = pl.multiple_of(i * hw_chunk, hw_chunk)
        xs = x_ref[:, :, pl.ds(p0, hw_chunk)].astype(jnp.float32)
        xg = xs * c_scale_b                                           # (Bb,C,ck)
        lhs_scr[:, pl.ds(p0, hw_chunk)] = jnp.max(xg, axis=1)
        q0 = pl.multiple_of(HW + p0, hw_chunk)
        lhs_scr[:, pl.ds(q0, hw_chunk)] = jnp.sum(xg, axis=1) * inv_c
        return carry

    lax.fori_loop(0, n_hw, cpool_step, 0)

    # 7x7 'same' conv on [cmax | cmean] as ONE bf16 MXU matmul against the
    # precomputed dense operator, then folded eval-mode BN + sigmoid.
    lhs = lhs_scr[...].astype(jnp.bfloat16)                           # (Bb,2HW)
    conv = jnp.dot(lhs, m_ref[...], preferred_element_type=jnp.float32)
    s_scr[...] = jax.nn.sigmoid(conv * bnp_ref[0] + bnp_ref[1])       # (Bb, HW)

    # ---------------- Phase 3: gated output store ----------------
    def store_step(i, carry):
        p0 = pl.multiple_of(i * hw_chunk, hw_chunk)
        xs = x_ref[:, :, pl.ds(p0, hw_chunk)].astype(jnp.float32)
        ss = s_scr[:, pl.ds(p0, hw_chunk)][:, None, :]                # (Bb,1,ck)
        o_ref[:, :, pl.ds(p0, hw_chunk)] = (
            xs * c_scale_b * ss).astype(o_ref.dtype)
        return carry

    lax.fori_loop(0, n_hw, store_step, 0)


def _build_conv_operator(w_conv, H, W):
    """Fold the 7x7 zero-padded 'same' conv into one dense bf16 operator.

    Returns M2 of shape (2*H*W, H*W) such that for flattened row-major
    channel-pooled maps: conv_flat = [cmax | cmean] @ M2.
    Rows 0..HW-1 act on the channel-max map, rows HW..2HW-1 on the mean map.
    """
    w = w_conv[0].astype(jnp.float32)                                  # (2,7,7)
    ii = jnp.arange(H)[:, None] + jnp.arange(KSIZE)[None, :] - PAD     # (H, 7)
    jj = jnp.arange(W)[:, None] + jnp.arange(KSIZE)[None, :] - PAD     # (W, 7)
    vi = (ii >= 0) & (ii < H)
    vj = (jj >= 0) & (jj < W)
    oh_i = ((ii[..., None] == jnp.arange(H)) & vi[..., None]).astype(jnp.float32)
    oh_j = ((jj[..., None] == jnp.arange(W)) & vj[..., None]).astype(jnp.float32)
    # M_full[c, i, j, m, n] = sum_{k,l} w[c,k,l] * [m == i+k-3] * [n == j+l-3]
    m_full = jnp.einsum("ckl,ikm,jln->cijmn", w, oh_i, oh_j)
    m = m_full.reshape(2, H * W, H * W)
    mt = jnp.transpose(m, (0, 2, 1))                    # (2, HW_in, HW_out)
    return mt.reshape(2 * H * W, H * W).astype(jnp.bfloat16)


def _const_spec(shape, single_buffer):
    """BlockSpec for a grid-invariant operand (constant block index)."""
    index_map = lambda *_: (0,) * len(shape)
    if single_buffer:
        return pl.BlockSpec(shape, index_map, pipeline_mode=pl.Buffered(1))
    return pl.BlockSpec(shape, index_map)


def _build_call(B_pad, C, HW, hidden_pad, out_dtype, single_buffer):
    block_b = BLOCK_B
    in_specs = [
        pl.BlockSpec((block_b, C, HW), lambda b: (b, 0, 0)),
        _const_spec((C, hidden_pad), single_buffer),
        _const_spec((1, hidden_pad), single_buffer),
        _const_spec((hidden_pad, C), single_buffer),
        _const_spec((1, C), single_buffer),
        _const_spec((2 * HW, HW), single_buffer),
        pl.BlockSpec(memory_space=pltpu.MemorySpace.SMEM),
    ]
    return pl.pallas_call(
        _sammafb_kernel,
        out_shape=jax.ShapeDtypeStruct((B_pad, C, HW), out_dtype),
        grid_spec=pltpu.PrefetchScalarGridSpec(
            num_scalar_prefetch=0,
            grid=(B_pad // block_b,),
            in_specs=in_specs,
            out_specs=pl.BlockSpec((block_b, C, HW), lambda b: (b, 0, 0)),
            scratch_shapes=[
                pltpu.VMEM((block_b, 2 * HW), jnp.float32),   # conv LHS
                pltpu.VMEM((block_b, HW), jnp.float32),       # spatial gate
            ]),
        compiler_params=pltpu.CompilerParams(
            dimension_semantics=("parallel",),
            vmem_limit_bytes=32 * 1024 * 1024),
    )


def sammafb_forward(params, x):
    B, C, H, W = x.shape
    HW = H * W
    f32 = jnp.float32
    hidden = params["w1"].shape[0]
    hidden_pad = max(8, -(-hidden // 8) * 8)

    # MLP weights: transposed and zero-padded (hidden -> hidden_pad) so the
    # MXU N/K dims span at least one sublane group; padded units contribute 0.
    w1t = jnp.zeros((C, hidden_pad), f32).at[:, :hidden].set(params["w1"].T)
    b1 = jnp.zeros((1, hidden_pad), f32).at[:, :hidden].set(params["b1"])
    w2t = jnp.zeros((hidden_pad, C), f32).at[:hidden, :].set(params["w2"].T)
    b2 = params["b2"].astype(f32)[None, :]

    # Fused dense bf16 operator for the 7x7 spatial conv.
    m2 = _build_conv_operator(params["w_conv"], H, W)        # (2*HW, HW) bf16

    # Eval-mode BatchNorm folded to scale/shift (passed as SMEM scalars).
    eps = 1e-5
    bn_scale = params["bn_gamma"] / jnp.sqrt(params["bn_var"] + eps)
    bn_shift = params["bn_beta"] - params["bn_mean"] * bn_scale
    bnp = jnp.concatenate([bn_scale, bn_shift]).astype(f32)  # (2,)

    # Pad the batch up to a multiple of BLOCK_B instead of shrinking the block
    # (padded rows are computed and discarded; at these sizes this is free).
    B_pad = -(-B // BLOCK_B) * BLOCK_B
    xf = x.reshape(B, C, HW)
    if B_pad != B:
        xf = jnp.pad(xf, ((0, B_pad - B), (0, 0), (0, 0)))

    args = (xf, w1t, b1, w2t, b2, m2, bnp)
    try:
        out = _build_call(B_pad, C, HW, hidden_pad, x.dtype, True)(*args)
    except Exception:
        # Single-buffering the grid-invariant operands is a pure VMEM
        # optimization; fall back to default double buffering if this JAX
        # build rejects pipeline_mode=pl.Buffered(1).
        out = _build_call(B_pad, C, HW, hidden_pad, x.dtype, False)(*args)
    return out[:B].reshape(B, C, H, W)


def init_params(key, gate_channels, reduction_ratio=16):
    hidden = max(gate_channels // reduction_ratio, 1)
    k1, k2, k3, k4, k5 = jax.random.split(key, 5)
    lim1 = 1.0 / math.sqrt(gate_channels)
    lim2 = 1.0 / math.sqrt(hidden)
    limc = 1.0 / math.sqrt(2 * KSIZE * KSIZE)
    return dict(
        w1=jax.random.uniform(k1, (hidden, gate_channels), jnp.float32, -lim1, lim1),
        b1=jax.random.uniform(k2, (hidden,), jnp.float32, -lim1, lim1),
        w2=jax.random.uniform(k3, (gate_channels, hidden), jnp.float32, -lim2, lim2),
        b2=jax.random.uniform(k4, (gate_channels,), jnp.float32, -lim2, lim2),
        w_conv=jax.random.uniform(k5, (1, 2, KSIZE, KSIZE), jnp.float32, -limc, limc),
        bn_gamma=jnp.ones((1,), jnp.float32),
        bn_beta=jnp.zeros((1,), jnp.float32),
        bn_mean=jnp.zeros((1,), jnp.float32),
        bn_var=jnp.ones((1,), jnp.float32),
    )


def sammafb_reference(params, x):
    """Pure-JAX reference mirroring the PyTorch forward (BN in eval mode)."""
    avg = jnp.mean(x, axis=(2, 3))
    mx = jnp.max(x, axis=(2, 3))

    def mlp(v):
        h = jnp.maximum(v @ params["w1"].T + params["b1"], 0.0)
        return h @ params["w2"].T + params["b2"]

    att = mlp(avg) + mlp(mx)
    xc = x * jax.nn.sigmoid(att)[:, :, None, None]

    cmax = jnp.max(xc, axis=1, keepdims=True)
    cmean = jnp.mean(xc, axis=1, keepdims=True)
    comp = jnp.concatenate([cmax, cmean], axis=1)           # (B, 2, H, W)
    conv = lax.conv_general_dilated(
        comp, params["w_conv"], window_strides=(1, 1),
        padding=[(PAD, PAD), (PAD, PAD)],
        dimension_numbers=("NCHW", "OIHW", "NCHW"),
        precision=lax.Precision.HIGHEST)
    eps = 1e-5
    g = params["bn_gamma"][None, :, None, None]
    b = params["bn_beta"][None, :, None, None]
    m = params["bn_mean"][None, :, None, None]
    v = params["bn_var"][None, :, None, None]
    bn = (conv - m) / jnp.sqrt(v + eps) * g + b
    return xc * jax.nn.sigmoid(bn)


if __name__ == "__main__":
    key = jax.random.PRNGKey(0)
    kx, kp = jax.random.split(key)

    B, C, H, W = 2, 32, 16, 16              # gate_channels=32, reduction=16
    x = jax.random.normal(kx, (B, C, H, W), jnp.float32)
    params = init_params(kp, gate_channels=C, reduction_ratio=16)

    out = jax.block_until_ready(sammafb_forward(params, x))
    ref = jax.block_until_ready(sammafb_reference(params, x))

    # The SpatialGate conv runs on the MXU in bf16 (per perf guidance), so the
    # sigmoid gate differs from the f32 HIGHEST-precision reference by O(1e-3).
    np.testing.assert_allclose(np.asarray(out), np.asarray(ref),
                               rtol=2e-2, atol=2e-2)
    print("KERNEL_OK")
</pallas_src>

<mosaic_0001>
module attributes {stable_mosaic.version = 11 : i64} {
  func.func @_sammafb_kernel(%arg0: i32, %arg1: memref<8x32x256xf32, #tpu.memory_space<vmem>>, %arg2: memref<32x8xf32, #tpu.memory_space<vmem>>, %arg3: memref<1x8xf32, #tpu.memory_space<vmem>>, %arg4: memref<8x32xf32, #tpu.memory_space<vmem>>, %arg5: memref<1x32xf32, #tpu.memory_space<vmem>>, %arg6: memref<512x256xbf16, #tpu.memory_space<vmem>>, %arg7: memref<2xf32, #tpu.memory_space<smem>>, %arg8: memref<8x32x256xf32, #tpu.memory_space<vmem>>, %arg9: memref<8x512xf32, #tpu.memory_space<vmem>>, %arg10: memref<8x256xf32, #tpu.memory_space<vmem>>) attributes {dimension_semantics = [#tpu.dimension_semantics<parallel>], iteration_bounds = array<i64: 1>, scalar_prefetch = 0 : i64, scratch_operands = 2 : i64, tpu.core_type = #tpu.core_type<tc>, window_params = [{transform_indices = @transform_0, window_bounds = array<i64: 8, 32, 256>}, {pipeline_mode = #tpu.pipeline_mode<synchronous>, transform_indices = @transform_1, window_bounds = array<i64: 32, 8>}, {pipeline_mode = #tpu.pipeline_mode<synchronous>, transform_indices = @transform_2, window_bounds = array<i64: 1, 8>}, {pipeline_mode = #tpu.pipeline_mode<synchronous>, transform_indices = @transform_3, window_bounds = array<i64: 8, 32>}, {pipeline_mode = #tpu.pipeline_mode<synchronous>, transform_indices = @transform_4, window_bounds = array<i64: 1, 32>}, {pipeline_mode = #tpu.pipeline_mode<synchronous>, transform_indices = @transform_5, window_bounds = array<i64: 512, 256>}, {transform_indices = @transform_6, window_bounds = array<i64: 2>}, {transform_indices = @transform_7, window_bounds = array<i64: 8, 32, 256>}]} {
    %cst = arith.constant 0.000000e+00 : f32
    %0 = vector.broadcast %cst : f32 to vector<8x32xf32>
    %cst_0 = arith.constant 0xFF800000 : f32
    %1 = vector.broadcast %cst_0 : f32 to vector<8x32xf32>
    %c0_i32 = arith.constant 0 : i32
    %c2_i32 = arith.constant 2 : i32
    %2 = arith.addi %c0_i32, %c2_i32 : i32
    %c1_i32 = arith.constant 1 : i32
    %3:2 = scf.for %arg11 = %c0_i32 to %2 step %c1_i32 iter_args(%arg12 = %0, %arg13 = %1) -> (vector<8x32xf32>, vector<8x32xf32>)  : i32 {
      %c128_i32 = arith.constant 128 : i32
      %46 = arith.muli %arg11, %c128_i32 : i32
      %47 = tpu.assume_multiple %46, 128 : i32
      %c0_31 = arith.constant 0 : index
      %c0_32 = arith.constant 0 : index
      %48 = arith.index_cast %47 : i32 to index
      %49 = vector.load %arg1[%c0_31, %c0_32, %48] : memref<8x32x256xf32, #tpu.memory_space<vmem>>, vector<8x32x128xf32>
      %cst_33 = arith.constant dense<0.000000e+00> : vector<8x32xf32>
      %50 = vector.multi_reduction <add>, %49, %cst_33 [2] : vector<8x32x128xf32> to vector<8x32xf32>
      %51 = arith.addf %arg12, %50 : vector<8x32xf32>
      %cst_34 = arith.constant dense<0xFF800000> : vector<8x32xf32>
      %52 = vector.multi_reduction <maximumf>, %49, %cst_34 [2] : vector<8x32x128xf32> to vector<8x32xf32>
      %53 = arith.maximumf %arg13, %52 : vector<8x32xf32>
      scf.yield %51, %53 : vector<8x32xf32>, vector<8x32xf32>
    }
    %c2_i32_1 = arith.constant 2 : i32
    %cst_2 = arith.constant 3.906250e-03 : f32
    %4 = vector.broadcast %cst_2 : f32 to vector<8x32xf32>
    %5 = arith.mulf %3#0, %4 : vector<8x32xf32>
    %6 = tpu.concatenate %5, %3#1 in 0 : vector<8x32xf32>, vector<8x32xf32> -> vector<16x32xf32>
    %c0 = arith.constant 0 : index
    %c0_3 = arith.constant 0 : index
    %7 = vector.load %arg2[%c0, %c0_3] : memref<32x8xf32, #tpu.memory_space<vmem>>, vector<32x8xf32>
    %cst_4 = arith.constant dense<0.000000e+00> : vector<16x8xf32>
    %8 = tpu.matmul %6, %7, %cst_4 {dimension_numbers = #tpu.dot_dimension_numbers<[1], [0], [0], [1], [0, 0, 1, 1], [], []>} : vector<16x32xf32>, vector<32x8xf32>, vector<16x8xf32> -> vector<16x8xf32>
    %c0_5 = arith.constant 0 : index
    %c0_6 = arith.constant 0 : index
    %9 = vector.load %arg3[%c0_5, %c0_6] : memref<1x8xf32, #tpu.memory_space<vmem>>, vector<1x8xf32>
    %10 = vector.broadcast %9 : vector<1x8xf32> to vector<16x8xf32>
    %11 = arith.addf %8, %10 : vector<16x8xf32>
    %cst_7 = arith.constant 0.000000e+00 : f32
    %12 = vector.broadcast %cst_7 : f32 to vector<16x8xf32>
    %13 = arith.maximumf %11, %12 : vector<16x8xf32>
    %c0_8 = arith.constant 0 : index
    %c0_9 = arith.constant 0 : index
    %14 = vector.load %arg4[%c0_8, %c0_9] : memref<8x32xf32, #tpu.memory_space<vmem>>, vector<8x32xf32>
    %cst_10 = arith.constant dense<0.000000e+00> : vector<16x32xf32>
    %15 = tpu.matmul %13, %14, %cst_10 {dimension_numbers = #tpu.dot_dimension_numbers<[1], [0], [0], [1], [0, 0, 1, 1], [], []>} : vector<16x8xf32>, vector<8x32xf32>, vector<16x32xf32> -> vector<16x32xf32>
    %c0_11 = arith.constant 0 : index
    %c0_12 = arith.constant 0 : index
    %16 = vector.load %arg5[%c0_11, %c0_12] : memref<1x32xf32, #tpu.memory_space<vmem>>, vector<1x32xf32>
    %17 = vector.broadcast %16 : vector<1x32xf32> to vector<16x32xf32>
    %18 = arith.addf %15, %17 : vector<16x32xf32>
    %19 = vector.extract_strided_slice %18 {offsets = [0, 0], sizes = [8, 32], strides = [1, 1]} : vector<16x32xf32> to vector<8x32xf32>
    %20 = vector.extract_strided_slice %18 {offsets = [8, 0], sizes = [8, 32], strides = [1, 1]} : vector<16x32xf32> to vector<8x32xf32>
    %21 = arith.addf %19, %20 : vector<8x32xf32>
    %22 = arith.negf %21 : vector<8x32xf32>
    %23 = math.exp %22 : vector<8x32xf32>
    %cst_13 = arith.constant 1.000000e+00 : f32
    %24 = vector.broadcast %cst_13 : f32 to vector<8x32xf32>
    %25 = arith.addf %24, %23 : vector<8x32xf32>
    %26 = arith.divf %24, %25 : vector<8x32xf32>
    %27 = vector.shape_cast %26 : vector<8x32xf32> to vector<8x32x1xf32>
    %c0_i32_14 = arith.constant 0 : i32
    %c2_i32_15 = arith.constant 2 : i32
    %28 = arith.addi %c0_i32_14, %c2_i32_15 : i32
    %c1_i32_16 = arith.constant 1 : i32
    scf.for %arg11 = %c0_i32_14 to %28 step %c1_i32_16  : i32 {
      %c128_i32 = arith.constant 128 : i32
      %46 = arith.muli %arg11, %c128_i32 : i32
      %47 = tpu.assume_multiple %46, 128 : i32
      %c0_31 = arith.constant 0 : index
      %c0_32 = arith.constant 0 : index
      %48 = arith.index_cast %47 : i32 to index
      %49 = vector.load %arg1[%c0_31, %c0_32, %48] : memref<8x32x256xf32, #tpu.memory_space<vmem>>, vector<8x32x128xf32>
      %50 = vector.broadcast %27 : vector<8x32x1xf32> to vector<8x32x128xf32>
      %51 = arith.mulf %49, %50 : vector<8x32x128xf32>
      %cst_33 = arith.constant dense<0xFF800000> : vector<8x128xf32>
      %52 = vector.multi_reduction <maximumf>, %51, %cst_33 [1] : vector<8x32x128xf32> to vector<8x128xf32>
      %c0_34 = arith.constant 0 : index
      %53 = arith.index_cast %47 : i32 to index
      %54 = vector.load %arg9[%c0_34, %53] : memref<8x512xf32, #tpu.memory_space<vmem>>, vector<8x128xf32>
      tpu.vector_store %arg9[%c0_34, %53], %52 {strides = array<i32>} : memref<8x512xf32, #tpu.memory_space<vmem>>, vector<8x128xf32>,
      %c256_i32 = arith.constant 256 : i32
      %55 = arith.addi %c256_i32, %47 : i32
      %56 = tpu.assume_multiple %55, 128 : i32
      %cst_35 = arith.constant dense<0.000000e+00> : vector<8x128xf32>
      %57 = vector.multi_reduction <add>, %51, %cst_35 [1] : vector<8x32x128xf32> to vector<8x128xf32>
      %cst_36 = arith.constant 3.125000e-02 : f32
      %58 = vector.broadcast %cst_36 : f32 to vector<8x128xf32>
      %59 = arith.mulf %57, %58 : vector<8x128xf32>
      %c0_37 = arith.constant 0 : index
      %60 = arith.index_cast %56 : i32 to index
      %61 = vector.load %arg9[%c0_37, %60] : memref<8x512xf32, #tpu.memory_space<vmem>>, vector<8x128xf32>
      tpu.vector_store %arg9[%c0_37, %60], %59 {strides = array<i32>} : memref<8x512xf32, #tpu.memory_space<vmem>>, vector<8x128xf32>,
    }
    %c2_i32_17 = arith.constant 2 : i32
    %c0_18 = arith.constant 0 : index
    %c0_19 = arith.constant 0 : index
    %29 = vector.load %arg9[%c0_18, %c0_19] : memref<8x512xf32, #tpu.memory_space<vmem>>, vector<8x512xf32>
    %30 = arith.truncf %29 : vector<8x512xf32> to vector<8x512xbf16>
    %c0_20 = arith.constant 0 : index
    %c0_21 = arith.constant 0 : index
    %31 = vector.load %arg6[%c0_20, %c0_21] : memref<512x256xbf16, #tpu.memory_space<vmem>>, vector<512x256xbf16>
    %cst_22 = arith.constant dense<0.000000e+00> : vector<8x256xf32>
    %32 = tpu.matmul %30, %31, %cst_22 {dimension_numbers = #tpu.dot_dimension_numbers<[1], [0], [0], [1], [0, 0, 1, 1], [], []>} : vector<8x512xbf16>, vector<512x256xbf16>, vector<8x256xf32> -> vector<8x256xf32>
    %c0_23 = arith.constant 0 : index
    %33 = memref.load %arg7[%c0_23] : memref<2xf32, #tpu.memory_space<smem>>
    %34 = vector.broadcast %33 : f32 to vector<8x256xf32>
    %35 = arith.mulf %32, %34 : vector<8x256xf32>
    %c1 = arith.constant 1 : index
    %36 = memref.load %arg7[%c1] : memref<2xf32, #tpu.memory_space<smem>>
    %37 = vector.broadcast %36 : f32 to vector<8x256xf32>
    %38 = arith.addf %35, %37 : vector<8x256xf32>
    %39 = arith.negf %38 : vector<8x256xf32>
    %40 = math.exp %39 : vector<8x256xf32>
    %cst_24 = arith.constant 1.000000e+00 : f32
    %41 = vector.broadcast %cst_24 : f32 to vector<8x256xf32>
    %42 = arith.addf %41, %40 : vector<8x256xf32>
    %43 = arith.divf %41, %42 : vector<8x256xf32>
    %c0_25 = arith.constant 0 : index
    %c0_26 = arith.constant 0 : index
    %44 = vector.load %arg10[%c0_25, %c0_26] : memref<8x256xf32, #tpu.memory_space<vmem>>, vector<8x256xf32>
    tpu.vector_store %arg10[%c0_25, %c0_26], %43 {strides = array<i32>} : memref<8x256xf32, #tpu.memory_space<vmem>>, vector<8x256xf32>,
    %c0_i32_27 = arith.constant 0 : i32
    %c2_i32_28 = arith.constant 2 : i32
    %45 = arith.addi %c0_i32_27, %c2_i32_28 : i32
    %c1_i32_29 = arith.constant 1 : i32
    scf.for %arg11 = %c0_i32_27 to %45 step %c1_i32_29  : i32 {
      %c128_i32 = arith.constant 128 : i32
      %46 = arith.muli %arg11, %c128_i32 : i32
      %47 = tpu.assume_multiple %46, 128 : i32
      %c0_31 = arith.constant 0 : index
      %c0_32 = arith.constant 0 : index
      %48 = arith.index_cast %47 : i32 to index
      %49 = vector.load %arg1[%c0_31, %c0_32, %48] : memref<8x32x256xf32, #tpu.memory_space<vmem>>, vector<8x32x128xf32>
      %c0_33 = arith.constant 0 : index
      %50 = arith.index_cast %47 : i32 to index
      %51 = vector.load %arg10[%c0_33, %50] : memref<8x256xf32, #tpu.memory_space<vmem>>, vector<8x128xf32>
      %52 = vector.shape_cast %51 : vector<8x128xf32> to vector<8x1x128xf32>
      %53 = vector.broadcast %27 : vector<8x32x1xf32> to vector<8x32x128xf32>
      %54 = arith.mulf %49, %53 : vector<8x32x128xf32>
      %55 = vector.broadcast %52 : vector<8x1x128xf32> to vector<8x32x128xf32>
      %56 = arith.mulf %54, %55 : vector<8x32x128xf32>
      %c0_34 = arith.constant 0 : index
      %c0_35 = arith.constant 0 : index
      %57 = arith.index_cast %47 : i32 to index
      %58 = vector.load %arg8[%c0_34, %c0_35, %57] : memref<8x32x256xf32, #tpu.memory_space<vmem>>, vector<8x32x128xf32>
      tpu.vector_store %arg8[%c0_34, %c0_35, %57], %56 {strides = array<i32>} : memref<8x32x256xf32, #tpu.memory_space<vmem>>, vector<8x32x128xf32>,
    }
    %c2_i32_30 = arith.constant 2 : i32
    return
  }
  func.func @transform_0(%arg0: i32) -> (i32, i32, i32) {
    %c0_i32 = arith.constant 0 : i32
    %c0_i32_0 = arith.constant 0 : i32
    %c0_i32_1 = arith.constant 0 : i32
    return %arg0, %c0_i32, %c0_i32_0 : i32, i32, i32
  }
  func.func @transform_1(%arg0: i32) -> (i32, i32) {
    %c0_i32 = arith.constant 0 : i32
    %c0_i32_0 = arith.constant 0 : i32
    %c0_i32_1 = arith.constant 0 : i32
    return %c0_i32, %c0_i32_0 : i32, i32
  }
  func.func @transform_2(%arg0: i32) -> (i32, i32) {
    %c0_i32 = arith.constant 0 : i32
    %c0_i32_0 = arith.constant 0 : i32
    %c0_i32_1 = arith.constant 0 : i32
    return %c0_i32, %c0_i32_0 : i32, i32
  }
  func.func @transform_3(%arg0: i32) -> (i32, i32) {
    %c0_i32 = arith.constant 0 : i32
    %c0_i32_0 = arith.constant 0 : i32
    %c0_i32_1 = arith.constant 0 : i32
    return %c0_i32, %c0_i32_0 : i32, i32
  }
  func.func @transform_4(%arg0: i32) -> (i32, i32) {
    %c0_i32 = arith.constant 0 : i32
    %c0_i32_0 = arith.constant 0 : i32
    %c0_i32_1 = arith.constant 0 : i32
    return %c0_i32, %c0_i32_0 : i32, i32
  }
  func.func @transform_5(%arg0: i32) -> (i32, i32) {
    %c0_i32 = arith.constant 0 : i32
    %c0_i32_0 = arith.constant 0 : i32
    %c0_i32_1 = arith.constant 0 : i32
    return %c0_i32, %c0_i32_0 : i32, i32
  }
  func.func @transform_6(%arg0: i32) -> i32 {
    %c0_i32 = arith.constant 0 : i32
    %c0_i32_0 = arith.constant 0 : i32
    return %c0_i32 : i32
  }
  func.func @transform_7(%arg0: i32) -> (i32, i32, i32) {
    %c0_i32 = arith.constant 0 : i32
    %c0_i32_0 = arith.constant 0 : i32
    %c0_i32_1 = arith.constant 0 : i32
    return %arg0, %c0_i32, %c0_i32_0 : i32, i32, i32
  }
}

module attributes {stable_mosaic.version = 11 : i64} {
  func.func @_sammafb_kernel(%arg0: i32, %arg1: memref<8x32x256xf32, #tpu.memory_space<vmem>>, %arg2: memref<32x8xf32, #tpu.memory_space<vmem>>, %arg3: memref<1x8xf32, #tpu.memory_space<vmem>>, %arg4: memref<8x32xf32, #tpu.memory_space<vmem>>, %arg5: memref<1x32xf32, #tpu.memory_space<vmem>>, %arg6: memref<512x256xbf16, #tpu.memory_space<vmem>>, %arg7: memref<2xf32, #tpu.memory_space<smem>>, %arg8: memref<8x32x256xf32, #tpu.memory_space<vmem>>, %arg9: memref<8x512xf32, #tpu.memory_space<vmem>>, %arg10: memref<8x256xf32, #tpu.memory_space<vmem>>) attributes {dimension_semantics = [#tpu.dimension_semantics<parallel>], iteration_bounds = array<i64: 1>, scalar_prefetch = 0 : i64, scratch_operands = 2 : i64, tpu.core_type = #tpu.core_type<tc>, window_params = [{transform_indices = @transform_0, window_bounds = array<i64: 8, 32, 256>}, {pipeline_mode = #tpu.pipeline_mode<synchronous>, transform_indices = @transform_1, window_bounds = array<i64: 32, 8>}, {pipeline_mode = #tpu.pipeline_mode<synchronous>, transform_indices = @transform_2, window_bounds = array<i64: 1, 8>}, {pipeline_mode = #tpu.pipeline_mode<synchronous>, transform_indices = @transform_3, window_bounds = array<i64: 8, 32>}, {pipeline_mode = #tpu.pipeline_mode<synchronous>, transform_indices = @transform_4, window_bounds = array<i64: 1, 32>}, {pipeline_mode = #tpu.pipeline_mode<synchronous>, transform_indices = @transform_5, window_bounds = array<i64: 512, 256>}, {transform_indices = @transform_6, window_bounds = array<i64: 2>}, {transform_indices = @transform_7, window_bounds = array<i64: 8, 32, 256>}]} {
    %cst = arith.constant 0.000000e+00 : f32
    %0 = vector.broadcast %cst : f32 to vector<8x32xf32>
    %cst_0 = arith.constant 0xFF800000 : f32
    %1 = vector.broadcast %cst_0 : f32 to vector<8x32xf32>
    %c0_i32 = arith.constant 0 : i32
    %c2_i32 = arith.constant 2 : i32
    %2 = arith.addi %c0_i32, %c2_i32 : i32
    %c1_i32 = arith.constant 1 : i32
    %3:2 = scf.for %arg11 = %c0_i32 to %2 step %c1_i32 iter_args(%arg12 = %0, %arg13 = %1) -> (vector<8x32xf32>, vector<8x32xf32>)  : i32 {
      %c128_i32 = arith.constant 128 : i32
      %46 = arith.muli %arg11, %c128_i32 : i32
      %47 = tpu.assume_multiple %46, 128 : i32
      %c0_31 = arith.constant 0 : index
      %c0_32 = arith.constant 0 : index
      %48 = arith.index_cast %47 : i32 to index
      %49 = vector.load %arg1[%c0_31, %c0_32, %48] : memref<8x32x256xf32, #tpu.memory_space<vmem>>, vector<8x32x128xf32>
      %cst_33 = arith.constant dense<0.000000e+00> : vector<8x32xf32>
      %50 = vector.multi_reduction <add>, %49, %cst_33 [2] : vector<8x32x128xf32> to vector<8x32xf32>
      %51 = arith.addf %arg12, %50 : vector<8x32xf32>
      %cst_34 = arith.constant dense<0xFF800000> : vector<8x32xf32>
      %52 = vector.multi_reduction <maximumf>, %49, %cst_34 [2] : vector<8x32x128xf32> to vector<8x32xf32>
      %53 = arith.maximumf %arg13, %52 : vector<8x32xf32>
      scf.yield %51, %53 : vector<8x32xf32>, vector<8x32xf32>
    }
    %c2_i32_1 = arith.constant 2 : i32
    %cst_2 = arith.constant 3.906250e-03 : f32
    %4 = vector.broadcast %cst_2 : f32 to vector<8x32xf32>
    %5 = arith.mulf %3#0, %4 : vector<8x32xf32>
    %6 = tpu.concatenate %5, %3#1 in 0 : vector<8x32xf32>, vector<8x32xf32> -> vector<16x32xf32>
    %c0 = arith.constant 0 : index
    %c0_3 = arith.constant 0 : index
    %7 = vector.load %arg2[%c0, %c0_3] : memref<32x8xf32, #tpu.memory_space<vmem>>, vector<32x8xf32>
    %cst_4 = arith.constant dense<0.000000e+00> : vector<16x8xf32>
    %8 = tpu.matmul %6, %7, %cst_4 {dimension_numbers = #tpu.dot_dimension_numbers<[1], [0], [0], [1], [0, 0, 1, 1], [], []>} : vector<16x32xf32>, vector<32x8xf32>, vector<16x8xf32> -> vector<16x8xf32>
    %c0_5 = arith.constant 0 : index
    %c0_6 = arith.constant 0 : index
    %9 = vector.load %arg3[%c0_5, %c0_6] : memref<1x8xf32, #tpu.memory_space<vmem>>, vector<1x8xf32>
    %10 = vector.broadcast %9 : vector<1x8xf32> to vector<16x8xf32>
    %11 = arith.addf %8, %10 : vector<16x8xf32>
    %cst_7 = arith.constant 0.000000e+00 : f32
    %12 = vector.broadcast %cst_7 : f32 to vector<16x8xf32>
    %13 = arith.maximumf %11, %12 : vector<16x8xf32>
    %c0_8 = arith.constant 0 : index
    %c0_9 = arith.constant 0 : index
    %14 = vector.load %arg4[%c0_8, %c0_9] : memref<8x32xf32, #tpu.memory_space<vmem>>, vector<8x32xf32>
    %cst_10 = arith.constant dense<0.000000e+00> : vector<16x32xf32>
    %15 = tpu.matmul %13, %14, %cst_10 {dimension_numbers = #tpu.dot_dimension_numbers<[1], [0], [0], [1], [0, 0, 1, 1], [], []>} : vector<16x8xf32>, vector<8x32xf32>, vector<16x32xf32> -> vector<16x32xf32>
    %c0_11 = arith.constant 0 : index
    %c0_12 = arith.constant 0 : index
    %16 = vector.load %arg5[%c0_11, %c0_12] : memref<1x32xf32, #tpu.memory_space<vmem>>, vector<1x32xf32>
    %17 = vector.broadcast %16 : vector<1x32xf32> to vector<16x32xf32>
    %18 = arith.addf %15, %17 : vector<16x32xf32>
    %19 = vector.extract_strided_slice %18 {offsets = [0, 0], sizes = [8, 32], strides = [1, 1]} : vector<16x32xf32> to vector<8x32xf32>
    %20 = vector.extract_strided_slice %18 {offsets = [8, 0], sizes = [8, 32], strides = [1, 1]} : vector<16x32xf32> to vector<8x32xf32>
    %21 = arith.addf %19, %20 : vector<8x32xf32>
    %22 = arith.negf %21 : vector<8x32xf32>
    %23 = math.exp %22 : vector<8x32xf32>
    %cst_13 = arith.constant 1.000000e+00 : f32
    %24 = vector.broadcast %cst_13 : f32 to vector<8x32xf32>
    %25 = arith.addf %24, %23 : vector<8x32xf32>
    %26 = arith.divf %24, %25 : vector<8x32xf32>
    %27 = vector.shape_cast %26 : vector<8x32xf32> to vector<8x32x1xf32>
    %c0_i32_14 = arith.constant 0 : i32
    %c2_i32_15 = arith.constant 2 : i32
    %28 = arith.addi %c0_i32_14, %c2_i32_15 : i32
    %c1_i32_16 = arith.constant 1 : i32
    scf.for %arg11 = %c0_i32_14 to %28 step %c1_i32_16  : i32 {
      %c128_i32 = arith.constant 128 : i32
      %46 = arith.muli %arg11, %c128_i32 : i32
      %47 = tpu.assume_multiple %46, 128 : i32
      %c0_31 = arith.constant 0 : index
      %c0_32 = arith.constant 0 : index
      %48 = arith.index_cast %47 : i32 to index
      %49 = vector.load %arg1[%c0_31, %c0_32, %48] : memref<8x32x256xf32, #tpu.memory_space<vmem>>, vector<8x32x128xf32>
      %50 = vector.broadcast %27 : vector<8x32x1xf32> to vector<8x32x128xf32>
      %51 = arith.mulf %49, %50 : vector<8x32x128xf32>
      %cst_33 = arith.constant dense<0xFF800000> : vector<8x128xf32>
      %52 = vector.multi_reduction <maximumf>, %51, %cst_33 [1] : vector<8x32x128xf32> to vector<8x128xf32>
      %c0_34 = arith.constant 0 : index
      %53 = arith.index_cast %47 : i32 to index
      %54 = vector.load %arg9[%c0_34, %53] : memref<8x512xf32, #tpu.memory_space<vmem>>, vector<8x128xf32>
      tpu.vector_store %arg9[%c0_34, %53], %52 {strides = array<i32>} : memref<8x512xf32, #tpu.memory_space<vmem>>, vector<8x128xf32>,
      %c256_i32 = arith.constant 256 : i32
      %55 = arith.addi %c256_i32, %47 : i32
      %56 = tpu.assume_multiple %55, 128 : i32
      %cst_35 = arith.constant dense<0.000000e+00> : vector<8x128xf32>
      %57 = vector.multi_reduction <add>, %51, %cst_35 [1] : vector<8x32x128xf32> to vector<8x128xf32>
      %cst_36 = arith.constant 3.125000e-02 : f32
      %58 = vector.broadcast %cst_36 : f32 to vector<8x128xf32>
      %59 = arith.mulf %57, %58 : vector<8x128xf32>
      %c0_37 = arith.constant 0 : index
      %60 = arith.index_cast %56 : i32 to index
      %61 = vector.load %arg9[%c0_37, %60] : memref<8x512xf32, #tpu.memory_space<vmem>>, vector<8x128xf32>
      tpu.vector_store %arg9[%c0_37, %60], %59 {strides = array<i32>} : memref<8x512xf32, #tpu.memory_space<vmem>>, vector<8x128xf32>,
    }
    %c2_i32_17 = arith.constant 2 : i32
    %c0_18 = arith.constant 0 : index
    %c0_19 = arith.constant 0 : index
    %29 = vector.load %arg9[%c0_18, %c0_19] : memref<8x512xf32, #tpu.memory_space<vmem>>, vector<8x512xf32>
    %30 = arith.truncf %29 : vector<8x512xf32> to vector<8x512xbf16>
    %c0_20 = arith.constant 0 : index
    %c0_21 = arith.constant 0 : index
    %31 = vector.load %arg6[%c0_20, %c0_21] : memref<512x256xbf16, #tpu.memory_space<vmem>>, vector<512x256xbf16>
    %cst_22 = arith.constant dense<0.000000e+00> : vector<8x256xf32>
    %32 = tpu.matmul %30, %31, %cst_22 {dimension_numbers = #tpu.dot_dimension_numbers<[1], [0], [0], [1], [0, 0, 1, 1], [], []>} : vector<8x512xbf16>, vector<512x256xbf16>, vector<8x256xf32> -> vector<8x256xf32>
    %c0_23 = arith.constant 0 : index
    %33 = memref.load %arg7[%c0_23] : memref<2xf32, #tpu.memory_space<smem>>
    %34 = vector.broadcast %33 : f32 to vector<8x256xf32>
    %35 = arith.mulf %32, %34 : vector<8x256xf32>
    %c1 = arith.constant 1 : index
    %36 = memref.load %arg7[%c1] : memref<2xf32, #tpu.memory_space<smem>>
    %37 = vector.broadcast %36 : f32 to vector<8x256xf32>
    %38 = arith.addf %35, %37 : vector<8x256xf32>
    %39 = arith.negf %38 : vector<8x256xf32>
    %40 = math.exp %39 : vector<8x256xf32>
    %cst_24 = arith.constant 1.000000e+00 : f32
    %41 = vector.broadcast %cst_24 : f32 to vector<8x256xf32>
    %42 = arith.addf %41, %40 : vector<8x256xf32>
    %43 = arith.divf %41, %42 : vector<8x256xf32>
    %c0_25 = arith.constant 0 : index
    %c0_26 = arith.constant 0 : index
    %44 = vector.load %arg10[%c0_25, %c0_26] : memref<8x256xf32, #tpu.memory_space<vmem>>, vector<8x256xf32>
    tpu.vector_store %arg10[%c0_25, %c0_26], %43 {strides = array<i32>} : memref<8x256xf32, #tpu.memory_space<vmem>>, vector<8x256xf32>,
    %c0_i32_27 = arith.constant 0 : i32
    %c2_i32_28 = arith.constant 2 : i32
    %45 = arith.addi %c0_i32_27, %c2_i32_28 : i32
    %c1_i32_29 = arith.constant 1 : i32
    scf.for %arg11 = %c0_i32_27 to %45 step %c1_i32_29  : i32 {
      %c128_i32 = arith.constant 128 : i32
      %46 = arith.muli %arg11, %c128_i32 : i32
      %47 = tpu.assume_multiple %46, 128 : i32
      %c0_31 = arith.constant 0 : index
      %c0_32 = arith.constant 0 : index
      %48 = arith.index_cast %47 : i32 to index
      %49 = vector.load %arg1[%c0_31, %c0_32, %48] : memref<8x32x256xf32, #tpu.memory_space<vmem>>, vector<8x32x128xf32>
      %c0_33 = arith.constant 0 : index
      %50 = arith.index_cast %47 : i32 to index
      %51 = vector.load %arg10[%c0_33, %50] : memref<8x256xf32, #tpu.memory_space<vmem>>, vector<8x128xf32>
      %52 = vector.shape_cast %51 : vector<8x128xf32> to vector<8x1x128xf32>
      %53 = vector.broadcast %27 : vector<8x32x1xf32> to vector<8x32x128xf32>
      %54 = arith.mulf %49, %53 : vector<8x32x128xf32>
      %55 = vector.broadcast %52 : vector<8x1x128xf32> to vector<8x32x128xf32>
      %56 = arith.mulf %54, %55 : vector<8x32x128xf32>
      %c0_34 = arith.constant 0 : index
      %c0_35 = arith.constant 0 : index
      %57 = arith.index_cast %47 : i32 to index
      %58 = vector.load %arg8[%c0_34, %c0_35, %57] : memref<8x32x256xf32, #tpu.memory_space<vmem>>, vector<8x32x128xf32>
      tpu.vector_store %arg8[%c0_34, %c0_35, %57], %56 {strides = array<i32>} : memref<8x32x256xf32, #tpu.memory_space<vmem>>, vector<8x32x128xf32>,
    }
    %c2_i32_30 = arith.constant 2 : i32
    return
  }
  func.func @transform_0(%arg0: i32) -> (i32, i32, i32) {
    %c0_i32 = arith.constant 0 : i32
    %c0_i32_0 = arith.constant 0 : i32
    %c0_i32_1 = arith.constant 0 : i32
    return %arg0, %c0_i32, %c0_i32_0 : i32, i32, i32
  }
  func.func @transform_1(%arg0: i32) -> (i32, i32) {
    %c0_i32 = arith.constant 0 : i32
    %c0_i32_0 = arith.constant 0 : i32
    %c0_i32_1 = arith.constant 0 : i32
    return %c0_i32, %c0_i32_0 : i32, i32
  }
  func.func @transform_2(%arg0: i32) -> (i32, i32) {
    %c0_i32 = arith.constant 0 : i32
    %c0_i32_0 = arith.constant 0 : i32
    %c0_i32_1 = arith.constant 0 : i32
    return %c0_i32, %c0_i32_0 : i32, i32
  }
  func.func @transform_3(%arg0: i32) -> (i32, i32) {
    %c0_i32 = arith.constant 0 : i32
    %c0_i32_0 = arith.constant 0 : i32
    %c0_i32_1 = arith.constant 0 : i32
    return %c0_i32, %c0_i32_0 : i32, i32
  }
  func.func @transform_4(%arg0: i32) -> (i32, i32) {
    %c0_i32 = arith.constant 0 : i32
    %c0_i32_0 = arith.constant 0 : i32
    %c0_i32_1 = arith.constant 0 : i32
    return %c0_i32, %c0_i32_0 : i32, i32
  }
  func.func @transform_5(%arg0: i32) -> (i32, i32) {
    %c0_i32 = arith.constant 0 : i32
    %c0_i32_0 = arith.constant 0 : i32
    %c0_i32_1 = arith.constant 0 : i32
    return %c0_i32, %c0_i32_0 : i32, i32
  }
  func.func @transform_6(%arg0: i32) -> i32 {
    %c0_i32 = arith.constant 0 : i32
    %c0_i32_0 = arith.constant 0 : i32
    return %c0_i32 : i32
  }
  func.func @transform_7(%arg0: i32) -> (i32, i32, i32) {
    %c0_i32 = arith.constant 0 : i32
    %c0_i32_0 = arith.constant 0 : i32
    %c0_i32_1 = arith.constant 0 : i32
    return %arg0, %c0_i32, %c0_i32_0 : i32, i32, i32
  }
}

</mosaic_0001>

<llo_original>
// kernel: tpu_custom_call.1
$region0: #{tpu_custom_call.1}
  #allocation0 [shape = 'u32[]', space=smem, size = 0x4, offset = 0x4, fixed_abs, tag = 'smem constant byte address 0x4 - core index']
  #allocation1 [shape = 'u32[144,128]{1,0:T(1,128)}', space=vmem, size = 0x12000, scoped, tag = 'internal scratch']
  #allocation2 [shape = 'f32[8,512]{1,0:T(8,128)}', space=vmem, size = 0x4000, scoped, tag = 'scratch operand']
  #allocation3 [shape = 'f32[8,256]{1,0:T(8,128)}', space=vmem, size = 0x2000, scoped, tag = 'scratch operand']
  %s0 = inlined_call_operand.hbm [shape: f32[8,32,256], index: 0, kind: input, shape index: {}]
  %s1 = inlined_call_operand.vmem [shape: f32[32,8], index: 1, kind: input, shape index: {}]
  %s2 = inlined_call_operand.vmem [shape: f32[1,8], index: 2, kind: input, shape index: {}]
  %s3 = inlined_call_operand.vmem [shape: f32[8,32], index: 3, kind: input, shape index: {}]
  %s4 = inlined_call_operand.vmem [shape: f32[1,32], index: 4, kind: input, shape index: {}]
  %s5 = inlined_call_operand.hbm [shape: bf16[512,256], index: 5, kind: input, shape index: {}]
  %s6 = inlined_call_operand.vmem [shape: f32[2], index: 6, kind: input, shape index: {}]
  %s7 = inlined_call_operand.hbm [shape: f32[8,32,256], index: 7, kind: output, shape index: {}]
  %s8 = sld [smem:[#allocation0]]
  $region71: #{tpu_custom_call.1} parent=0
    _
  %s10 = ssub.s32 1, %s8
  %s11 = scalar_select 0, %s10, %s8
  $region1: #{tpu_custom_call.1} parent=0
    #allocation4 [shape = 'u8[262144]{0}', space=vmem, size = 0x40000, scoped, tag = 'input window, operand 0, single buffered']
    #allocation5 [shape = 's32[1]{0}', space=sflag, size = 0x4, scoped, tag = 'scoped memory for tpu_custom_call.1']
    #allocation6 [shape = 's32[1]{0}', space=sflag, size = 0x4, scoped, tag = 'scoped memory for tpu_custom_call.1']
    #allocation7 [shape = 's32[1]{0}', space=sflag, size = 0x4, scoped, tag = 'scoped memory for tpu_custom_call.1']
    #allocation8 [shape = 'u8[262144]{0}', space=vmem, size = 0x40000, scoped, tag = 'input window, operand 5, single buffered']
    #allocation9 [shape = 's32[1]{0}', space=sflag, size = 0x4, scoped, tag = 'scoped memory for tpu_custom_call.1']
    #allocation10 [shape = 'u8[512]{0}', space=smem, size = 0x200, scoped, tag = 'input window, operand 6, single buffered']
    #allocation11 [shape = 'u8[262144]{0}', space=vmem, size = 0x40000, scoped, tag = 'output window, operand 0, single buffered']
    %12 = vsyncpa [#allocation5], 0
    %13 = vsyncpa [#allocation9], 0
    %14 = vsyncpa [#allocation7], 0
    %15 = vsyncpa [#allocation6], 0
    // Predicated region
    $region2: #{tpu_custom_call.1} parent=1 // pred_check
      _
    $region3: #{tpu_custom_call.1} parent=1 // pred_check_branch
      %17 = sbr.rel (0) target = $region5
    $region4: #{tpu_custom_call.1} parent=1 // pred_region
      %s19 = ssub.s32 8192, 8192
      %20 = vsyncadd [#allocation5], %s19
      %s21 = sshll.u32 [#allocation4], 4
      %s22 = int_to_ptr.vmem [resolvable:$true] %s21
      %27 = dma.hbm_to_vmem [thread:$0]  %s0, 8192, %s22, [#allocation5], 256, 256, 16
    $region5: #{tpu_custom_call.1} parent=1 // pred_fallthru
      _
    // Predicated region
    $region6: #{tpu_custom_call.1} parent=1 // pred_check
      _
    $region7: #{tpu_custom_call.1} parent=1 // pred_check_branch
      %29 = sbr.rel (0) target = $region9
    $region8: #{tpu_custom_call.1} parent=1 // pred_region
      _
    $region9: #{tpu_custom_call.1} parent=1 // pred_fallthru
      _
    // Predicated region
    $region10: #{tpu_custom_call.1} parent=1 // pred_check
      _
    $region11: #{tpu_custom_call.1} parent=1 // pred_check_branch
      %31 = sbr.rel (0) target = $region13
    $region12: #{tpu_custom_call.1} parent=1 // pred_region
      _
    $region13: #{tpu_custom_call.1} parent=1 // pred_fallthru
      _
    // Predicated region
    $region14: #{tpu_custom_call.1} parent=1 // pred_check
      _
    $region15: #{tpu_custom_call.1} parent=1 // pred_check_branch
      %33 = sbr.rel (0) target = $region17
    $region16: #{tpu_custom_call.1} parent=1 // pred_region
      _
    $region17: #{tpu_custom_call.1} parent=1 // pred_fallthru
      _
    // Predicated region
    $region18: #{tpu_custom_call.1} parent=1 // pred_check
      _
    $region19: #{tpu_custom_call.1} parent=1 // pred_check_branch
      %35 = sbr.rel (0) target = $region21
    $region20: #{tpu_custom_call.1} parent=1 // pred_region
      _
    $region21: #{tpu_custom_call.1} parent=1 // pred_fallthru
      _
    // Predicated region
    $region22: #{tpu_custom_call.1} parent=1 // pred_check
      _
    $region23: #{tpu_custom_call.1} parent=1 // pred_check_branch
      %37 = sbr.rel (0) target = $region25
    $region24: #{tpu_custom_call.1} parent=1 // pred_region
      %s39 = ssub.s32 8192, 8192
      %40 = vsyncadd [#allocation9], %s39
      %s41 = sshll.u32 [#allocation8], 4
      %s42 = int_to_ptr.vmem [resolvable:$true] %s41
      %47 = dma.hbm_to_vmem [thread:$0]  %s5, 8192, %s42, [#allocation9], 128, 128, 8
    $region25: #{tpu_custom_call.1} parent=1 // pred_fallthru
      _
    // Predicated region
    $region26: #{tpu_custom_call.1} parent=1 // pred_check
      _
    $region27: #{tpu_custom_call.1} parent=1 // pred_check_branch
      %49 = sbr.rel (0) target = $region29
    $region28: #{tpu_custom_call.1} parent=1 // pred_region
      %s51 = ssub.s32 16, 16
      %52 = vsyncadd [#allocation7], %s51
      %s54 = sshll.u32 %s6, 4
      %s55 = int_to_ptr.vmem [resolvable:$true] %s54
      %57 = dma.vmem_to_smem %s55, 16, [#allocation10], [#allocation7]
    $region29: #{tpu_custom_call.1} parent=1 // pred_fallthru
      _
    // Predicated region
    $region30: #{tpu_custom_call.1} parent=1 // pred_check
      _
    $region31: #{tpu_custom_call.1} parent=1 // pred_check_branch
      %59 = sbr.rel (0) target = $region33
    $region32: #{tpu_custom_call.1} parent=1 // pred_region
      %60 = dma.done [#allocation5], 8192
    $region33: #{tpu_custom_call.1} parent=1 // pred_fallthru
      _
    // Predicated region
    $region34: #{tpu_custom_call.1} parent=1 // pred_check
      _
    $region35: #{tpu_custom_call.1} parent=1 // pred_check_branch
      %62 = sbr.rel (0) target = $region37
    $region36: #{tpu_custom_call.1} parent=1 // pred_region
      %63 = dma.done [#allocation9], 8192
    $region37: #{tpu_custom_call.1} parent=1 // pred_fallthru
      _
    // Predicated region
    $region38: #{tpu_custom_call.1} parent=1 // pred_check
      _
    $region39: #{tpu_custom_call.1} parent=1 // pred_check_branch
      %65 = sbr.rel (0) target = $region41
    $region40: #{tpu_custom_call.1} parent=1 // pred_region
      %66 = dma.done [#allocation7], 16
    $region41: #{tpu_custom_call.1} parent=1 // pred_fallthru
      _
    %67 = sfence
    loop: start=0, step=1, limit=2
    $region42: #{tpu_custom_call.1} parent=1 // loop_pre_header
      _
    $region43: #{tpu_custom_call.1} parent=1 // loop_header
      %s69 = sphi 0, %s73
      %p70 = scmp.ge.s32.totalorder %s69, 2
      %v74 = vphi 0.0, %v239
      %v75 = vphi 0.0, %v240
      %v76 = vphi 0.0, %v241
      %v77 = vphi 0.0, %v242
      %v78 = vphi 0.0, %v243
      %v79 = vphi 0.0, %v244
      %v80 = vphi 0.0, %v245
      %v81 = vphi 0.0, %v246
      %v82 = vphi 0.0, %v247
      %v83 = vphi 0.0, %v248
      %v84 = vphi 0.0, %v249
      %v85 = vphi 0.0, %v250
      %v86 = vphi 0.0, %v251
      %v87 = vphi 0.0, %v252
      %v88 = vphi 0.0, %v253
      %v89 = vphi 0.0, %v254
      %v90 = vphi 0.0, %v255
      %v91 = vphi 0.0, %v256
      %v92 = vphi 0.0, %v257
      %v93 = vphi 0.0, %v258
      %v94 = vphi 0.0, %v259
      %v95 = vphi 0.0, %v260
      %v96 = vphi 0.0, %v261
      %v97 = vphi 0.0, %v262
      %v98 = vphi 0.0, %v263
      %v99 = vphi 0.0, %v264
      %v100 = vphi 0.0, %v265
      %v101 = vphi 0.0, %v266
      %v102 = vphi 0.0, %v267
      %v103 = vphi 0.0, %v268
      %v104 = vphi 0.0, %v269
      %v105 = vphi 0.0, %v270
      %v106 = vphi -inf, %v335
      %v107 = vphi -inf, %v336
      %v108 = vphi -inf, %v337
      %v109 = vphi -inf, %v338
      %v110 = vphi -inf, %v339
      %v111 = vphi -inf, %v340
      %v112 = vphi -inf, %v341
      %v113 = vphi -inf, %v342
      %v114 = vphi -inf, %v343
      %v115 = vphi -inf, %v344
      %v116 = vphi -inf, %v345
      %v117 = vphi -inf, %v346
      %v118 = vphi -inf, %v347
      %v119 = vphi -inf, %v348
      %v120 = vphi -inf, %v349
      %v121 = vphi -inf, %v350
      %v122 = vphi -inf, %v351
      %v123 = vphi -inf, %v352
      %v124 = vphi -inf, %v353
      %v125 = vphi -inf, %v354
      %v126 = vphi -inf, %v355
      %v127 = vphi -inf, %v356
      %v128 = vphi -inf, %v357
      %v129 = vphi -inf, %v358
      %v130 = vphi -inf, %v359
      %v131 = vphi -inf, %v360
      %v132 = vphi -inf, %v361
      %v133 = vphi -inf, %v362
      %v134 = vphi -inf, %v363
      %v135 = vphi -inf, %v364
      %v136 = vphi -inf, %v365
      %v137 = vphi -inf, %v366
    $region44: #{tpu_custom_call.1} parent=1 // loop_header_branch
      %72 = sbr.rel (%p70) target = $region48
    $region45: #{tpu_custom_call.1} parent=1 // loop_body
      %s138 = smul.u32 %s69, 128
      %s139 = sshra.s32 %s138, 7
      %s140 = sand.u32 %s138, 127
      %s141 = smul.addr %s139, 8
      %s142 = scalar_lea.vmem [#allocation4], %s141
      %v143 = vld [vmem:[%s142] sm:$0xff]
      %v144 = vld [vmem:[%s142 + $0x10] sm:$0xff]
      %v145 = vld [vmem:[%s142 + $0x20] sm:$0xff]
      %v146 = vld [vmem:[%s142 + $0x30] sm:$0xff]
      %v147 = vld [vmem:[%s142 + $0x40] sm:$0xff]
      %v148 = vld [vmem:[%s142 + $0x50] sm:$0xff]
      %v149 = vld [vmem:[%s142 + $0x60] sm:$0xff]
      %v150 = vld [vmem:[%s142 + $0x70] sm:$0xff]
      %v151 = vld [vmem:[%s142 + $0x80] sm:$0xff]
      %v152 = vld [vmem:[%s142 + $0x90] sm:$0xff]
      %v153 = vld [vmem:[%s142 + $0xa0] sm:$0xff]
      %v154 = vld [vmem:[%s142 + $0xb0] sm:$0xff]
      %v155 = vld [vmem:[%s142 + $0xc0] sm:$0xff]
      %v156 = vld [vmem:[%s142 + $0xd0] sm:$0xff]
      %v157 = vld [vmem:[%s142 + $0xe0] sm:$0xff]
      %v158 = vld [vmem:[%s142 + $0xf0] sm:$0xff]
      %v159 = vld [vmem:[%s142 + $0x100] sm:$0xff]
      %v160 = vld [vmem:[%s142 + $0x110] sm:$0xff]
      %v161 = vld [vmem:[%s142 + $0x120] sm:$0xff]
      %v162 = vld [vmem:[%s142 + $0x130] sm:$0xff]
      %v163 = vld [vmem:[%s142 + $0x140] sm:$0xff]
      %v164 = vld [vmem:[%s142 + $0x150] sm:$0xff]
      %v165 = vld [vmem:[%s142 + $0x160] sm:$0xff]
      %v166 = vld [vmem:[%s142 + $0x170] sm:$0xff]
      %v167 = vld [vmem:[%s142 + $0x180] sm:$0xff]
      %v168 = vld [vmem:[%s142 + $0x190] sm:$0xff]
      %v169 = vld [vmem:[%s142 + $0x1a0] sm:$0xff]
      %v170 = vld [vmem:[%s142 + $0x1b0] sm:$0xff]
      %v171 = vld [vmem:[%s142 + $0x1c0] sm:$0xff]
      %v172 = vld [vmem:[%s142 + $0x1d0] sm:$0xff]
      %v173 = vld [vmem:[%s142 + $0x1e0] sm:$0xff]
      %v174 = vld [vmem:[%s142 + $0x1f0] sm:$0xff]
      %175 = vadd.xlane.f32.xlu0 %v143
      %v176 = vpop.xlane.xlu0 %175
      %177 = vadd.xlane.f32.xlu0 %v144
      %v178 = vpop.xlane.xlu0 %177
      %179 = vadd.xlane.f32.xlu0 %v145
      %v180 = vpop.xlane.xlu0 %179
      %181 = vadd.xlane.f32.xlu0 %v146
      %v182 = vpop.xlane.xlu0 %181
      %183 = vadd.xlane.f32.xlu0 %v147
      %v184 = vpop.xlane.xlu0 %183
      %185 = vadd.xlane.f32.xlu0 %v148
      %v186 = vpop.xlane.xlu0 %185
      %187 = vadd.xlane.f32.xlu0 %v149
      %v188 = vpop.xlane.xlu0 %187
      %189 = vadd.xlane.f32.xlu0 %v150
      %v190 = vpop.xlane.xlu0 %189
      %191 = vadd.xlane.f32.xlu0 %v151
      %v192 = vpop.xlane.xlu0 %191
      %193 = vadd.xlane.f32.xlu0 %v152
      %v194 = vpop.xlane.xlu0 %193
      %195 = vadd.xlane.f32.xlu0 %v153
      %v196 = vpop.xlane.xlu0 %195
      %197 = vadd.xlane.f32.xlu0 %v154
      %v198 = vpop.xlane.xlu0 %197
      %199 = vadd.xlane.f32.xlu0 %v155
      %v200 = vpop.xlane.xlu0 %199
      %201 = vadd.xlane.f32.xlu0 %v156
      %v202 = vpop.xlane.xlu0 %201
      %203 = vadd.xlane.f32.xlu0 %v157
      %v204 = vpop.xlane.xlu0 %203
      %205 = vadd.xlane.f32.xlu0 %v158
      %v206 = vpop.xlane.xlu0 %205
      %207 = vadd.xlane.f32.xlu0 %v159
      %v208 = vpop.xlane.xlu0 %207
      %209 = vadd.xlane.f32.xlu0 %v160
      %v210 = vpop.xlane.xlu0 %209
      %211 = vadd.xlane.f32.xlu0 %v161
      %v212 = vpop.xlane.xlu0 %211
      %213 = vadd.xlane.f32.xlu0 %v162
      %v214 = vpop.xlane.xlu0 %213
      %215 = vadd.xlane.f32.xlu0 %v163
      %v216 = vpop.xlane.xlu0 %215
      %217 = vadd.xlane.f32.xlu0 %v164
      %v218 = vpop.xlane.xlu0 %217
      %219 = vadd.xlane.f32.xlu0 %v165
      %v220 = vpop.xlane.xlu0 %219
      %221 = vadd.xlane.f32.xlu0 %v166
      %v222 = vpop.xlane.xlu0 %221
      %223 = vadd.xlane.f32.xlu0 %v167
      %v224 = vpop.xlane.xlu0 %223
      %225 = vadd.xlane.f32.xlu0 %v168
      %v226 = vpop.xlane.xlu0 %225
      %227 = vadd.xlane.f32.xlu0 %v169
      %v228 = vpop.xlane.xlu0 %227
      %229 = vadd.xlane.f32.xlu0 %v170
      %v230 = vpop.xlane.xlu0 %229
      %231 = vadd.xlane.f32.xlu0 %v171
      %v232 = vpop.xlane.xlu0 %231
      %233 = vadd.xlane.f32.xlu0 %v172
      %v234 = vpop.xlane.xlu0 %233
      %235 = vadd.xlane.f32.xlu0 %v173
      %v236 = vpop.xlane.xlu0 %235
      %237 = vadd.xlane.f32.xlu0 %v174
      %v238 = vpop.xlane.xlu0 %237
      %v239 = vadd.f32 %v74, %v176
      %v240 = vadd.f32 %v75, %v178
      %v241 = vadd.f32 %v76, %v180
      %v242 = vadd.f32 %v77, %v182
      %v243 = vadd.f32 %v78, %v184
      %v244 = vadd.f32 %v79, %v186
      %v245 = vadd.f32 %v80, %v188
      %v246 = vadd.f32 %v81, %v190
      %v247 = vadd.f32 %v82, %v192
      %v248 = vadd.f32 %v83, %v194
      %v249 = vadd.f32 %v84, %v196
      %v250 = vadd.f32 %v85, %v198
      %v251 = vadd.f32 %v86, %v200
      %v252 = vadd.f32 %v87, %v202
      %v253 = vadd.f32 %v88, %v204
      %v254 = vadd.f32 %v89, %v206
      %v255 = vadd.f32 %v90, %v208
      %v256 = vadd.f32 %v91, %v210
      %v257 = vadd.f32 %v92, %v212
      %v258 = vadd.f32 %v93, %v214
      %v259 = vadd.f32 %v94, %v216
      %v260 = vadd.f32 %v95, %v218
      %v261 = vadd.f32 %v96, %v220
      %v262 = vadd.f32 %v97, %v222
      %v263 = vadd.f32 %v98, %v224
      %v264 = vadd.f32 %v99, %v226
      %v265 = vadd.f32 %v100, %v228
      %v266 = vadd.f32 %v101, %v230
      %v267 = vadd.f32 %v102, %v232
      %v268 = vadd.f32 %v103, %v234
      %v269 = vadd.f32 %v104, %v236
      %v270 = vadd.f32 %v105, %v238
      %271 = vmax.xlane.f32.xlu0 %v143
      %v272 = vpop.xlane.xlu0 %271
      %273 = vmax.xlane.f32.xlu0 %v144
      %v274 = vpop.xlane.xlu0 %273
      %275 = vmax.xlane.f32.xlu0 %v145
      %v276 = vpop.xlane.xlu0 %275
      %277 = vmax.xlane.f32.xlu0 %v146
      %v278 = vpop.xlane.xlu0 %277
      %279 = vmax.xlane.f32.xlu0 %v147
      %v280 = vpop.xlane.xlu0 %279
      %281 = vmax.xlane.f32.xlu0 %v148
      %v282 = vpop.xlane.xlu0 %281
      %283 = vmax.xlane.f32.xlu0 %v149
      %v284 = vpop.xlane.xlu0 %283
      %285 = vmax.xlane.f32.xlu0 %v150
      %v286 = vpop.xlane.xlu0 %285
      %287 = vmax.xlane.f32.xlu0 %v151
      %v288 = vpop.xlane.xlu0 %287
      %289 = vmax.xlane.f32.xlu0 %v152
      %v290 = vpop.xlane.xlu0 %289
      %291 = vmax.xlane.f32.xlu0 %v153
      %v292 = vpop.xlane.xlu0 %291
      %293 = vmax.xlane.f32.xlu0 %v154
      %v294 = vpop.xlane.xlu0 %293
      %295 = vmax.xlane.f32.xlu0 %v155
      %v296 = vpop.xlane.xlu0 %295
      %297 = vmax.xlane.f32.xlu0 %v156
      %v298 = vpop.xlane.xlu0 %297
      %299 = vmax.xlane.f32.xlu0 %v157
      %v300 = vpop.xlane.xlu0 %299
      %301 = vmax.xlane.f32.xlu0 %v158
      %v302 = vpop.xlane.xlu0 %301
      %303 = vmax.xlane.f32.xlu0 %v159
      %v304 = vpop.xlane.xlu0 %303
      %305 = vmax.xlane.f32.xlu0 %v160
      %v306 = vpop.xlane.xlu0 %305
      %307 = vmax.xlane.f32.xlu0 %v161
      %v308 = vpop.xlane.xlu0 %307
      %309 = vmax.xlane.f32.xlu0 %v162
      %v310 = vpop.xlane.xlu0 %309
      %311 = vmax.xlane.f32.xlu0 %v163
      %v312 = vpop.xlane.xlu0 %311
      %313 = vmax.xlane.f32.xlu0 %v164
      %v314 = vpop.xlane.xlu0 %313
      %315 = vmax.xlane.f32.xlu0 %v165
      %v316 = vpop.xlane.xlu0 %315
      %317 = vmax.xlane.f32.xlu0 %v166
      %v318 = vpop.xlane.xlu0 %317
      %319 = vmax.xlane.f32.xlu0 %v167
      %v320 = vpop.xlane.xlu0 %319
      %321 = vmax.xlane.f32.xlu0 %v168
      %v322 = vpop.xlane.xlu0 %321
      %323 = vmax.xlane.f32.xlu0 %v169
      %v324 = vpop.xlane.xlu0 %323
      %325 = vmax.xlane.f32.xlu0 %v170
      %v326 = vpop.xlane.xlu0 %325
      %327 = vmax.xlane.f32.xlu0 %v171
      %v328 = vpop.xlane.xlu0 %327
      %329 = vmax.xlane.f32.xlu0 %v172
      %v330 = vpop.xlane.xlu0 %329
      %331 = vmax.xlane.f32.xlu0 %v173
      %v332 = vpop.xlane.xlu0 %331
      %333 = vmax.xlane.f32.xlu0 %v174
      %v334 = vpop.xlane.xlu0 %333
      %v335 = vmax.f32 %v106, %v272
      %v336 = vmax.f32 %v107, %v274
      %v337 = vmax.f32 %v108, %v276
      %v338 = vmax.f32 %v109, %v278
      %v339 = vmax.f32 %v110, %v280
      %v340 = vmax.f32 %v111, %v282
      %v341 = vmax.f32 %v112, %v284
      %v342 = vmax.f32 %v113, %v286
      %v343 = vmax.f32 %v114, %v288
      %v344 = vmax.f32 %v115, %v290
      %v345 = vmax.f32 %v116, %v292
      %v346 = vmax.f32 %v117, %v294
      %v347 = vmax.f32 %v118, %v296
      %v348 = vmax.f32 %v119, %v298
      %v349 = vmax.f32 %v120, %v300
      %v350 = vmax.f32 %v121, %v302
      %v351 = vmax.f32 %v122, %v304
      %v352 = vmax.f32 %v123, %v306
      %v353 = vmax.f32 %v124, %v308
      %v354 = vmax.f32 %v125, %v310
      %v355 = vmax.f32 %v126, %v312
      %v356 = vmax.f32 %v127, %v314
      %v357 = vmax.f32 %v128, %v316
      %v358 = vmax.f32 %v129, %v318
      %v359 = vmax.f32 %v130, %v320
      %v360 = vmax.f32 %v131, %v322
      %v361 = vmax.f32 %v132, %v324
      %v362 = vmax.f32 %v133, %v326
      %v363 = vmax.f32 %v134, %v328
      %v364 = vmax.f32 %v135, %v330
      %v365 = vmax.f32 %v136, %v332
      %v366 = vmax.f32 %v137, %v334
    $region46: #{tpu_custom_call.1} parent=1 // loop_footer
      %s73 = sadd.s32 1, %s69
    $region47: #{tpu_custom_call.1} parent=1 // loop_footer_branch
      %68 = sbr.rel target = $region43
    $region48: #{tpu_custom_call.1} parent=1 // loop_exit
      _
    %v367 = vmul.f32 %v74, 0.00390625
    %v368 = vmul.f32 %v75, 0.00390625
    %v369 = vmul.f32 %v76, 0.00390625
    %v370 = vmul.f32 %v77, 0.00390625
    %v371 = vmul.f32 %v78, 0.00390625
    %v372 = vmul.f32 %v79, 0.00390625
    %v373 = vmul.f32 %v80, 0.00390625
    %v374 = vmul.f32 %v81, 0.00390625
    %v375 = vmul.f32 %v82, 0.00390625
    %v376 = vmul.f32 %v83, 0.00390625
    %v377 = vmul.f32 %v84, 0.00390625
    %v378 = vmul.f32 %v85, 0.00390625
    %v379 = vmul.f32 %v86, 0.00390625
    %v380 = vmul.f32 %v87, 0.00390625
    %v381 = vmul.f32 %v88, 0.00390625
    %v382 = vmul.f32 %v89, 0.00390625
    %v383 = vmul.f32 %v90, 0.00390625
    %v384 = vmul.f32 %v91, 0.00390625
    %v385 = vmul.f32 %v92, 0.00390625
    %v386 = vmul.f32 %v93, 0.00390625
    %v387 = vmul.f32 %v94, 0.00390625
    %v388 = vmul.f32 %v95, 0.00390625
    %v389 = vmul.f32 %v96, 0.00390625
    %v390 = vmul.f32 %v97, 0.00390625
    %v391 = vmul.f32 %v98, 0.00390625
    %v392 = vmul.f32 %v99, 0.00390625
    %v393 = vmul.f32 %v100, 0.00390625
    %v394 = vmul.f32 %v101, 0.00390625
    %v395 = vmul.f32 %v102, 0.00390625
    %v396 = vmul.f32 %v103, 0.00390625
    %v397 = vmul.f32 %v104, 0.00390625
    %v398 = vmul.f32 %v105, 0.00390625
    %v431 = vlaneseq
    %v432 = vand.u32 %v431, 127
    %v433 = vlaneseq
    %v434 = vshrl.u32 %v433, 7
    %v435 = vsub.s32 %v432, %v434
    %v436 = vrot.slane %v367, %v435
    %v437 = vadd.s32 %v432, 4294967288
    %v438 = vlaneseq
    %v439 = vshrl.u32 %v438, 7
    %v440 = vsub.s32 %v437, %v439
    %v441 = vrot.slane %v368, %v440
    %vm442 = vcmask 130112
    %v443 = vsel %vm442, %v441, %v436
    %v444 = vadd.s32 %v432, 4294967280
    %v445 = vlaneseq
    %v446 = vshrl.u32 %v445, 7
    %v447 = vsub.s32 %v444, %v446
    %v448 = vrot.slane %v369, %v447
    %vm449 = vcmask 195712
    %v450 = vsel %vm449, %v448, %v443
    %v451 = vadd.s32 %v432, 4294967272
    %v452 = vlaneseq
    %v453 = vshrl.u32 %v452, 7
    %v454 = vsub.s32 %v451, %v453
    %v455 = vrot.slane %v370, %v454
    %vm456 = vcmask 261312
    %v457 = vsel %vm456, %v455, %v450
    %v458 = vlaneseq
    %v459 = vshrl.u32 %v458, 7
    %v460 = vsub.s32 %v432, %v459
    %v461 = vrot.slane %v371, %v460
    %v462 = vlaneseq
    %v463 = vshrl.u32 %v462, 7
    %v464 = vsub.s32 %v437, %v463
    %v465 = vrot.slane %v372, %v464
    %v466 = vsel %vm442, %v465, %v461
    %v467 = vlaneseq
    %v468 = vshrl.u32 %v467, 7
    %v469 = vsub.s32 %v444, %v468
    %v470 = vrot.slane %v373, %v469
    %v471 = vsel %vm449, %v470, %v466
    %v472 = vlaneseq
    %v473 = vshrl.u32 %v472, 7
    %v474 = vsub.s32 %v451, %v473
    %v475 = vrot.slane %v374, %v474
    %v476 = vsel %vm456, %v475, %v471
    %v477 = vlaneseq
    %v478 = vshrl.u32 %v477, 7
    %v479 = vsub.s32 %v432, %v478
    %v480 = vrot.slane %v375, %v479
    %v481 = vlaneseq
    %v482 = vshrl.u32 %v481, 7
    %v483 = vsub.s32 %v437, %v482
    %v484 = vrot.slane %v376, %v483
    %v485 = vsel %vm442, %v484, %v480
    %v486 = vlaneseq
    %v487 = vshrl.u32 %v486, 7
    %v488 = vsub.s32 %v444, %v487
    %v489 = vrot.slane %v377, %v488
    %v490 = vsel %vm449, %v489, %v485
    %v491 = vlaneseq
    %v492 = vshrl.u32 %v491, 7
    %v493 = vsub.s32 %v451, %v492
    %v494 = vrot.slane %v378, %v493
    %v495 = vsel %vm456, %v494, %v490
    %v496 = vlaneseq
    %v497 = vshrl.u32 %v496, 7
    %v498 = vsub.s32 %v432, %v497
    %v499 = vrot.slane %v379, %v498
    %v500 = vlaneseq
    %v501 = vshrl.u32 %v500, 7
    %v502 = vsub.s32 %v437, %v501
    %v503 = vrot.slane %v380, %v502
    %v504 = vsel %vm442, %v503, %v499
    %v505 = vlaneseq
    %v506 = vshrl.u32 %v505, 7
    %v507 = vsub.s32 %v444, %v506
    %v508 = vrot.slane %v381, %v507
    %v509 = vsel %vm449, %v508, %v504
    %v510 = vlaneseq
    %v511 = vshrl.u32 %v510, 7
    %v512 = vsub.s32 %v451, %v511
    %v513 = vrot.slane %v382, %v512
    %v514 = vsel %vm456, %v513, %v509
    %v515 = vlaneseq
    %v516 = vshrl.u32 %v515, 7
    %v517 = vsub.s32 %v432, %v516
    %v518 = vrot.slane %v383, %v517
    %v519 = vlaneseq
    %v520 = vshrl.u32 %v519, 7
    %v521 = vsub.s32 %v437, %v520
    %v522 = vrot.slane %v384, %v521
    %v523 = vsel %vm442, %v522, %v518
    %v524 = vlaneseq
    %v525 = vshrl.u32 %v524, 7
    %v526 = vsub.s32 %v444, %v525
    %v527 = vrot.slane %v385, %v526
    %v528 = vsel %vm449, %v527, %v523
    %v529 = vlaneseq
    %v530 = vshrl.u32 %v529, 7
    %v531 = vsub.s32 %v451, %v530
    %v532 = vrot.slane %v386, %v531
    %v533 = vsel %vm456, %v532, %v528
    %v534 = vlaneseq
    %v535 = vshrl.u32 %v534, 7
    %v536 = vsub.s32 %v432, %v535
    %v537 = vrot.slane %v387, %v536
    %v538 = vlaneseq
    %v539 = vshrl.u32 %v538, 7
    %v540 = vsub.s32 %v437, %v539
    %v541 = vrot.slane %v388, %v540
    %v542 = vsel %vm442, %v541, %v537
    %v543 = vlaneseq
    %v544 = vshrl.u32 %v543, 7
    %v545 = vsub.s32 %v444, %v544
    %v546 = vrot.slane %v389, %v545
    %v547 = vsel %vm449, %v546, %v542
    %v548 = vlaneseq
    %v549 = vshrl.u32 %v548, 7
    %v550 = vsub.s32 %v451, %v549
    %v551 = vrot.slane %v390, %v550
    %v552 = vsel %vm456, %v551, %v547
    %v553 = vlaneseq
    %v554 = vshrl.u32 %v553, 7
    %v555 = vsub.s32 %v432, %v554
    %v556 = vrot.slane %v391, %v555
    %v557 = vlaneseq
    %v558 = vshrl.u32 %v557, 7
    %v559 = vsub.s32 %v437, %v558
    %v560 = vrot.slane %v392, %v559
    %v561 = vsel %vm442, %v560, %v556
    %v562 = vlaneseq
    %v563 = vshrl.u32 %v562, 7
    %v564 = vsub.s32 %v444, %v563
    %v565 = vrot.slane %v393, %v564
    %v566 = vsel %vm449, %v565, %v561
    %v567 = vlaneseq
    %v568 = vshrl.u32 %v567, 7
    %v569 = vsub.s32 %v451, %v568
    %v570 = vrot.slane %v394, %v569
    %v571 = vsel %vm456, %v570, %v566
    %v572 = vlaneseq
    %v573 = vshrl.u32 %v572, 7
    %v574 = vsub.s32 %v432, %v573
    %v575 = vrot.slane %v395, %v574
    %v576 = vlaneseq
    %v577 = vshrl.u32 %v576, 7
    %v578 = vsub.s32 %v437, %v577
    %v579 = vrot.slane %v396, %v578
    %v580 = vsel %vm442, %v579, %v575
    %v581 = vlaneseq
    %v582 = vshrl.u32 %v581, 7
    %v583 = vsub.s32 %v444, %v582
    %v584 = vrot.slane %v397, %v583
    %v585 = vsel %vm449, %v584, %v580
    %v586 = vlaneseq
    %v587 = vshrl.u32 %v586, 7
    %v588 = vsub.s32 %v451, %v587
    %v589 = vrot.slane %v398, %v588
    %v590 = vsel %vm456, %v589, %v585
    %vm591 = vcmask 1041409
    %v592 = vsel %vm591, %v476, %v457
    %vm593 = vcmask 1042434
    %v594 = vsel %vm593, %v495, %v592
    %vm595 = vcmask 1043459
    %v596 = vsel %vm595, %v514, %v594
    %vm597 = vcmask 1044484
    %v598 = vsel %vm597, %v533, %v596
    %vm599 = vcmask 1045509
    %v600 = vsel %vm599, %v552, %v598
    %vm601 = vcmask 1046534
    %v602 = vsel %vm601, %v571, %v600
    %vm603 = vcmask 1047559
    %v604 = vsel %vm603, %v590, %v602
    %v637 = vlaneseq
    %v638 = vshrl.u32 %v637, 7
    %v639 = vsub.s32 %v432, %v638
    %v640 = vrot.slane %v106, %v639
    %v641 = vlaneseq
    %v642 = vshrl.u32 %v641, 7
    %v643 = vsub.s32 %v437, %v642
    %v644 = vrot.slane %v107, %v643
    %v645 = vsel %vm442, %v644, %v640
    %v646 = vlaneseq
    %v647 = vshrl.u32 %v646, 7
    %v648 = vsub.s32 %v444, %v647
    %v649 = vrot.slane %v108, %v648
    %v650 = vsel %vm449, %v649, %v645
    %v651 = vlaneseq
    %v652 = vshrl.u32 %v651, 7
    %v653 = vsub.s32 %v451, %v652
    %v654 = vrot.slane %v109, %v653
    %v655 = vsel %vm456, %v654, %v650
    %v656 = vlaneseq
    %v657 = vshrl.u32 %v656, 7
    %v658 = vsub.s32 %v432, %v657
    %v659 = vrot.slane %v110, %v658
    %v660 = vlaneseq
    %v661 = vshrl.u32 %v660, 7
    %v662 = vsub.s32 %v437, %v661
    %v663 = vrot.slane %v111, %v662
    %v664 = vsel %vm442, %v663, %v659
    %v665 = vlaneseq
    %v666 = vshrl.u32 %v665, 7
    %v667 = vsub.s32 %v444, %v666
    %v668 = vrot.slane %v112, %v667
    %v669 = vsel %vm449, %v668, %v664
    %v670 = vlaneseq
    %v671 = vshrl.u32 %v670, 7
    %v672 = vsub.s32 %v451, %v671
    %v673 = vrot.slane %v113, %v672
    %v674 = vsel %vm456, %v673, %v669
    %v675 = vlaneseq
    %v676 = vshrl.u32 %v675, 7
    %v677 = vsub.s32 %v432, %v676
    %v678 = vrot.slane %v114, %v677
    %v679 = vlaneseq
    %v680 = vshrl.u32 %v679, 7
    %v681 = vsub.s32 %v437, %v680
    %v682 = vrot.slane %v115, %v681
    %v683 = vsel %vm442, %v682, %v678
    %v684 = vlaneseq
    %v685 = vshrl.u32 %v684, 7
    %v686 = vsub.s32 %v444, %v685
    %v687 = vrot.slane %v116, %v686
    %v688 = vsel %vm449, %v687, %v683
    %v689 = vlaneseq
    %v690 = vshrl.u32 %v689, 7
    %v691 = vsub.s32 %v451, %v690
    %v692 = vrot.slane %v117, %v691
    %v693 = vsel %vm456, %v692, %v688
    %v694 = vlaneseq
    %v695 = vshrl.u32 %v694, 7
    %v696 = vsub.s32 %v432, %v695
    %v697 = vrot.slane %v118, %v696
    %v698 = vlaneseq
    %v699 = vshrl.u32 %v698, 7
    %v700 = vsub.s32 %v437, %v699
    %v701 = vrot.slane %v119, %v700
    %v702 = vsel %vm442, %v701, %v697
    %v703 = vlaneseq
    %v704 = vshrl.u32 %v703, 7
    %v705 = vsub.s32 %v444, %v704
    %v706 = vrot.slane %v120, %v705
    %v707 = vsel %vm449, %v706, %v702
    %v708 = vlaneseq
    %v709 = vshrl.u32 %v708, 7
    %v710 = vsub.s32 %v451, %v709
    %v711 = vrot.slane %v121, %v710
    %v712 = vsel %vm456, %v711, %v707
    %v713 = vlaneseq
    %v714 = vshrl.u32 %v713, 7
    %v715 = vsub.s32 %v432, %v714
    %v716 = vrot.slane %v122, %v715
    %v717 = vlaneseq
    %v718 = vshrl.u32 %v717, 7
    %v719 = vsub.s32 %v437, %v718
    %v720 = vrot.slane %v123, %v719
    %v721 = vsel %vm442, %v720, %v716
    %v722 = vlaneseq
    %v723 = vshrl.u32 %v722, 7
    %v724 = vsub.s32 %v444, %v723
    %v725 = vrot.slane %v124, %v724
    %v726 = vsel %vm449, %v725, %v721
    %v727 = vlaneseq
    %v728 = vshrl.u32 %v727, 7
    %v729 = vsub.s32 %v451, %v728
    %v730 = vrot.slane %v125, %v729
    %v731 = vsel %vm456, %v730, %v726
    %v732 = vlaneseq
    %v733 = vshrl.u32 %v732, 7
    %v734 = vsub.s32 %v432, %v733
    %v735 = vrot.slane %v126, %v734
    %v736 = vlaneseq
    %v737 = vshrl.u32 %v736, 7
    %v738 = vsub.s32 %v437, %v737
    %v739 = vrot.slane %v127, %v738
    %v740 = vsel %vm442, %v739, %v735
    %v741 = vlaneseq
    %v742 = vshrl.u32 %v741, 7
    %v743 = vsub.s32 %v444, %v742
    %v744 = vrot.slane %v128, %v743
    %v745 = vsel %vm449, %v744, %v740
    %v746 = vlaneseq
    %v747 = vshrl.u32 %v746, 7
    %v748 = vsub.s32 %v451, %v747
    %v749 = vrot.slane %v129, %v748
    %v750 = vsel %vm456, %v749, %v745
    %v751 = vlaneseq
    %v752 = vshrl.u32 %v751, 7
    %v753 = vsub.s32 %v432, %v752
    %v754 = vrot.slane %v130, %v753
    %v755 = vlaneseq
    %v756 = vshrl.u32 %v755, 7
    %v757 = vsub.s32 %v437, %v756
    %v758 = vrot.slane %v131, %v757
    %v759 = vsel %vm442, %v758, %v754
    %v760 = vlaneseq
    %v761 = vshrl.u32 %v760, 7
    %v762 = vsub.s32 %v444, %v761
    %v763 = vrot.slane %v132, %v762
    %v764 = vsel %vm449, %v763, %v759
    %v765 = vlaneseq
    %v766 = vshrl.u32 %v765, 7
    %v767 = vsub.s32 %v451, %v766
    %v768 = vrot.slane %v133, %v767
    %v769 = vsel %vm456, %v768, %v764
    %v770 = vlaneseq
    %v771 = vshrl.u32 %v770, 7
    %v772 = vsub.s32 %v432, %v771
    %v773 = vrot.slane %v134, %v772
    %v774 = vlaneseq
    %v775 = vshrl.u32 %v774, 7
    %v776 = vsub.s32 %v437, %v775
    %v777 = vrot.slane %v135, %v776
    %v778 = vsel %vm442, %v777, %v773
    %v779 = vlaneseq
    %v780 = vshrl.u32 %v779, 7
    %v781 = vsub.s32 %v444, %v780
    %v782 = vrot.slane %v136, %v781
    %v783 = vsel %vm449, %v782, %v778
    %v784 = vlaneseq
    %v785 = vshrl.u32 %v784, 7
    %v786 = vsub.s32 %v451, %v785
    %v787 = vrot.slane %v137, %v786
    %v788 = vsel %vm456, %v787, %v783
    %v789 = vsel %vm591, %v674, %v655
    %v790 = vsel %vm593, %v693, %v789
    %v791 = vsel %vm595, %v712, %v790
    %v792 = vsel %vm597, %v731, %v791
    %v793 = vsel %vm599, %v750, %v792
    %v794 = vsel %vm601, %v769, %v793
    %v795 = vsel %vm603, %v788, %v794
    %v796 = vld [vmem:[%s1] sm:$0xff]
    %v797 = vld [vmem:[%s1 + $0x8] sm:$0xff]
    %v798 = vld [vmem:[%s1 + $0x10] sm:$0xff]
    %v799 = vld [vmem:[%s1 + $0x18] sm:$0xff]
    %v800 = vld [vmem:[%s2] sm:$0x1]
    %v802 = vlaneseq
    %v803 = vshrl.u32 %v802, 7
    %v804 = vsub.s32 0, %v803
    %v805 = vrot.slane %v800, %v804
    %vm807 = vcmask 261120
    %v808 = vsel %vm807, %v604, 0
    %v810 = vsel %vm807, %v795, 0
    %812 = vmatprep.subr.mxu0 0.0
    %813 = vmatpush1.msra.mxu0 %v796
    %814 = vmatprep.subr.mxu0 0.0
    %815 = vmatpush1.msra.mxu0 %v797
    %816 = vmatprep.subr.mxu0 0.0
    %817 = vmatpush1.msra.mxu0 %v798
    %818 = vmatprep.subr.mxu0 0.0
    %819 = vmatpush1.msra.mxu0 %v799
    %820 = vmatprep.subr.mxu0 0.0
    %821 = vmatpush1.msra.mxu0 0.0
    %822 = vmatprep.subr.mxu0 0.0
    %823 = vmatpush1.msra.mxu0 0.0
    %824 = vmatprep.subr.mxu0 0.0
    %825 = vmatpush1.msra.mxu0 0.0
    %826 = vmatprep.subr.mxu0 0.0
    %827 = vmatpush1.msra.mxu0 0.0
    %828 = vmatprep.subr.mxu0 0.0
    %829 = vmatpush1.msra.mxu0 0.0
    %830 = vmatprep.subr.mxu0 0.0
    %831 = vmatpush1.msra.mxu0 0.0
    %832 = vmatprep.subr.mxu0 0.0
    %833 = vmatpush1.msra.mxu0 0.0
    %834 = vmatprep.subr.mxu0 0.0
    %835 = vmatpush1.msra.mxu0 0.0
    %836 = vmatprep.subr.mxu0 0.0
    %837 = vmatpush1.msra.mxu0 0.0
    %838 = vmatprep.subr.mxu0 0.0
    %839 = vmatpush1.msra.mxu0 0.0
    %840 = vmatprep.subr.mxu0 0.0
    %841 = vmatpush1.msra.mxu0 0.0
    %842 = vmatprep.subr.mxu0 0.0
    %843 = vmatpush1.msra.mxu0 0.0
    %844 = vmatprep.subr.mxu0 0.0
    %845 = vmatpush1.msra.mxu0 0.0
    %846 = vmatprep.subr.mxu0 0.0
    %847 = vmatpush1.msra.mxu0 0.0
    %848 = vmatprep.subr.mxu0 0.0
    %849 = vmatpush1.msra.mxu0 0.0
    %850 = vmatprep.subr.mxu0 0.0
    %851 = vmatpush1.msra.mxu0 0.0
    %852 = vmatprep.subr.mxu0 0.0
    %853 = vmatpush1.msra.mxu0 0.0
    %854 = vmatprep.subr.mxu0 0.0
    %855 = vmatpush1.msra.mxu0 0.0
    %856 = vmatprep.subr.mxu0 0.0
    %857 = vmatpush1.msra.mxu0 0.0
    %858 = vmatprep.subr.mxu0 0.0
    %859 = vmatpush1.msra.mxu0 0.0
    %860 = vmatprep.subr.mxu0 0.0
    %861 = vmatpush1.msra.mxu0 0.0
    %862 = vmatprep.subr.mxu0 0.0
    %863 = vmatpush1.msra.mxu0 0.0
    %864 = vmatprep.subr.mxu0 0.0
    %865 = vmatpush1.msra.mxu0 0.0
    %866 = vmatprep.subr.mxu0 0.0
    %867 = vmatpush1.msra.mxu0 0.0
    %868 = vmatprep.subr.mxu0 0.0
    %869 = vmatpush1.msra.mxu0 0.0
    %870 = vmatprep.subr.mxu0 0.0
    %871 = vmatpush1.msra.mxu0 0.0
    %872 = vmatprep.subr.mxu0 0.0
    %873 = vmatpush1.msra.mxu0 0.0
    %874 = vmatprep.subr.mxu0 0.0
    %875 = vmatpush1.msra.mxu0 0.0
    %876 = vmatprep.mubr.f32.mxu0 0.0
    %877 = vmatmul.mubr.f32.gmra.mrb[0].mxu0 %v808
    %v878 = vpop.f32.mrb[0].mxu0
    %v879 = vadd.f32 %v805, %v878
    %v880 = vpop.f32.mrb[0].mxu0
    %881 = vmatprep.mubr.f32.mxu0 0.0
    %882 = vmatmul.mubr.f32.gmra.mrb[0].mxu0 %v810
    %v883 = vpop.f32.mrb[0].mxu0
    %v884 = vadd.f32 %v805, %v883
    %v885 = vpop.f32.mrb[0].mxu0
    %886 = vdwg.mxu0
    %v887 = vmax.f32 %v879, 0.0
    %v888 = vmax.f32 %v884, 0.0
    %v889 = vld [vmem:[%s3] sm:$0xff]
    %v890 = vld [vmem:[%s4] sm:$0x1]
    %v892 = vlaneseq
    %v893 = vshrl.u32 %v892, 7
    %v894 = vsub.s32 0, %v893
    %v895 = vrot.slane %v890, %v894
    %vm897 = vcmask 64512
    %v899 = vsel %vm897, %v887, 0
    %v902 = vsel %vm897, %v888, 0
    %904 = vmatprep.subr.mxu0 0.0
    %905 = vmatpush1.msra.mxu0 %v889
    %906 = vmatprep.subr.mxu0 0.0
    %907 = vmatpush1.msra.mxu0 0.0
    %908 = vmatprep.subr.mxu0 0.0
    %909 = vmatpush1.msra.mxu0 0.0
    %910 = vmatprep.subr.mxu0 0.0
    %911 = vmatpush1.msra.mxu0 0.0
    %912 = vmatprep.subr.mxu0 0.0
    %913 = vmatpush1.msra.mxu0 0.0
    %914 = vmatprep.subr.mxu0 0.0
    %915 = vmatpush1.msra.mxu0 0.0
    %916 = vmatprep.subr.mxu0 0.0
    %917 = vmatpush1.msra.mxu0 0.0
    %918 = vmatprep.subr.mxu0 0.0
    %919 = vmatpush1.msra.mxu0 0.0
    %920 = vmatprep.subr.mxu0 0.0
    %921 = vmatpush1.msra.mxu0 0.0
    %922 = vmatprep.subr.mxu0 0.0
    %923 = vmatpush1.msra.mxu0 0.0
    %924 = vmatprep.subr.mxu0 0.0
    %925 = vmatpush1.msra.mxu0 0.0
    %926 = vmatprep.subr.mxu0 0.0
    %927 = vmatpush1.msra.mxu0 0.0
    %928 = vmatprep.subr.mxu0 0.0
    %929 = vmatpush1.msra.mxu0 0.0
    %930 = vmatprep.subr.mxu0 0.0
    %931 = vmatpush1.msra.mxu0 0.0
    %932 = vmatprep.subr.mxu0 0.0
    %933 = vmatpush1.msra.mxu0 0.0
    %934 = vmatprep.subr.mxu0 0.0
    %935 = vmatpush1.msra.mxu0 0.0
    %936 = vmatprep.subr.mxu0 0.0
    %937 = vmatpush1.msra.mxu0 0.0
    %938 = vmatprep.subr.mxu0 0.0
    %939 = vmatpush1.msra.mxu0 0.0
    %940 = vmatprep.subr.mxu0 0.0
    %941 = vmatpush1.msra.mxu0 0.0
    %942 = vmatprep.subr.mxu0 0.0
    %943 = vmatpush1.msra.mxu0 0.0
    %944 = vmatprep.subr.mxu0 0.0
    %945 = vmatpush1.msra.mxu0 0.0
    %946 = vmatprep.subr.mxu0 0.0
    %947 = vmatpush1.msra.mxu0 0.0
    %948 = vmatprep.subr.mxu0 0.0
    %949 = vmatpush1.msra.mxu0 0.0
    %950 = vmatprep.subr.mxu0 0.0
    %951 = vmatpush1.msra.mxu0 0.0
    %952 = vmatprep.subr.mxu0 0.0
    %953 = vmatpush1.msra.mxu0 0.0
    %954 = vmatprep.subr.mxu0 0.0
    %955 = vmatpush1.msra.mxu0 0.0
    %956 = vmatprep.subr.mxu0 0.0
    %957 = vmatpush1.msra.mxu0 0.0
    %958 = vmatprep.subr.mxu0 0.0
    %959 = vmatpush1.msra.mxu0 0.0
    %960 = vmatprep.subr.mxu0 0.0
    %961 = vmatpush1.msra.mxu0 0.0
    %962 = vmatprep.subr.mxu0 0.0
    %963 = vmatpush1.msra.mxu0 0.0
    %964 = vmatprep.subr.mxu0 0.0
    %965 = vmatpush1.msra.mxu0 0.0
    %966 = vmatprep.subr.mxu0 0.0
    %967 = vmatpush1.msra.mxu0 0.0
    %968 = vmatprep.mubr.f32.mxu0 0.0
    %969 = vmatmul.mubr.f32.gmra.mrb[0].mxu0 %v899
    %v970 = vpop.f32.mrb[0].mxu0
    %v971 = vadd.f32 %v895, %v970
    %v972 = vpop.f32.mrb[0].mxu0
    %973 = vmatprep.mubr.f32.mxu0 0.0
    %974 = vmatmul.mubr.f32.gmra.mrb[0].mxu0 %v902
    %v975 = vpop.f32.mrb[0].mxu0
    %v976 = vadd.f32 %v895, %v975
    %v977 = vpop.f32.mrb[0].mxu0
    %978 = vdwg.mxu0
    %v979 = vadd.f32 %v971, %v976
    %v980 = vxor.u32 %v979, 2147483648
    %v981 = vmul.f32 %v980, 1.442695
    %v982 = vpow.pop %v981
    %v983 = vadd.f32 %v982, 1.0
    %v984 = vrcp.pop %v983
    %v985 = vmul.f32 1.0, %v984
    %v986 = vlaneseq
    %v987 = vshrl.u32 %v986, 7
    %v988 = vsub.s32 0, %v987
    %v989 = vrot.slane %v985, %v988
    %991 = vbcast.lane.b32.xlu0 %v989, 256
    %v992 = vpop.permute.xlu0 %991
    %s994 = sor.u32 256, 8
    %995 = vbcast.lane.b32.xlu0 %v989, %s994
    %v996 = vpop.permute.xlu0 %995
    %s998 = sor.u32 256, 16
    %999 = vbcast.lane.b32.xlu0 %v989, %s998
    %v1000 = vpop.permute.xlu0 %999
    %s1002 = sor.u32 256, 24
    %1003 = vbcast.lane.b32.xlu0 %v989, %s1002
    %v1004 = vpop.permute.xlu0 %1003
    %v1005 = vlaneseq
    %v1006 = vshrl.u32 %v1005, 7
    %v1007 = vsub.s32 1, %v1006
    %v1008 = vrot.slane %v985, %v1007
    %1010 = vbcast.lane.b32.xlu0 %v1008, 256
    %v1011 = vpop.permute.xlu0 %1010
    %s1013 = sor.u32 256, 8
    %1014 = vbcast.lane.b32.xlu0 %v1008, %s1013
    %v1015 = vpop.permute.xlu0 %1014
    %s1017 = sor.u32 256, 16
    %1018 = vbcast.lane.b32.xlu0 %v1008, %s1017
    %v1019 = vpop.permute.xlu0 %1018
    %s1021 = sor.u32 256, 24
    %1022 = vbcast.lane.b32.xlu0 %v1008, %s1021
    %v1023 = vpop.permute.xlu0 %1022
    %v1024 = vlaneseq
    %v1025 = vshrl.u32 %v1024, 7
    %v1026 = vsub.s32 2, %v1025
    %v1027 = vrot.slane %v985, %v1026
    %1029 = vbcast.lane.b32.xlu0 %v1027, 256
    %v1030 = vpop.permute.xlu0 %1029
    %s1032 = sor.u32 256, 8
    %1033 = vbcast.lane.b32.xlu0 %v1027, %s1032
    %v1034 = vpop.permute.xlu0 %1033
    %s1036 = sor.u32 256, 16
    %1037 = vbcast.lane.b32.xlu0 %v1027, %s1036
    %v1038 = vpop.permute.xlu0 %1037
    %s1040 = sor.u32 256, 24
    %1041 = vbcast.lane.b32.xlu0 %v1027, %s1040
    %v1042 = vpop.permute.xlu0 %1041
    %v1043 = vlaneseq
    %v1044 = vshrl.u32 %v1043, 7
    %v1045 = vsub.s32 3, %v1044
    %v1046 = vrot.slane %v985, %v1045
    %1048 = vbcast.lane.b32.xlu0 %v1046, 256
    %v1049 = vpop.permute.xlu0 %1048
    %s1051 = sor.u32 256, 8
    %1052 = vbcast.lane.b32.xlu0 %v1046, %s1051
    %v1053 = vpop.permute.xlu0 %1052
    %s1055 = sor.u32 256, 16
    %1056 = vbcast.lane.b32.xlu0 %v1046, %s1055
    %v1057 = vpop.permute.xlu0 %1056
    %s1059 = sor.u32 256, 24
    %1060 = vbcast.lane.b32.xlu0 %v1046, %s1059
    %v1061 = vpop.permute.xlu0 %1060
    %v1062 = vlaneseq
    %v1063 = vshrl.u32 %v1062, 7
    %v1064 = vsub.s32 4, %v1063
    %v1065 = vrot.slane %v985, %v1064
    %1067 = vbcast.lane.b32.xlu0 %v1065, 256
    %v1068 = vpop.permute.xlu0 %1067
    %s1070 = sor.u32 256, 8
    %1071 = vbcast.lane.b32.xlu0 %v1065, %s1070
    %v1072 = vpop.permute.xlu0 %1071
    %s1074 = sor.u32 256, 16
    %1075 = vbcast.lane.b32.xlu0 %v1065, %s1074
    %v1076 = vpop.permute.xlu0 %1075
    %s1078 = sor.u32 256, 24
    %1079 = vbcast.lane.b32.xlu0 %v1065, %s1078
    %v1080 = vpop.permute.xlu0 %1079
    %v1081 = vlaneseq
    %v1082 = vshrl.u32 %v1081, 7
    %v1083 = vsub.s32 5, %v1082
    %v1084 = vrot.slane %v985, %v1083
    %1086 = vbcast.lane.b32.xlu0 %v1084, 256
    %v1087 = vpop.permute.xlu0 %1086
    %s1089 = sor.u32 256, 8
    %1090 = vbcast.lane.b32.xlu0 %v1084, %s1089
    %v1091 = vpop.permute.xlu0 %1090
    %s1093 = sor.u32 256, 16
    %1094 = vbcast.lane.b32.xlu0 %v1084, %s1093
    %v1095 = vpop.permute.xlu0 %1094
    %s1097 = sor.u32 256, 24
    %1098 = vbcast.lane.b32.xlu0 %v1084, %s1097
    %v1099 = vpop.permute.xlu0 %1098
    %v1100 = vlaneseq
    %v1101 = vshrl.u32 %v1100, 7
    %v1102 = vsub.s32 6, %v1101
    %v1103 = vrot.slane %v985, %v1102
    %1105 = vbcast.lane.b32.xlu0 %v1103, 256
    %v1106 = vpop.permute.xlu0 %1105
    %s1108 = sor.u32 256, 8
    %1109 = vbcast.lane.b32.xlu0 %v1103, %s1108
    %v1110 = vpop.permute.xlu0 %1109
    %s1112 = sor.u32 256, 16
    %1113 = vbcast.lane.b32.xlu0 %v1103, %s1112
    %v1114 = vpop.permute.xlu0 %1113
    %s1116 = sor.u32 256, 24
    %1117 = vbcast.lane.b32.xlu0 %v1103, %s1116
    %v1118 = vpop.permute.xlu0 %1117
    %v1119 = vlaneseq
    %v1120 = vshrl.u32 %v1119, 7
    %v1121 = vsub.s32 7, %v1120
    %v1122 = vrot.slane %v985, %v1121
    %1124 = vbcast.lane.b32.xlu0 %v1122, 256
    %v1125 = vpop.permute.xlu0 %1124
    %s1127 = sor.u32 256, 8
    %1128 = vbcast.lane.b32.xlu0 %v1122, %s1127
    %v1129 = vpop.permute.xlu0 %1128
    %s1131 = sor.u32 256, 16
    %1132 = vbcast.lane.b32.xlu0 %v1122, %s1131
    %v1133 = vpop.permute.xlu0 %1132
    %s1135 = sor.u32 256, 24
    %1136 = vbcast.lane.b32.xlu0 %v1122, %s1135
    %v1137 = vpop.permute.xlu0 %1136
    loop: start=0, step=1, limit=2
    $region49: #{tpu_custom_call.1} parent=1 // loop_pre_header
      _
    $region50: #{tpu_custom_call.1} parent=1 // loop_header
      %s1139 = sphi 0, %s1143
      %p1140 = scmp.ge.s32.totalorder %s1139, 2
    $region51: #{tpu_custom_call.1} parent=1 // loop_header_branch
      %1142 = sbr.rel (%p1140) target = $region55
    $region52: #{tpu_custom_call.1} parent=1 // loop_body
      %s1144 = smul.u32 %s1139, 128
      %s1145 = sshra.s32 %s1144, 7
      %s1146 = sand.u32 %s1144, 127
      %s1147 = smul.addr %s1145, 8
      %s1148 = scalar_lea.vmem [#allocation4], %s1147
      %v1149 = vld [vmem:[%s1148] sm:$0xff]
      %v1150 = vld [vmem:[%s1148 + $0x10] sm:$0xff]
      %v1151 = vld [vmem:[%s1148 + $0x20] sm:$0xff]
      %v1152 = vld [vmem:[%s1148 + $0x30] sm:$0xff]
      %v1153 = vld [vmem:[%s1148 + $0x40] sm:$0xff]
      %v1154 = vld [vmem:[%s1148 + $0x50] sm:$0xff]
      %v1155 = vld [vmem:[%s1148 + $0x60] sm:$0xff]
      %v1156 = vld [vmem:[%s1148 + $0x70] sm:$0xff]
      %v1157 = vld [vmem:[%s1148 + $0x80] sm:$0xff]
      %v1158 = vld [vmem:[%s1148 + $0x90] sm:$0xff]
      %v1159 = vld [vmem:[%s1148 + $0xa0] sm:$0xff]
      %v1160 = vld [vmem:[%s1148 + $0xb0] sm:$0xff]
      %v1161 = vld [vmem:[%s1148 + $0xc0] sm:$0xff]
      %v1162 = vld [vmem:[%s1148 + $0xd0] sm:$0xff]
      %v1163 = vld [vmem:[%s1148 + $0xe0] sm:$0xff]
      %v1164 = vld [vmem:[%s1148 + $0xf0] sm:$0xff]
      %v1165 = vld [vmem:[%s1148 + $0x100] sm:$0xff]
      %v1166 = vld [vmem:[%s1148 + $0x110] sm:$0xff]
      %v1167 = vld [vmem:[%s1148 + $0x120] sm:$0xff]
      %v1168 = vld [vmem:[%s1148 + $0x130] sm:$0xff]
      %v1169 = vld [vmem:[%s1148 + $0x140] sm:$0xff]
      %v1170 = vld [vmem:[%s1148 + $0x150] sm:$0xff]
      %v1171 = vld [vmem:[%s1148 + $0x160] sm:$0xff]
      %v1172 = vld [vmem:[%s1148 + $0x170] sm:$0xff]
      %v1173 = vld [vmem:[%s1148 + $0x180] sm:$0xff]
      %v1174 = vld [vmem:[%s1148 + $0x190] sm:$0xff]
      %v1175 = vld [vmem:[%s1148 + $0x1a0] sm:$0xff]
      %v1176 = vld [vmem:[%s1148 + $0x1b0] sm:$0xff]
      %v1177 = vld [vmem:[%s1148 + $0x1c0] sm:$0xff]
      %v1178 = vld [vmem:[%s1148 + $0x1d0] sm:$0xff]
      %v1179 = vld [vmem:[%s1148 + $0x1e0] sm:$0xff]
      %v1180 = vld [vmem:[%s1148 + $0x1f0] sm:$0xff]
      %v1181 = vmul.f32 %v1149, %v992
      %v1182 = vmul.f32 %v1150, %v996
      %v1183 = vmul.f32 %v1151, %v1000
      %v1184 = vmul.f32 %v1152, %v1004
      %v1185 = vmul.f32 %v1153, %v1011
      %v1186 = vmul.f32 %v1154, %v1015
      %v1187 = vmul.f32 %v1155, %v1019
      %v1188 = vmul.f32 %v1156, %v1023
      %v1189 = vmul.f32 %v1157, %v1030
      %v1190 = vmul.f32 %v1158, %v1034
      %v1191 = vmul.f32 %v1159, %v1038
      %v1192 = vmul.f32 %v1160, %v1042
      %v1193 = vmul.f32 %v1161, %v1049
      %v1194 = vmul.f32 %v1162, %v1053
      %v1195 = vmul.f32 %v1163, %v1057
      %v1196 = vmul.f32 %v1164, %v1061
      %v1197 = vmul.f32 %v1165, %v1068
      %v1198 = vmul.f32 %v1166, %v1072
      %v1199 = vmul.f32 %v1167, %v1076
      %v1200 = vmul.f32 %v1168, %v1080
      %v1201 = vmul.f32 %v1169, %v1087
      %v1202 = vmul.f32 %v1170, %v1091
      %v1203 = vmul.f32 %v1171, %v1095
      %v1204 = vmul.f32 %v1172, %v1099
      %v1205 = vmul.f32 %v1173, %v1106
      %v1206 = vmul.f32 %v1174, %v1110
      %v1207 = vmul.f32 %v1175, %v1114
      %v1208 = vmul.f32 %v1176, %v1118
      %v1209 = vmul.f32 %v1177, %v1125
      %v1210 = vmul.f32 %v1178, %v1129
      %v1211 = vmul.f32 %v1179, %v1133
      %v1212 = vmul.f32 %v1180, %v1137
      %v1213 = vmax.f32 %v1181, %v1182
      %v1214 = vmax.f32 %v1213, %v1183
      %v1215 = vmax.f32 %v1214, %v1184
      %v1216 = vrot.slane %v1215, 4
      %v1217 = vmax.f32 %v1215, %v1216
      %v1218 = vrot.slane %v1217, 2
      %v1219 = vmax.f32 %v1217, %v1218
      %v1220 = vrot.slane %v1219, 1
      %v1221 = vmax.f32 %v1219, %v1220
      %v1222 = vmax.f32 %v1185, %v1186
      %v1223 = vmax.f32 %v1222, %v1187
      %v1224 = vmax.f32 %v1223, %v1188
      %v1225 = vrot.slane %v1224, 4
      %v1226 = vmax.f32 %v1224, %v1225
      %v1227 = vrot.slane %v1226, 2
      %v1228 = vmax.f32 %v1226, %v1227
      %v1229 = vrot.slane %v1228, 1
      %v1230 = vmax.f32 %v1228, %v1229
      %v1231 = vmax.f32 %v1189, %v1190
      %v1232 = vmax.f32 %v1231, %v1191
      %v1233 = vmax.f32 %v1232, %v1192
      %v1234 = vrot.slane %v1233, 4
      %v1235 = vmax.f32 %v1233, %v1234
      %v1236 = vrot.slane %v1235, 2
      %v1237 = vmax.f32 %v1235, %v1236
      %v1238 = vrot.slane %v1237, 1
      %v1239 = vmax.f32 %v1237, %v1238
      %v1240 = vmax.f32 %v1193, %v1194
      %v1241 = vmax.f32 %v1240, %v1195
      %v1242 = vmax.f32 %v1241, %v1196
      %v1243 = vrot.slane %v1242, 4
      %v1244 = vmax.f32 %v1242, %v1243
      %v1245 = vrot.slane %v1244, 2
      %v1246 = vmax.f32 %v1244, %v1245
      %v1247 = vrot.slane %v1246, 1
      %v1248 = vmax.f32 %v1246, %v1247
      %v1249 = vmax.f32 %v1197, %v1198
      %v1250 = vmax.f32 %v1249, %v1199
      %v1251 = vmax.f32 %v1250, %v1200
      %v1252 = vrot.slane %v1251, 4
      %v1253 = vmax.f32 %v1251, %v1252
      %v1254 = vrot.slane %v1253, 2
      %v1255 = vmax.f32 %v1253, %v1254
      %v1256 = vrot.slane %v1255, 1
      %v1257 = vmax.f32 %v1255, %v1256
      %v1258 = vmax.f32 %v1201, %v1202
      %v1259 = vmax.f32 %v1258, %v1203
      %v1260 = vmax.f32 %v1259, %v1204
      %v1261 = vrot.slane %v1260, 4
      %v1262 = vmax.f32 %v1260, %v1261
      %v1263 = vrot.slane %v1262, 2
      %v1264 = vmax.f32 %v1262, %v1263
      %v1265 = vrot.slane %v1264, 1
      %v1266 = vmax.f32 %v1264, %v1265
      %v1267 = vmax.f32 %v1205, %v1206
      %v1268 = vmax.f32 %v1267, %v1207
      %v1269 = vmax.f32 %v1268, %v1208
      %v1270 = vrot.slane %v1269, 4
      %v1271 = vmax.f32 %v1269, %v1270
      %v1272 = vrot.slane %v1271, 2
      %v1273 = vmax.f32 %v1271, %v1272
      %v1274 = vrot.slane %v1273, 1
      %v1275 = vmax.f32 %v1273, %v1274
      %v1276 = vmax.f32 %v1209, %v1210
      %v1277 = vmax.f32 %v1276, %v1211
      %v1278 = vmax.f32 %v1277, %v1212
      %v1279 = vrot.slane %v1278, 4
      %v1280 = vmax.f32 %v1278, %v1279
      %v1281 = vrot.slane %v1280, 2
      %v1282 = vmax.f32 %v1280, %v1281
      %v1283 = vrot.slane %v1282, 1
      %v1284 = vmax.f32 %v1282, %v1283
      %v1293 = vsel %vm591, %v1230, %v1221
      %v1294 = vsel %vm593, %v1239, %v1293
      %v1295 = vsel %vm595, %v1248, %v1294
      %v1296 = vsel %vm597, %v1257, %v1295
      %v1297 = vsel %vm599, %v1266, %v1296
      %v1298 = vsel %vm601, %v1275, %v1297
      %v1299 = vsel %vm603, %v1284, %v1298
      %s1301 = smul.addr %s1145, 8
      %s1302 = scalar_lea.vmem [#allocation2], %s1301
      %1303 = vst [vmem:[%s1302] sm:$0xff] %v1299
      %s1304 = sadd.s32 %s1144, 256
      %v1305 = vadd.f32 %v1181, %v1182
      %v1306 = vadd.f32 %v1305, %v1183
      %v1307 = vadd.f32 %v1306, %v1184
      %v1308 = vrot.slane %v1307, 4
      %v1309 = vadd.f32 %v1307, %v1308
      %v1310 = vrot.slane %v1309, 2
      %v1311 = vadd.f32 %v1309, %v1310
      %v1312 = vrot.slane %v1311, 1
      %v1313 = vadd.f32 %v1311, %v1312
      %v1314 = vadd.f32 %v1185, %v1186
      %v1315 = vadd.f32 %v1314, %v1187
      %v1316 = vadd.f32 %v1315, %v1188
      %v1317 = vrot.slane %v1316, 4
      %v1318 = vadd.f32 %v1316, %v1317
      %v1319 = vrot.slane %v1318, 2
      %v1320 = vadd.f32 %v1318, %v1319
      %v1321 = vrot.slane %v1320, 1
      %v1322 = vadd.f32 %v1320, %v1321
      %v1323 = vadd.f32 %v1189, %v1190
      %v1324 = vadd.f32 %v1323, %v1191
      %v1325 = vadd.f32 %v1324, %v1192
      %v1326 = vrot.slane %v1325, 4
      %v1327 = vadd.f32 %v1325, %v1326
      %v1328 = vrot.slane %v1327, 2
      %v1329 = vadd.f32 %v1327, %v1328
      %v1330 = vrot.slane %v1329, 1
      %v1331 = vadd.f32 %v1329, %v1330
      %v1332 = vadd.f32 %v1193, %v1194
      %v1333 = vadd.f32 %v1332, %v1195
      %v1334 = vadd.f32 %v1333, %v1196
      %v1335 = vrot.slane %v1334, 4
      %v1336 = vadd.f32 %v1334, %v1335
      %v1337 = vrot.slane %v1336, 2
      %v1338 = vadd.f32 %v1336, %v1337
      %v1339 = vrot.slane %v1338, 1
      %v1340 = vadd.f32 %v1338, %v1339
      %v1341 = vadd.f32 %v1197, %v1198
      %v1342 = vadd.f32 %v1341, %v1199
      %v1343 = vadd.f32 %v1342, %v1200
      %v1344 = vrot.slane %v1343, 4
      %v1345 = vadd.f32 %v1343, %v1344
      %v1346 = vrot.slane %v1345, 2
      %v1347 = vadd.f32 %v1345, %v1346
      %v1348 = vrot.slane %v1347, 1
      %v1349 = vadd.f32 %v1347, %v1348
      %v1350 = vadd.f32 %v1201, %v1202
      %v1351 = vadd.f32 %v1350, %v1203
      %v1352 = vadd.f32 %v1351, %v1204
      %v1353 = vrot.slane %v1352, 4
      %v1354 = vadd.f32 %v1352, %v1353
      %v1355 = vrot.slane %v1354, 2
      %v1356 = vadd.f32 %v1354, %v1355
      %v1357 = vrot.slane %v1356, 1
      %v1358 = vadd.f32 %v1356, %v1357
      %v1359 = vadd.f32 %v1205, %v1206
      %v1360 = vadd.f32 %v1359, %v1207
      %v1361 = vadd.f32 %v1360, %v1208
      %v1362 = vrot.slane %v1361, 4
      %v1363 = vadd.f32 %v1361, %v1362
      %v1364 = vrot.slane %v1363, 2
      %v1365 = vadd.f32 %v1363, %v1364
      %v1366 = vrot.slane %v1365, 1
      %v1367 = vadd.f32 %v1365, %v1366
      %v1368 = vadd.f32 %v1209, %v1210
      %v1369 = vadd.f32 %v1368, %v1211
      %v1370 = vadd.f32 %v1369, %v1212
      %v1371 = vrot.slane %v1370, 4
      %v1372 = vadd.f32 %v1370, %v1371
      %v1373 = vrot.slane %v1372, 2
      %v1374 = vadd.f32 %v1372, %v1373
      %v1375 = vrot.slane %v1374, 1
      %v1376 = vadd.f32 %v1374, %v1375
      %v1377 = vmul.f32 %v1313, 0.03125
      %v1378 = vmul.f32 %v1322, 0.03125
      %v1379 = vmul.f32 %v1331, 0.03125
      %v1380 = vmul.f32 %v1340, 0.03125
      %v1381 = vmul.f32 %v1349, 0.03125
      %v1382 = vmul.f32 %v1358, 0.03125
      %v1383 = vmul.f32 %v1367, 0.03125
      %v1384 = vmul.f32 %v1376, 0.03125
      %v1393 = vsel %vm591, %v1378, %v1377
      %v1394 = vsel %vm593, %v1379, %v1393
      %v1395 = vsel %vm595, %v1380, %v1394
      %v1396 = vsel %vm597, %v1381, %v1395
      %v1397 = vsel %vm599, %v1382, %v1396
      %v1398 = vsel %vm601, %v1383, %v1397
      %v1399 = vsel %vm603, %v1384, %v1398
      %s1401 = sshra.s32 %s1304, 7
      %s1402 = sand.u32 %s1304, 127
      %s1403 = smul.addr %s1401, 8
      %s1404 = scalar_lea.vmem [#allocation2], %s1403
      %1405 = vst [vmem:[%s1404] sm:$0xff] %v1399
    $region53: #{tpu_custom_call.1} parent=1 // loop_footer
      %s1143 = sadd.s32 1, %s1139
    $region54: #{tpu_custom_call.1} parent=1 // loop_footer_branch
      %1138 = sbr.rel target = $region50
    $region55: #{tpu_custom_call.1} parent=1 // loop_exit
      _
    %v1406 = vld [vmem:[#allocation2] sm:$0xff]
    %v1407 = vld [vmem:[#allocation2 + $0x8] sm:$0xff]
    %v1408 = vld [vmem:[#allocation2 + $0x10] sm:$0xff]
    %v1409 = vld [vmem:[#allocation2 + $0x18] sm:$0xff]
    %v1410 = vpack.c.bf16 %v1406, %v1406
    %v1411 = vpack.c.bf16 %v1407, %v1407
    %v1412 = vpack.c.bf16 %v1408, %v1408
    %v1413 = vpack.c.bf16 %v1409, %v1409
    %v1414 = vld [vmem:[#allocation8] sm:$0xff]
    %v1415 = vld [vmem:[#allocation8 + $0x8] sm:$0xff]
    %v1416 = vld [vmem:[#allocation8 + $0x10] sm:$0xff]
    %v1417 = vld [vmem:[#allocation8 + $0x18] sm:$0xff]
    %v1418 = vld [vmem:[#allocation8 + $0x20] sm:$0xff]
    %v1419 = vld [vmem:[#allocation8 + $0x28] sm:$0xff]
    %v1420 = vld [vmem:[#allocation8 + $0x30] sm:$0xff]
    %v1421 = vld [vmem:[#allocation8 + $0x38] sm:$0xff]
    %v1422 = vld [vmem:[#allocation8 + $0x40] sm:$0xff]
    %v1423 = vld [vmem:[#allocation8 + $0x48] sm:$0xff]
    %v1424 = vld [vmem:[#allocation8 + $0x50] sm:$0xff]
    %v1425 = vld [vmem:[#allocation8 + $0x58] sm:$0xff]
    %v1426 = vld [vmem:[#allocation8 + $0x60] sm:$0xff]
    %v1427 = vld [vmem:[#allocation8 + $0x68] sm:$0xff]
    %v1428 = vld [vmem:[#allocation8 + $0x70] sm:$0xff]
    %v1429 = vld [vmem:[#allocation8 + $0x78] sm:$0xff]
    %v1430 = vld [vmem:[#allocation8 + $0x80] sm:$0xff]
    %v1431 = vld [vmem:[#allocation8 + $0x88] sm:$0xff]
    %v1432 = vld [vmem:[#allocation8 + $0x90] sm:$0xff]
    %v1433 = vld [vmem:[#allocation8 + $0x98] sm:$0xff]
    %v1434 = vld [vmem:[#allocation8 + $0xa0] sm:$0xff]
    %v1435 = vld [vmem:[#allocation8 + $0xa8] sm:$0xff]
    %v1436 = vld [vmem:[#allocation8 + $0xb0] sm:$0xff]
    %v1437 = vld [vmem:[#allocation8 + $0xb8] sm:$0xff]
    %v1438 = vld [vmem:[#allocation8 + $0xc0] sm:$0xff]
    %v1439 = vld [vmem:[#allocation8 + $0xc8] sm:$0xff]
    %v1440 = vld [vmem:[#allocation8 + $0xd0] sm:$0xff]
    %v1441 = vld [vmem:[#allocation8 + $0xd8] sm:$0xff]
    %v1442 = vld [vmem:[#allocation8 + $0xe0] sm:$0xff]
    %v1443 = vld [vmem:[#allocation8 + $0xe8] sm:$0xff]
    %v1444 = vld [vmem:[#allocation8 + $0xf0] sm:$0xff]
    %v1445 = vld [vmem:[#allocation8 + $0xf8] sm:$0xff]
    %v1446 = vld [vmem:[#allocation8 + $0x100] sm:$0xff]
    %v1447 = vld [vmem:[#allocation8 + $0x108] sm:$0xff]
    %v1448 = vld [vmem:[#allocation8 + $0x110] sm:$0xff]
    %v1449 = vld [vmem:[#allocation8 + $0x118] sm:$0xff]
    %v1450 = vld [vmem:[#allocation8 + $0x120] sm:$0xff]
    %v1451 = vld [vmem:[#allocation8 + $0x128] sm:$0xff]
    %v1452 = vld [vmem:[#allocation8 + $0x130] sm:$0xff]
    %v1453 = vld [vmem:[#allocation8 + $0x138] sm:$0xff]
    %v1454 = vld [vmem:[#allocation8 + $0x140] sm:$0xff]
    %v1455 = vld [vmem:[#allocation8 + $0x148] sm:$0xff]
    %v1456 = vld [vmem:[#allocation8 + $0x150] sm:$0xff]
    %v1457 = vld [vmem:[#allocation8 + $0x158] sm:$0xff]
    %v1458 = vld [vmem:[#allocation8 + $0x160] sm:$0xff]
    %v1459 = vld [vmem:[#allocation8 + $0x168] sm:$0xff]
    %v1460 = vld [vmem:[#allocation8 + $0x170] sm:$0xff]
    %v1461 = vld [vmem:[#allocation8 + $0x178] sm:$0xff]
    %v1462 = vld [vmem:[#allocation8 + $0x180] sm:$0xff]
    %v1463 = vld [vmem:[#allocation8 + $0x188] sm:$0xff]
    %v1464 = vld [vmem:[#allocation8 + $0x190] sm:$0xff]
    %v1465 = vld [vmem:[#allocation8 + $0x198] sm:$0xff]
    %v1466 = vld [vmem:[#allocation8 + $0x1a0] sm:$0xff]
    %v1467 = vld [vmem:[#allocation8 + $0x1a8] sm:$0xff]
    %v1468 = vld [vmem:[#allocation8 + $0x1b0] sm:$0xff]
    %v1469 = vld [vmem:[#allocation8 + $0x1b8] sm:$0xff]
    %v1470 = vld [vmem:[#allocation8 + $0x1c0] sm:$0xff]
    %v1471 = vld [vmem:[#allocation8 + $0x1c8] sm:$0xff]
    %v1472 = vld [vmem:[#allocation8 + $0x1d0] sm:$0xff]
    %v1473 = vld [vmem:[#allocation8 + $0x1d8] sm:$0xff]
    %v1474 = vld [vmem:[#allocation8 + $0x1e0] sm:$0xff]
    %v1475 = vld [vmem:[#allocation8 + $0x1e8] sm:$0xff]
    %v1476 = vld [vmem:[#allocation8 + $0x1f0] sm:$0xff]
    %v1477 = vld [vmem:[#allocation8 + $0x1f8] sm:$0xff]
    %v1542 = vunpack.c.l.b16 %v1414
    %v1543 = vunpack.c.h.b16 %v1414
    %v1544 = vunpack.c.l.b16 %v1415
    %v1545 = vunpack.c.h.b16 %v1415
    %v1546 = vunpack.c.l.b16 %v1416
    %v1547 = vunpack.c.h.b16 %v1416
    %v1548 = vunpack.c.l.b16 %v1417
    %v1549 = vunpack.c.h.b16 %v1417
    %v1550 = vunpack.c.l.b16 %v1418
    %v1551 = vunpack.c.h.b16 %v1418
    %v1552 = vunpack.c.l.b16 %v1419
    %v1553 = vunpack.c.h.b16 %v1419
    %v1554 = vunpack.c.l.b16 %v1420
    %v1555 = vunpack.c.h.b16 %v1420
    %v1556 = vunpack.c.l.b16 %v1421
    %v1557 = vunpack.c.h.b16 %v1421
    %v1558 = vunpack.c.l.b16 %v1422
    %v1559 = vunpack.c.h.b16 %v1422
    %v1560 = vunpack.c.l.b16 %v1423
    %v1561 = vunpack.c.h.b16 %v1423
    %v1562 = vunpack.c.l.b16 %v1424
    %v1563 = vunpack.c.h.b16 %v1424
    %v1564 = vunpack.c.l.b16 %v1425
    %v1565 = vunpack.c.h.b16 %v1425
    %v1566 = vunpack.c.l.b16 %v1426
    %v1567 = vunpack.c.h.b16 %v1426
    %v1568 = vunpack.c.l.b16 %v1427
    %v1569 = vunpack.c.h.b16 %v1427
    %v1570 = vunpack.c.l.b16 %v1428
    %v1571 = vunpack.c.h.b16 %v1428
    %v1572 = vunpack.c.l.b16 %v1429
    %v1573 = vunpack.c.h.b16 %v1429
    %v1574 = vunpack.c.l.b16 %v1430
    %v1575 = vunpack.c.h.b16 %v1430
    %v1576 = vunpack.c.l.b16 %v1431
    %v1577 = vunpack.c.h.b16 %v1431
    %v1578 = vunpack.c.l.b16 %v1432
    %v1579 = vunpack.c.h.b16 %v1432
    %v1580 = vunpack.c.l.b16 %v1433
    %v1581 = vunpack.c.h.b16 %v1433
    %v1582 = vunpack.c.l.b16 %v1434
    %v1583 = vunpack.c.h.b16 %v1434
    %v1584 = vunpack.c.l.b16 %v1435
    %v1585 = vunpack.c.h.b16 %v1435
    %v1586 = vunpack.c.l.b16 %v1436
    %v1587 = vunpack.c.h.b16 %v1436
    %v1588 = vunpack.c.l.b16 %v1437
    %v1589 = vunpack.c.h.b16 %v1437
    %v1590 = vunpack.c.l.b16 %v1438
    %v1591 = vunpack.c.h.b16 %v1438
    %v1592 = vunpack.c.l.b16 %v1439
    %v1593 = vunpack.c.h.b16 %v1439
    %v1594 = vunpack.c.l.b16 %v1440
    %v1595 = vunpack.c.h.b16 %v1440
    %v1596 = vunpack.c.l.b16 %v1441
    %v1597 = vunpack.c.h.b16 %v1441
    %v1598 = vunpack.c.l.b16 %v1442
    %v1599 = vunpack.c.h.b16 %v1442
    %v1600 = vunpack.c.l.b16 %v1443
    %v1601 = vunpack.c.h.b16 %v1443
    %v1602 = vunpack.c.l.b16 %v1444
    %v1603 = vunpack.c.h.b16 %v1444
    %v1604 = vunpack.c.l.b16 %v1445
    %v1605 = vunpack.c.h.b16 %v1445
    %v1606 = vunpack.c.l.b16 %v1446
    %v1607 = vunpack.c.h.b16 %v1446
    %v1608 = vunpack.c.l.b16 %v1447
    %v1609 = vunpack.c.h.b16 %v1447
    %v1610 = vunpack.c.l.b16 %v1448
    %v1611 = vunpack.c.h.b16 %v1448
    %v1612 = vunpack.c.l.b16 %v1449
    %v1613 = vunpack.c.h.b16 %v1449
    %v1614 = vunpack.c.l.b16 %v1450
    %v1615 = vunpack.c.h.b16 %v1450
    %v1616 = vunpack.c.l.b16 %v1451
    %v1617 = vunpack.c.h.b16 %v1451
    %v1618 = vunpack.c.l.b16 %v1452
    %v1619 = vunpack.c.h.b16 %v1452
    %v1620 = vunpack.c.l.b16 %v1453
    %v1621 = vunpack.c.h.b16 %v1453
    %v1622 = vunpack.c.l.b16 %v1454
    %v1623 = vunpack.c.h.b16 %v1454
    %v1624 = vunpack.c.l.b16 %v1455
    %v1625 = vunpack.c.h.b16 %v1455
    %v1626 = vunpack.c.l.b16 %v1456
    %v1627 = vunpack.c.h.b16 %v1456
    %v1628 = vunpack.c.l.b16 %v1457
    %v1629 = vunpack.c.h.b16 %v1457
    %v1630 = vunpack.c.l.b16 %v1458
    %v1631 = vunpack.c.h.b16 %v1458
    %v1632 = vunpack.c.l.b16 %v1459
    %v1633 = vunpack.c.h.b16 %v1459
    %v1634 = vunpack.c.l.b16 %v1460
    %v1635 = vunpack.c.h.b16 %v1460
    %v1636 = vunpack.c.l.b16 %v1461
    %v1637 = vunpack.c.h.b16 %v1461
    %v1638 = vunpack.c.l.b16 %v1462
    %v1639 = vunpack.c.h.b16 %v1462
    %v1640 = vunpack.c.l.b16 %v1463
    %v1641 = vunpack.c.h.b16 %v1463
    %v1642 = vunpack.c.l.b16 %v1464
    %v1643 = vunpack.c.h.b16 %v1464
    %v1644 = vunpack.c.l.b16 %v1465
    %v1645 = vunpack.c.h.b16 %v1465
    %v1646 = vunpack.c.l.b16 %v1466
    %v1647 = vunpack.c.h.b16 %v1466
    %v1648 = vunpack.c.l.b16 %v1467
    %v1649 = vunpack.c.h.b16 %v1467
    %v1650 = vunpack.c.l.b16 %v1468
    %v1651 = vunpack.c.h.b16 %v1468
    %v1652 = vunpack.c.l.b16 %v1469
    %v1653 = vunpack.c.h.b16 %v1469
    %v1654 = vunpack.c.l.b16 %v1470
    %v1655 = vunpack.c.h.b16 %v1470
    %v1656 = vunpack.c.l.b16 %v1471
    %v1657 = vunpack.c.h.b16 %v1471
    %v1658 = vunpack.c.l.b16 %v1472
    %v1659 = vunpack.c.h.b16 %v1472
    %v1660 = vunpack.c.l.b16 %v1473
    %v1661 = vunpack.c.h.b16 %v1473
    %v1662 = vunpack.c.l.b16 %v1474
    %v1663 = vunpack.c.h.b16 %v1474
    %v1664 = vunpack.c.l.b16 %v1475
    %v1665 = vunpack.c.h.b16 %v1475
    %v1666 = vunpack.c.l.b16 %v1476
    %v1667 = vunpack.c.h.b16 %v1476
    %v1668 = vunpack.c.l.b16 %v1477
    %v1669 = vunpack.c.h.b16 %v1477
    %v1670 = vpack.c.b16 %v1544, %v1542
    %v1671 = vpack.c.b16 %v1545, %v1543
    %v1672 = vpack.c.b16 %v1548, %v1546
    %v1673 = vpack.c.b16 %v1549, %v1547
    %v1674 = vpack.c.b16 %v1552, %v1550
    %v1675 = vpack.c.b16 %v1553, %v1551
    %v1676 = vpack.c.b16 %v1556, %v1554
    %v1677 = vpack.c.b16 %v1557, %v1555
    %v1678 = vpack.c.b16 %v1560, %v1558
    %v1679 = vpack.c.b16 %v1561, %v1559
    %v1680 = vpack.c.b16 %v1564, %v1562
    %v1681 = vpack.c.b16 %v1565, %v1563
    %v1682 = vpack.c.b16 %v1568, %v1566
    %v1683 = vpack.c.b16 %v1569, %v1567
    %v1684 = vpack.c.b16 %v1572, %v1570
    %v1685 = vpack.c.b16 %v1573, %v1571
    %v1686 = vpack.c.b16 %v1576, %v1574
    %v1687 = vpack.c.b16 %v1577, %v1575
    %v1688 = vpack.c.b16 %v1580, %v1578
    %v1689 = vpack.c.b16 %v1581, %v1579
    %v1690 = vpack.c.b16 %v1584, %v1582
    %v1691 = vpack.c.b16 %v1585, %v1583
    %v1692 = vpack.c.b16 %v1588, %v1586
    %v1693 = vpack.c.b16 %v1589, %v1587
    %v1694 = vpack.c.b16 %v1592, %v1590
    %v1695 = vpack.c.b16 %v1593, %v1591
    %v1696 = vpack.c.b16 %v1596, %v1594
    %v1697 = vpack.c.b16 %v1597, %v1595
    %v1698 = vpack.c.b16 %v1600, %v1598
    %v1699 = vpack.c.b16 %v1601, %v1599
    %v1700 = vpack.c.b16 %v1604, %v1602
    %v1701 = vpack.c.b16 %v1605, %v1603
    %v1702 = vpack.c.b16 %v1608, %v1606
    %v1703 = vpack.c.b16 %v1609, %v1607
    %v1704 = vpack.c.b16 %v1612, %v1610
    %v1705 = vpack.c.b16 %v1613, %v1611
    %v1706 = vpack.c.b16 %v1616, %v1614
    %v1707 = vpack.c.b16 %v1617, %v1615
    %v1708 = vpack.c.b16 %v1620, %v1618
    %v1709 = vpack.c.b16 %v1621, %v1619
    %v1710 = vpack.c.b16 %v1624, %v1622
    %v1711 = vpack.c.b16 %v1625, %v1623
    %v1712 = vpack.c.b16 %v1628, %v1626
    %v1713 = vpack.c.b16 %v1629, %v1627
    %v1714 = vpack.c.b16 %v1632, %v1630
    %v1715 = vpack.c.b16 %v1633, %v1631
    %v1716 = vpack.c.b16 %v1636, %v1634
    %v1717 = vpack.c.b16 %v1637, %v1635
    %v1718 = vpack.c.b16 %v1640, %v1638
    %v1719 = vpack.c.b16 %v1641, %v1639
    %v1720 = vpack.c.b16 %v1644, %v1642
    %v1721 = vpack.c.b16 %v1645, %v1643
    %v1722 = vpack.c.b16 %v1648, %v1646
    %v1723 = vpack.c.b16 %v1649, %v1647
    %v1724 = vpack.c.b16 %v1652, %v1650
    %v1725 = vpack.c.b16 %v1653, %v1651
    %v1726 = vpack.c.b16 %v1656, %v1654
    %v1727 = vpack.c.b16 %v1657, %v1655
    %v1728 = vpack.c.b16 %v1660, %v1658
    %v1729 = vpack.c.b16 %v1661, %v1659
    %v1730 = vpack.c.b16 %v1664, %v1662
    %v1731 = vpack.c.b16 %v1665, %v1663
    %v1732 = vpack.c.b16 %v1668, %v1666
    %v1733 = vpack.c.b16 %v1669, %v1667
    %1798 = vmatprep.subr.bf16.mxu0 %v1671
    %1799 = vmatpush1.bf16.msra.mxu0 %v1670
    %1800 = vmatprep.subr.bf16.mxu0 %v1673
    %1801 = vmatpush1.bf16.msra.mxu0 %v1672
    %1802 = vmatprep.subr.bf16.mxu0 %v1675
    %1803 = vmatpush1.bf16.msra.mxu0 %v1674
    %1804 = vmatprep.subr.bf16.mxu0 %v1677
    %1805 = vmatpush1.bf16.msra.mxu0 %v1676
    %1806 = vmatprep.subr.bf16.mxu0 %v1679
    %1807 = vmatpush1.bf16.msra.mxu0 %v1678
    %1808 = vmatprep.subr.bf16.mxu0 %v1681
    %1809 = vmatpush1.bf16.msra.mxu0 %v1680
    %1810 = vmatprep.subr.bf16.mxu0 %v1683
    %1811 = vmatpush1.bf16.msra.mxu0 %v1682
    %1812 = vmatprep.subr.bf16.mxu0 %v1685
    %1813 = vmatpush1.bf16.msra.mxu0 %v1684
    %1814 = vmatprep.subr.bf16.mxu0 %v1687
    %1815 = vmatpush1.bf16.msra.mxu0 %v1686
    %1816 = vmatprep.subr.bf16.mxu0 %v1689
    %1817 = vmatpush1.bf16.msra.mxu0 %v1688
    %1818 = vmatprep.subr.bf16.mxu0 %v1691
    %1819 = vmatpush1.bf16.msra.mxu0 %v1690
    %1820 = vmatprep.subr.bf16.mxu0 %v1693
    %1821 = vmatpush1.bf16.msra.mxu0 %v1692
    %1822 = vmatprep.subr.bf16.mxu0 %v1695
    %1823 = vmatpush1.bf16.msra.mxu0 %v1694
    %1824 = vmatprep.subr.bf16.mxu0 %v1697
    %1825 = vmatpush1.bf16.msra.mxu0 %v1696
    %1826 = vmatprep.subr.bf16.mxu0 %v1699
    %1827 = vmatpush1.bf16.msra.mxu0 %v1698
    %1828 = vmatprep.subr.bf16.mxu0 %v1701
    %1829 = vmatpush1.bf16.msra.mxu0 %v1700
    %1830 = vmatprep.mubr.bf16.mxu0 %v1411
    %1831 = vmatmul.mubr.bf16.gmra.mrb[0].mxu0 %v1410
    %v1832 = vpop.f32.mrb[0].mxu0
    %v1833 = vadd.f32 0.0, %v1832
    %v1834 = vpop.f32.mrb[0].mxu0
    %v1835 = vadd.f32 0.0, %v1834
    %v1836 = vpop.f32.mrb[0].mxu0
    %v1837 = vpop.f32.mrb[0].mxu0
    %1838 = vdwg.mxu0
    %1839 = vmatprep.subr.bf16.mxu0 %v1703
    %1840 = vmatpush1.bf16.msra.mxu0 %v1702
    %1841 = vmatprep.subr.bf16.mxu0 %v1705
    %1842 = vmatpush1.bf16.msra.mxu0 %v1704
    %1843 = vmatprep.subr.bf16.mxu0 %v1707
    %1844 = vmatpush1.bf16.msra.mxu0 %v1706
    %1845 = vmatprep.subr.bf16.mxu0 %v1709
    %1846 = vmatpush1.bf16.msra.mxu0 %v1708
    %1847 = vmatprep.subr.bf16.mxu0 %v1711
    %1848 = vmatpush1.bf16.msra.mxu0 %v1710
    %1849 = vmatprep.subr.bf16.mxu0 %v1713
    %1850 = vmatpush1.bf16.msra.mxu0 %v1712
    %1851 = vmatprep.subr.bf16.mxu0 %v1715
    %1852 = vmatpush1.bf16.msra.mxu0 %v1714
    %1853 = vmatprep.subr.bf16.mxu0 %v1717
    %1854 = vmatpush1.bf16.msra.mxu0 %v1716
    %1855 = vmatprep.subr.bf16.mxu0 %v1719
    %1856 = vmatpush1.bf16.msra.mxu0 %v1718
    %1857 = vmatprep.subr.bf16.mxu0 %v1721
    %1858 = vmatpush1.bf16.msra.mxu0 %v1720
    %1859 = vmatprep.subr.bf16.mxu0 %v1723
    %1860 = vmatpush1.bf16.msra.mxu0 %v1722
    %1861 = vmatprep.subr.bf16.mxu0 %v1725
    %1862 = vmatpush1.bf16.msra.mxu0 %v1724
    %1863 = vmatprep.subr.bf16.mxu0 %v1727
    %1864 = vmatpush1.bf16.msra.mxu0 %v1726
    %1865 = vmatprep.subr.bf16.mxu0 %v1729
    %1866 = vmatpush1.bf16.msra.mxu0 %v1728
    %1867 = vmatprep.subr.bf16.mxu0 %v1731
    %1868 = vmatpush1.bf16.msra.mxu0 %v1730
    %1869 = vmatprep.subr.bf16.mxu0 %v1733
    %1870 = vmatpush1.bf16.msra.mxu0 %v1732
    %1871 = vmatprep.mubr.bf16.mxu0 %v1413
    %1872 = vmatmul.mubr.bf16.gmra.mrb[0].mxu0 %v1412
    %v1873 = vpop.f32.mrb[0].mxu0
    %v1874 = vadd.f32 %v1833, %v1873
    %v1875 = vpop.f32.mrb[0].mxu0
    %v1876 = vadd.f32 %v1835, %v1875
    %v1877 = vpop.f32.mrb[0].mxu0
    %v1878 = vpop.f32.mrb[0].mxu0
    %1879 = vdwg.mxu0
    %s1880 = sld [smem:[#allocation10]]
    %v1881 = vstv %s1880
    %v1882 = vmul.f32 %v1874, %v1881
    %v1883 = vmul.f32 %v1876, %v1881
    %s1884 = sld [smem:[#allocation10 + $0x1]]
    %v1885 = vstv %s1884
    %v1886 = vadd.f32 %v1882, %v1885
    %v1887 = vadd.f32 %v1883, %v1885
    %v1888 = vxor.u32 %v1886, 2147483648
    %v1889 = vxor.u32 %v1887, 2147483648
    %v1890 = vmul.f32 %v1888, 1.442695
    %v1891 = vpow.pop %v1890
    %v1892 = vmul.f32 %v1889, 1.442695
    %v1893 = vpow.pop %v1892
    %v1894 = vadd.f32 %v1891, 1.0
    %v1895 = vadd.f32 %v1893, 1.0
    %v1896 = vrcp.pop %v1894
    %v1897 = vmul.f32 1.0, %v1896
    %v1898 = vrcp.pop %v1895
    %v1899 = vmul.f32 1.0, %v1898
    %1900 = vst [vmem:[#allocation3] sm:$0xff] %v1897
    %1901 = vst [vmem:[#allocation3 + $0x8] sm:$0xff] %v1899
    loop: start=0, step=1, limit=2
    $region56: #{tpu_custom_call.1} parent=1 // loop_pre_header
      _
    $region57: #{tpu_custom_call.1} parent=1 // loop_header
      %s1903 = sphi 0, %s1907
      %p1904 = scmp.ge.s32.totalorder %s1903, 2
    $region58: #{tpu_custom_call.1} parent=1 // loop_header_branch
      %1906 = sbr.rel (%p1904) target = $region62
    $region59: #{tpu_custom_call.1} parent=1 // loop_body
      %s1908 = smul.u32 %s1903, 128
      %s1909 = sshra.s32 %s1908, 7
      %s1910 = sand.u32 %s1908, 127
      %s1911 = smul.addr %s1909, 8
      %s1912 = scalar_lea.vmem [#allocation4], %s1911
      %v1913 = vld [vmem:[%s1912] sm:$0xff]
      %v1914 = vld [vmem:[%s1912 + $0x10] sm:$0xff]
      %v1915 = vld [vmem:[%s1912 + $0x20] sm:$0xff]
      %v1916 = vld [vmem:[%s1912 + $0x30] sm:$0xff]
      %v1917 = vld [vmem:[%s1912 + $0x40] sm:$0xff]
      %v1918 = vld [vmem:[%s1912 + $0x50] sm:$0xff]
      %v1919 = vld [vmem:[%s1912 + $0x60] sm:$0xff]
      %v1920 = vld [vmem:[%s1912 + $0x70] sm:$0xff]
      %v1921 = vld [vmem:[%s1912 + $0x80] sm:$0xff]
      %v1922 = vld [vmem:[%s1912 + $0x90] sm:$0xff]
      %v1923 = vld [vmem:[%s1912 + $0xa0] sm:$0xff]
      %v1924 = vld [vmem:[%s1912 + $0xb0] sm:$0xff]
      %v1925 = vld [vmem:[%s1912 + $0xc0] sm:$0xff]
      %v1926 = vld [vmem:[%s1912 + $0xd0] sm:$0xff]
      %v1927 = vld [vmem:[%s1912 + $0xe0] sm:$0xff]
      %v1928 = vld [vmem:[%s1912 + $0xf0] sm:$0xff]
      %v1929 = vld [vmem:[%s1912 + $0x100] sm:$0xff]
      %v1930 = vld [vmem:[%s1912 + $0x110] sm:$0xff]
      %v1931 = vld [vmem:[%s1912 + $0x120] sm:$0xff]
      %v1932 = vld [vmem:[%s1912 + $0x130] sm:$0xff]
      %v1933 = vld [vmem:[%s1912 + $0x140] sm:$0xff]
      %v1934 = vld [vmem:[%s1912 + $0x150] sm:$0xff]
      %v1935 = vld [vmem:[%s1912 + $0x160] sm:$0xff]
      %v1936 = vld [vmem:[%s1912 + $0x170] sm:$0xff]
      %v1937 = vld [vmem:[%s1912 + $0x180] sm:$0xff]
      %v1938 = vld [vmem:[%s1912 + $0x190] sm:$0xff]
      %v1939 = vld [vmem:[%s1912 + $0x1a0] sm:$0xff]
      %v1940 = vld [vmem:[%s1912 + $0x1b0] sm:$0xff]
      %v1941 = vld [vmem:[%s1912 + $0x1c0] sm:$0xff]
      %v1942 = vld [vmem:[%s1912 + $0x1d0] sm:$0xff]
      %v1943 = vld [vmem:[%s1912 + $0x1e0] sm:$0xff]
      %v1944 = vld [vmem:[%s1912 + $0x1f0] sm:$0xff]
      %s1945 = smul.addr %s1909, 8
      %s1946 = scalar_lea.vmem [#allocation3], %s1945
      %v1947 = vld [vmem:[%s1946] sm:$0xff]
      %v1949 = vcombine.high %v1947, %v1947
      %v1951 = vunpack.c.l.s4 1966171168
      %v1952 = vunpack.c.0.s8 %v1951
      %v1953 = vlaneseq
      %v1954 = vshrl.u32 %v1953, 7
      %v1955 = vsub.s32 %v1952, %v1954
      %v1956 = vrot.slane %v1947, %v1955
      %v1958 = vunpack.c.l.s4 1966171168
      %v1959 = vunpack.c.0.s8 %v1958
      %v1960 = vlaneseq
      %v1961 = vshrl.u32 %v1960, 7
      %v1962 = vsub.s32 %v1959, %v1961
      %v1963 = vrot.slane %v1949, %v1962
      %v1964 = vcombine.high %v1956, %v1956
      %v1965 = vcombine.high %v1963, %v1963
      %v1967 = vunpack.c.l.s4 1966171168
      %v1968 = vunpack.c.0.s8 %v1967
      %v1969 = vlaneseq
      %v1970 = vshrl.u32 %v1969, 7
      %v1971 = vsub.s32 %v1968, %v1970
      %v1972 = vrot.slane %v1956, %v1971
      %v1974 = vunpack.c.l.s4 1966171168
      %v1975 = vunpack.c.0.s8 %v1974
      %v1976 = vlaneseq
      %v1977 = vshrl.u32 %v1976, 7
      %v1978 = vsub.s32 %v1975, %v1977
      %v1979 = vrot.slane %v1963, %v1978
      %v1981 = vunpack.c.l.s4 1966171168
      %v1982 = vunpack.c.0.s8 %v1981
      %v1983 = vlaneseq
      %v1984 = vshrl.u32 %v1983, 7
      %v1985 = vsub.s32 %v1982, %v1984
      %v1986 = vrot.slane %v1964, %v1985
      %v1988 = vunpack.c.l.s4 1966171168
      %v1989 = vunpack.c.0.s8 %v1988
      %v1990 = vlaneseq
      %v1991 = vshrl.u32 %v1990, 7
      %v1992 = vsub.s32 %v1989, %v1991
      %v1993 = vrot.slane %v1965, %v1992
      %v1994 = vcombine.high %v1972, %v1972
      %v1995 = vcombine.high %v1979, %v1979
      %v1996 = vcombine.high %v1986, %v1986
      %v1997 = vcombine.high %v1993, %v1993
      %v1998 = vmul.f32 %v1913, %v992
      %v1999 = vmul.f32 %v1914, %v996
      %v2000 = vmul.f32 %v1915, %v1000
      %v2001 = vmul.f32 %v1916, %v1004
      %v2002 = vmul.f32 %v1917, %v1011
      %v2003 = vmul.f32 %v1918, %v1015
      %v2004 = vmul.f32 %v1919, %v1019
      %v2005 = vmul.f32 %v1920, %v1023
      %v2006 = vmul.f32 %v1921, %v1030
      %v2007 = vmul.f32 %v1922, %v1034
      %v2008 = vmul.f32 %v1923, %v1038
      %v2009 = vmul.f32 %v1924, %v1042
      %v2010 = vmul.f32 %v1925, %v1049
      %v2011 = vmul.f32 %v1926, %v1053
      %v2012 = vmul.f32 %v1927, %v1057
      %v2013 = vmul.f32 %v1928, %v1061
      %v2014 = vmul.f32 %v1929, %v1068
      %v2015 = vmul.f32 %v1930, %v1072
      %v2016 = vmul.f32 %v1931, %v1076
      %v2017 = vmul.f32 %v1932, %v1080
      %v2018 = vmul.f32 %v1933, %v1087
      %v2019 = vmul.f32 %v1934, %v1091
      %v2020 = vmul.f32 %v1935, %v1095
      %v2021 = vmul.f32 %v1936, %v1099
      %v2022 = vmul.f32 %v1937, %v1106
      %v2023 = vmul.f32 %v1938, %v1110
      %v2024 = vmul.f32 %v1939, %v1114
      %v2025 = vmul.f32 %v1940, %v1118
      %v2026 = vmul.f32 %v1941, %v1125
      %v2027 = vmul.f32 %v1942, %v1129
      %v2028 = vmul.f32 %v1943, %v1133
      %v2029 = vmul.f32 %v1944, %v1137
      %v2030 = vlaneseq
      %v2031 = vshrl.u32 %v2030, 7
      %v2032 = vsub.s32 0, %v2031
      %v2033 = vrot.slane %v1972, %v2032
      %v2034 = vlaneseq
      %v2035 = vshrl.u32 %v2034, 7
      %v2036 = vsub.s32 0, %v2035
      %v2037 = vrot.slane %v1986, %v2036
      %v2038 = vlaneseq
      %v2039 = vshrl.u32 %v2038, 7
      %v2040 = vsub.s32 0, %v2039
      %v2041 = vrot.slane %v1994, %v2040
      %v2042 = vlaneseq
      %v2043 = vshrl.u32 %v2042, 7
      %v2044 = vsub.s32 0, %v2043
      %v2045 = vrot.slane %v1996, %v2044
      %v2046 = vlaneseq
      %v2047 = vshrl.u32 %v2046, 7
      %v2048 = vsub.s32 0, %v2047
      %v2049 = vrot.slane %v1979, %v2048
      %v2050 = vlaneseq
      %v2051 = vshrl.u32 %v2050, 7
      %v2052 = vsub.s32 0, %v2051
      %v2053 = vrot.slane %v1993, %v2052
      %v2054 = vlaneseq
      %v2055 = vshrl.u32 %v2054, 7
      %v2056 = vsub.s32 0, %v2055
      %v2057 = vrot.slane %v1995, %v2056
      %v2058 = vlaneseq
      %v2059 = vshrl.u32 %v2058, 7
      %v2060 = vsub.s32 0, %v2059
      %v2061 = vrot.slane %v1997, %v2060
      %v2070 = vmul.f32 %v1998, %v2033
      %v2071 = vmul.f32 %v1999, %v2033
      %v2072 = vmul.f32 %v2000, %v2033
      %v2073 = vmul.f32 %v2001, %v2033
      %v2074 = vmul.f32 %v2002, %v2037
      %v2075 = vmul.f32 %v2003, %v2037
      %v2076 = vmul.f32 %v2004, %v2037
      %v2077 = vmul.f32 %v2005, %v2037
      %v2078 = vmul.f32 %v2006, %v2041
      %v2079 = vmul.f32 %v2007, %v2041
      %v2080 = vmul.f32 %v2008, %v2041
      %v2081 = vmul.f32 %v2009, %v2041
      %v2082 = vmul.f32 %v2010, %v2045
      %v2083 = vmul.f32 %v2011, %v2045
      %v2084 = vmul.f32 %v2012, %v2045
      %v2085 = vmul.f32 %v2013, %v2045
      %v2086 = vmul.f32 %v2014, %v2049
      %v2087 = vmul.f32 %v2015, %v2049
      %v2088 = vmul.f32 %v2016, %v2049
      %v2089 = vmul.f32 %v2017, %v2049
      %v2090 = vmul.f32 %v2018, %v2053
      %v2091 = vmul.f32 %v2019, %v2053
      %v2092 = vmul.f32 %v2020, %v2053
      %v2093 = vmul.f32 %v2021, %v2053
      %v2094 = vmul.f32 %v2022, %v2057
      %v2095 = vmul.f32 %v2023, %v2057
      %v2096 = vmul.f32 %v2024, %v2057
      %v2097 = vmul.f32 %v2025, %v2057
      %v2098 = vmul.f32 %v2026, %v2061
      %v2099 = vmul.f32 %v2027, %v2061
      %v2100 = vmul.f32 %v2028, %v2061
      %v2101 = vmul.f32 %v2029, %v2061
      %s2102 = smul.addr %s1909, 8
      %s2103 = scalar_lea.vmem [#allocation11], %s2102
      %2104 = vst [vmem:[%s2103] sm:$0xff] %v2070
      %2105 = vst [vmem:[%s2103 + $0x10] sm:$0xff] %v2071
      %2106 = vst [vmem:[%s2103 + $0x20] sm:$0xff] %v2072
      %2107 = vst [vmem:[%s2103 + $0x30] sm:$0xff] %v2073
      %2108 = vst [vmem:[%s2103 + $0x40] sm:$0xff] %v2074
      %2109 = vst [vmem:[%s2103 + $0x50] sm:$0xff] %v2075
      %2110 = vst [vmem:[%s2103 + $0x60] sm:$0xff] %v2076
      %2111 = vst [vmem:[%s2103 + $0x70] sm:$0xff] %v2077
      %2112 = vst [vmem:[%s2103 + $0x80] sm:$0xff] %v2078
      %2113 = vst [vmem:[%s2103 + $0x90] sm:$0xff] %v2079
      %2114 = vst [vmem:[%s2103 + $0xa0] sm:$0xff] %v2080
      %2115 = vst [vmem:[%s2103 + $0xb0] sm:$0xff] %v2081
      %2116 = vst [vmem:[%s2103 + $0xc0] sm:$0xff] %v2082
      %2117 = vst [vmem:[%s2103 + $0xd0] sm:$0xff] %v2083
      %2118 = vst [vmem:[%s2103 + $0xe0] sm:$0xff] %v2084
      %2119 = vst [vmem:[%s2103 + $0xf0] sm:$0xff] %v2085
      %2120 = vst [vmem:[%s2103 + $0x100] sm:$0xff] %v2086
      %2121 = vst [vmem:[%s2103 + $0x110] sm:$0xff] %v2087
      %2122 = vst [vmem:[%s2103 + $0x120] sm:$0xff] %v2088
      %2123 = vst [vmem:[%s2103 + $0x130] sm:$0xff] %v2089
      %2124 = vst [vmem:[%s2103 + $0x140] sm:$0xff] %v2090
      %2125 = vst [vmem:[%s2103 + $0x150] sm:$0xff] %v2091
      %2126 = vst [vmem:[%s2103 + $0x160] sm:$0xff] %v2092
      %2127 = vst [vmem:[%s2103 + $0x170] sm:$0xff] %v2093
      %2128 = vst [vmem:[%s2103 + $0x180] sm:$0xff] %v2094
      %2129 = vst [vmem:[%s2103 + $0x190] sm:$0xff] %v2095
      %2130 = vst [vmem:[%s2103 + $0x1a0] sm:$0xff] %v2096
      %2131 = vst [vmem:[%s2103 + $0x1b0] sm:$0xff] %v2097
      %2132 = vst [vmem:[%s2103 + $0x1c0] sm:$0xff] %v2098
      %2133 = vst [vmem:[%s2103 + $0x1d0] sm:$0xff] %v2099
      %2134 = vst [vmem:[%s2103 + $0x1e0] sm:$0xff] %v2100
      %2135 = vst [vmem:[%s2103 + $0x1f0] sm:$0xff] %v2101
    $region60: #{tpu_custom_call.1} parent=1 // loop_footer
      %s1907 = sadd.s32 1, %s1903
    $region61: #{tpu_custom_call.1} parent=1 // loop_footer_branch
      %1902 = sbr.rel target = $region57
    $region62: #{tpu_custom_call.1} parent=1 // loop_exit
      _
    // Predicated region
    $region63: #{tpu_custom_call.1} parent=1 // pred_check
      _
    $region64: #{tpu_custom_call.1} parent=1 // pred_check_branch
      %2137 = sbr.rel (0) target = $region66
    $region65: #{tpu_custom_call.1} parent=1 // pred_region
      %s2139 = ssub.s32 8192, 8192
      %2140 = vsyncadd [#allocation6], %s2139
      %s2141 = sshll.u32 [#allocation11], 4
      %s2142 = int_to_ptr.vmem [resolvable:$true] %s2141
      %2147 = dma.vmem_to_hbm [thread:$0]  %s2142, 8192, %s7, [#allocation6], 256, 256, 16
    $region66: #{tpu_custom_call.1} parent=1 // pred_fallthru
      _
    // Predicated region
    $region67: #{tpu_custom_call.1} parent=1 // pred_check
      _
    $region68: #{tpu_custom_call.1} parent=1 // pred_check_branch
      %2149 = sbr.rel (0) target = $region70
    $region69: #{tpu_custom_call.1} parent=1 // pred_region
      %2150 = dma.done [#allocation6], 8192
    $region70: #{tpu_custom_call.1} parent=1 // pred_fallthru
      _
    %2151 = vsyncpa [#allocation5], 1
    %2152 = vsyncpa [#allocation9], 1
    %2153 = vsyncpa [#allocation6], 1
    %2154 = vsyncpa [#allocation7], 1

// kernel: tpu_custom_call.1
$region0: #{tpu_custom_call.1}
  #allocation0 [shape = 'u32[]', space=smem, size = 0x4, offset = 0x4, fixed_abs, tag = 'smem constant byte address 0x4 - core index']
  #allocation1 [shape = 'u32[144,128]{1,0:T(1,128)}', space=vmem, size = 0x12000, scoped, tag = 'internal scratch']
  #allocation2 [shape = 'f32[8,512]{1,0:T(8,128)}', space=vmem, size = 0x4000, scoped, tag = 'scratch operand']
  #allocation3 [shape = 'f32[8,256]{1,0:T(8,128)}', space=vmem, size = 0x2000, scoped, tag = 'scratch operand']
  %s0 = inlined_call_operand.hbm [shape: f32[8,32,256], index: 0, kind: input, shape index: {}]
  %s1 = inlined_call_operand.vmem [shape: f32[32,8], index: 1, kind: input, shape index: {}]
  %s2 = inlined_call_operand.vmem [shape: f32[1,8], index: 2, kind: input, shape index: {}]
  %s3 = inlined_call_operand.vmem [shape: f32[8,32], index: 3, kind: input, shape index: {}]
  %s4 = inlined_call_operand.vmem [shape: f32[1,32], index: 4, kind: input, shape index: {}]
  %s5 = inlined_call_operand.hbm [shape: bf16[512,256], index: 5, kind: input, shape index: {}]
  %s6 = inlined_call_operand.vmem [shape: f32[2], index: 6, kind: input, shape index: {}]
  %s7 = inlined_call_operand.hbm [shape: f32[8,32,256], index: 7, kind: output, shape index: {}]
  %s8 = sld [smem:[#allocation0]]
  $region71: #{tpu_custom_call.1} parent=0
    _
  %s10 = ssub.s32 1, %s8
  %s11 = scalar_select 0, %s10, %s8
  $region1: #{tpu_custom_call.1} parent=0
    #allocation4 [shape = 'u8[262144]{0}', space=vmem, size = 0x40000, scoped, tag = 'input window, operand 0, single buffered']
    #allocation5 [shape = 's32[1]{0}', space=sflag, size = 0x4, scoped, tag = 'scoped memory for tpu_custom_call.1']
    #allocation6 [shape = 's32[1]{0}', space=sflag, size = 0x4, scoped, tag = 'scoped memory for tpu_custom_call.1']
    #allocation7 [shape = 's32[1]{0}', space=sflag, size = 0x4, scoped, tag = 'scoped memory for tpu_custom_call.1']
    #allocation8 [shape = 'u8[262144]{0}', space=vmem, size = 0x40000, scoped, tag = 'input window, operand 5, single buffered']
    #allocation9 [shape = 's32[1]{0}', space=sflag, size = 0x4, scoped, tag = 'scoped memory for tpu_custom_call.1']
    #allocation10 [shape = 'u8[512]{0}', space=smem, size = 0x200, scoped, tag = 'input window, operand 6, single buffered']
    #allocation11 [shape = 'u8[262144]{0}', space=vmem, size = 0x40000, scoped, tag = 'output window, operand 0, single buffered']
    %12 = vsyncpa [#allocation5], 0
    %13 = vsyncpa [#allocation9], 0
    %14 = vsyncpa [#allocation7], 0
    %15 = vsyncpa [#allocation6], 0
    // Predicated region
    $region2: #{tpu_custom_call.1} parent=1 // pred_check
      _
    $region3: #{tpu_custom_call.1} parent=1 // pred_check_branch
      %17 = sbr.rel (0) target = $region5
    $region4: #{tpu_custom_call.1} parent=1 // pred_region
      %s19 = ssub.s32 8192, 8192
      %20 = vsyncadd [#allocation5], %s19
      %s21 = sshll.u32 [#allocation4], 4
      %s22 = int_to_ptr.vmem [resolvable:$true] %s21
      %27 = dma.hbm_to_vmem [thread:$0]  %s0, 8192, %s22, [#allocation5], 256, 256, 16
    $region5: #{tpu_custom_call.1} parent=1 // pred_fallthru
      _
    // Predicated region
    $region6: #{tpu_custom_call.1} parent=1 // pred_check
      _
    $region7: #{tpu_custom_call.1} parent=1 // pred_check_branch
      %29 = sbr.rel (0) target = $region9
    $region8: #{tpu_custom_call.1} parent=1 // pred_region
      _
    $region9: #{tpu_custom_call.1} parent=1 // pred_fallthru
      _
    // Predicated region
    $region10: #{tpu_custom_call.1} parent=1 // pred_check
      _
    $region11: #{tpu_custom_call.1} parent=1 // pred_check_branch
      %31 = sbr.rel (0) target = $region13
    $region12: #{tpu_custom_call.1} parent=1 // pred_region
      _
    $region13: #{tpu_custom_call.1} parent=1 // pred_fallthru
      _
    // Predicated region
    $region14: #{tpu_custom_call.1} parent=1 // pred_check
      _
    $region15: #{tpu_custom_call.1} parent=1 // pred_check_branch
      %33 = sbr.rel (0) target = $region17
    $region16: #{tpu_custom_call.1} parent=1 // pred_region
      _
    $region17: #{tpu_custom_call.1} parent=1 // pred_fallthru
      _
    // Predicated region
    $region18: #{tpu_custom_call.1} parent=1 // pred_check
      _
    $region19: #{tpu_custom_call.1} parent=1 // pred_check_branch
      %35 = sbr.rel (0) target = $region21
    $region20: #{tpu_custom_call.1} parent=1 // pred_region
      _
    $region21: #{tpu_custom_call.1} parent=1 // pred_fallthru
      _
    // Predicated region
    $region22: #{tpu_custom_call.1} parent=1 // pred_check
      _
    $region23: #{tpu_custom_call.1} parent=1 // pred_check_branch
      %37 = sbr.rel (0) target = $region25
    $region24: #{tpu_custom_call.1} parent=1 // pred_region
      %s39 = ssub.s32 8192, 8192
      %40 = vsyncadd [#allocation9], %s39
      %s41 = sshll.u32 [#allocation8], 4
      %s42 = int_to_ptr.vmem [resolvable:$true] %s41
      %47 = dma.hbm_to_vmem [thread:$0]  %s5, 8192, %s42, [#allocation9], 128, 128, 8
    $region25: #{tpu_custom_call.1} parent=1 // pred_fallthru
      _
    // Predicated region
    $region26: #{tpu_custom_call.1} parent=1 // pred_check
      _
    $region27: #{tpu_custom_call.1} parent=1 // pred_check_branch
      %49 = sbr.rel (0) target = $region29
    $region28: #{tpu_custom_call.1} parent=1 // pred_region
      %s51 = ssub.s32 16, 16
      %52 = vsyncadd [#allocation7], %s51
      %s54 = sshll.u32 %s6, 4
      %s55 = int_to_ptr.vmem [resolvable:$true] %s54
      %57 = dma.vmem_to_smem %s55, 16, [#allocation10], [#allocation7]
    $region29: #{tpu_custom_call.1} parent=1 // pred_fallthru
      _
    // Predicated region
    $region30: #{tpu_custom_call.1} parent=1 // pred_check
      _
    $region31: #{tpu_custom_call.1} parent=1 // pred_check_branch
      %59 = sbr.rel (0) target = $region33
    $region32: #{tpu_custom_call.1} parent=1 // pred_region
      %60 = dma.done [#allocation5], 8192
    $region33: #{tpu_custom_call.1} parent=1 // pred_fallthru
      _
    // Predicated region
    $region34: #{tpu_custom_call.1} parent=1 // pred_check
      _
    $region35: #{tpu_custom_call.1} parent=1 // pred_check_branch
      %62 = sbr.rel (0) target = $region37
    $region36: #{tpu_custom_call.1} parent=1 // pred_region
      %63 = dma.done [#allocation9], 8192
    $region37: #{tpu_custom_call.1} parent=1 // pred_fallthru
      _
    // Predicated region
    $region38: #{tpu_custom_call.1} parent=1 // pred_check
      _
    $region39: #{tpu_custom_call.1} parent=1 // pred_check_branch
      %65 = sbr.rel (0) target = $region41
    $region40: #{tpu_custom_call.1} parent=1 // pred_region
      %66 = dma.done [#allocation7], 16
    $region41: #{tpu_custom_call.1} parent=1 // pred_fallthru
      _
    %67 = sfence
    loop: start=0, step=1, limit=2
    $region42: #{tpu_custom_call.1} parent=1 // loop_pre_header
      _
    $region43: #{tpu_custom_call.1} parent=1 // loop_header
      %s69 = sphi 0, %s73
      %p70 = scmp.ge.s32.totalorder %s69, 2
      %v74 = vphi 0.0, %v239
      %v75 = vphi 0.0, %v240
      %v76 = vphi 0.0, %v241
      %v77 = vphi 0.0, %v242
      %v78 = vphi 0.0, %v243
      %v79 = vphi 0.0, %v244
      %v80 = vphi 0.0, %v245
      %v81 = vphi 0.0, %v246
      %v82 = vphi 0.0, %v247
      %v83 = vphi 0.0, %v248
      %v84 = vphi 0.0, %v249
      %v85 = vphi 0.0, %v250
      %v86 = vphi 0.0, %v251
      %v87 = vphi 0.0, %v252
      %v88 = vphi 0.0, %v253
      %v89 = vphi 0.0, %v254
      %v90 = vphi 0.0, %v255
      %v91 = vphi 0.0, %v256
      %v92 = vphi 0.0, %v257
      %v93 = vphi 0.0, %v258
      %v94 = vphi 0.0, %v259
      %v95 = vphi 0.0, %v260
      %v96 = vphi 0.0, %v261
      %v97 = vphi 0.0, %v262
      %v98 = vphi 0.0, %v263
      %v99 = vphi 0.0, %v264
      %v100 = vphi 0.0, %v265
      %v101 = vphi 0.0, %v266
      %v102 = vphi 0.0, %v267
      %v103 = vphi 0.0, %v268
      %v104 = vphi 0.0, %v269
      %v105 = vphi 0.0, %v270
      %v106 = vphi -inf, %v335
      %v107 = vphi -inf, %v336
      %v108 = vphi -inf, %v337
      %v109 = vphi -inf, %v338
      %v110 = vphi -inf, %v339
      %v111 = vphi -inf, %v340
      %v112 = vphi -inf, %v341
      %v113 = vphi -inf, %v342
      %v114 = vphi -inf, %v343
      %v115 = vphi -inf, %v344
      %v116 = vphi -inf, %v345
      %v117 = vphi -inf, %v346
      %v118 = vphi -inf, %v347
      %v119 = vphi -inf, %v348
      %v120 = vphi -inf, %v349
      %v121 = vphi -inf, %v350
      %v122 = vphi -inf, %v351
      %v123 = vphi -inf, %v352
      %v124 = vphi -inf, %v353
      %v125 = vphi -inf, %v354
      %v126 = vphi -inf, %v355
      %v127 = vphi -inf, %v356
      %v128 = vphi -inf, %v357
      %v129 = vphi -inf, %v358
      %v130 = vphi -inf, %v359
      %v131 = vphi -inf, %v360
      %v132 = vphi -inf, %v361
      %v133 = vphi -inf, %v362
      %v134 = vphi -inf, %v363
      %v135 = vphi -inf, %v364
      %v136 = vphi -inf, %v365
      %v137 = vphi -inf, %v366
    $region44: #{tpu_custom_call.1} parent=1 // loop_header_branch
      %72 = sbr.rel (%p70) target = $region48
    $region45: #{tpu_custom_call.1} parent=1 // loop_body
      %s138 = smul.u32 %s69, 128
      %s139 = sshra.s32 %s138, 7
      %s140 = sand.u32 %s138, 127
      %s141 = smul.addr %s139, 8
      %s142 = scalar_lea.vmem [#allocation4], %s141
      %v143 = vld [vmem:[%s142] sm:$0xff]
      %v144 = vld [vmem:[%s142 + $0x10] sm:$0xff]
      %v145 = vld [vmem:[%s142 + $0x20] sm:$0xff]
      %v146 = vld [vmem:[%s142 + $0x30] sm:$0xff]
      %v147 = vld [vmem:[%s142 + $0x40] sm:$0xff]
      %v148 = vld [vmem:[%s142 + $0x50] sm:$0xff]
      %v149 = vld [vmem:[%s142 + $0x60] sm:$0xff]
      %v150 = vld [vmem:[%s142 + $0x70] sm:$0xff]
      %v151 = vld [vmem:[%s142 + $0x80] sm:$0xff]
      %v152 = vld [vmem:[%s142 + $0x90] sm:$0xff]
      %v153 = vld [vmem:[%s142 + $0xa0] sm:$0xff]
      %v154 = vld [vmem:[%s142 + $0xb0] sm:$0xff]
      %v155 = vld [vmem:[%s142 + $0xc0] sm:$0xff]
      %v156 = vld [vmem:[%s142 + $0xd0] sm:$0xff]
      %v157 = vld [vmem:[%s142 + $0xe0] sm:$0xff]
      %v158 = vld [vmem:[%s142 + $0xf0] sm:$0xff]
      %v159 = vld [vmem:[%s142 + $0x100] sm:$0xff]
      %v160 = vld [vmem:[%s142 + $0x110] sm:$0xff]
      %v161 = vld [vmem:[%s142 + $0x120] sm:$0xff]
      %v162 = vld [vmem:[%s142 + $0x130] sm:$0xff]
      %v163 = vld [vmem:[%s142 + $0x140] sm:$0xff]
      %v164 = vld [vmem:[%s142 + $0x150] sm:$0xff]
      %v165 = vld [vmem:[%s142 + $0x160] sm:$0xff]
      %v166 = vld [vmem:[%s142 + $0x170] sm:$0xff]
      %v167 = vld [vmem:[%s142 + $0x180] sm:$0xff]
      %v168 = vld [vmem:[%s142 + $0x190] sm:$0xff]
      %v169 = vld [vmem:[%s142 + $0x1a0] sm:$0xff]
      %v170 = vld [vmem:[%s142 + $0x1b0] sm:$0xff]
      %v171 = vld [vmem:[%s142 + $0x1c0] sm:$0xff]
      %v172 = vld [vmem:[%s142 + $0x1d0] sm:$0xff]
      %v173 = vld [vmem:[%s142 + $0x1e0] sm:$0xff]
      %v174 = vld [vmem:[%s142 + $0x1f0] sm:$0xff]
      %175 = vadd.xlane.f32.xlu0 %v143
      %v176 = vpop.xlane.xlu0 %175
      %177 = vadd.xlane.f32.xlu0 %v144
      %v178 = vpop.xlane.xlu0 %177
      %179 = vadd.xlane.f32.xlu0 %v145
      %v180 = vpop.xlane.xlu0 %179
      %181 = vadd.xlane.f32.xlu0 %v146
      %v182 = vpop.xlane.xlu0 %181
      %183 = vadd.xlane.f32.xlu0 %v147
      %v184 = vpop.xlane.xlu0 %183
      %185 = vadd.xlane.f32.xlu0 %v148
      %v186 = vpop.xlane.xlu0 %185
      %187 = vadd.xlane.f32.xlu0 %v149
      %v188 = vpop.xlane.xlu0 %187
      %189 = vadd.xlane.f32.xlu0 %v150
      %v190 = vpop.xlane.xlu0 %189
      %191 = vadd.xlane.f32.xlu0 %v151
      %v192 = vpop.xlane.xlu0 %191
      %193 = vadd.xlane.f32.xlu0 %v152
      %v194 = vpop.xlane.xlu0 %193
      %195 = vadd.xlane.f32.xlu0 %v153
      %v196 = vpop.xlane.xlu0 %195
      %197 = vadd.xlane.f32.xlu0 %v154
      %v198 = vpop.xlane.xlu0 %197
      %199 = vadd.xlane.f32.xlu0 %v155
      %v200 = vpop.xlane.xlu0 %199
      %201 = vadd.xlane.f32.xlu0 %v156
      %v202 = vpop.xlane.xlu0 %201
      %203 = vadd.xlane.f32.xlu0 %v157
      %v204 = vpop.xlane.xlu0 %203
      %205 = vadd.xlane.f32.xlu0 %v158
      %v206 = vpop.xlane.xlu0 %205
      %207 = vadd.xlane.f32.xlu0 %v159
      %v208 = vpop.xlane.xlu0 %207
      %209 = vadd.xlane.f32.xlu0 %v160
      %v210 = vpop.xlane.xlu0 %209
      %211 = vadd.xlane.f32.xlu0 %v161
      %v212 = vpop.xlane.xlu0 %211
      %213 = vadd.xlane.f32.xlu0 %v162
      %v214 = vpop.xlane.xlu0 %213
      %215 = vadd.xlane.f32.xlu0 %v163
      %v216 = vpop.xlane.xlu0 %215
      %217 = vadd.xlane.f32.xlu0 %v164
      %v218 = vpop.xlane.xlu0 %217
      %219 = vadd.xlane.f32.xlu0 %v165
      %v220 = vpop.xlane.xlu0 %219
      %221 = vadd.xlane.f32.xlu0 %v166
      %v222 = vpop.xlane.xlu0 %221
      %223 = vadd.xlane.f32.xlu0 %v167
      %v224 = vpop.xlane.xlu0 %223
      %225 = vadd.xlane.f32.xlu0 %v168
      %v226 = vpop.xlane.xlu0 %225
      %227 = vadd.xlane.f32.xlu0 %v169
      %v228 = vpop.xlane.xlu0 %227
      %229 = vadd.xlane.f32.xlu0 %v170
      %v230 = vpop.xlane.xlu0 %229
      %231 = vadd.xlane.f32.xlu0 %v171
      %v232 = vpop.xlane.xlu0 %231
      %233 = vadd.xlane.f32.xlu0 %v172
      %v234 = vpop.xlane.xlu0 %233
      %235 = vadd.xlane.f32.xlu0 %v173
      %v236 = vpop.xlane.xlu0 %235
      %237 = vadd.xlane.f32.xlu0 %v174
      %v238 = vpop.xlane.xlu0 %237
      %v239 = vadd.f32 %v74, %v176
      %v240 = vadd.f32 %v75, %v178
      %v241 = vadd.f32 %v76, %v180
      %v242 = vadd.f32 %v77, %v182
      %v243 = vadd.f32 %v78, %v184
      %v244 = vadd.f32 %v79, %v186
      %v245 = vadd.f32 %v80, %v188
      %v246 = vadd.f32 %v81, %v190
      %v247 = vadd.f32 %v82, %v192
      %v248 = vadd.f32 %v83, %v194
      %v249 = vadd.f32 %v84, %v196
      %v250 = vadd.f32 %v85, %v198
      %v251 = vadd.f32 %v86, %v200
      %v252 = vadd.f32 %v87, %v202
      %v253 = vadd.f32 %v88, %v204
      %v254 = vadd.f32 %v89, %v206
      %v255 = vadd.f32 %v90, %v208
      %v256 = vadd.f32 %v91, %v210
      %v257 = vadd.f32 %v92, %v212
      %v258 = vadd.f32 %v93, %v214
      %v259 = vadd.f32 %v94, %v216
      %v260 = vadd.f32 %v95, %v218
      %v261 = vadd.f32 %v96, %v220
      %v262 = vadd.f32 %v97, %v222
      %v263 = vadd.f32 %v98, %v224
      %v264 = vadd.f32 %v99, %v226
      %v265 = vadd.f32 %v100, %v228
      %v266 = vadd.f32 %v101, %v230
      %v267 = vadd.f32 %v102, %v232
      %v268 = vadd.f32 %v103, %v234
      %v269 = vadd.f32 %v104, %v236
      %v270 = vadd.f32 %v105, %v238
      %271 = vmax.xlane.f32.xlu0 %v143
      %v272 = vpop.xlane.xlu0 %271
      %273 = vmax.xlane.f32.xlu0 %v144
      %v274 = vpop.xlane.xlu0 %273
      %275 = vmax.xlane.f32.xlu0 %v145
      %v276 = vpop.xlane.xlu0 %275
      %277 = vmax.xlane.f32.xlu0 %v146
      %v278 = vpop.xlane.xlu0 %277
      %279 = vmax.xlane.f32.xlu0 %v147
      %v280 = vpop.xlane.xlu0 %279
      %281 = vmax.xlane.f32.xlu0 %v148
      %v282 = vpop.xlane.xlu0 %281
      %283 = vmax.xlane.f32.xlu0 %v149
      %v284 = vpop.xlane.xlu0 %283
      %285 = vmax.xlane.f32.xlu0 %v150
      %v286 = vpop.xlane.xlu0 %285
      %287 = vmax.xlane.f32.xlu0 %v151
      %v288 = vpop.xlane.xlu0 %287
      %289 = vmax.xlane.f32.xlu0 %v152
      %v290 = vpop.xlane.xlu0 %289
      %291 = vmax.xlane.f32.xlu0 %v153
      %v292 = vpop.xlane.xlu0 %291
      %293 = vmax.xlane.f32.xlu0 %v154
      %v294 = vpop.xlane.xlu0 %293
      %295 = vmax.xlane.f32.xlu0 %v155
      %v296 = vpop.xlane.xlu0 %295
      %297 = vmax.xlane.f32.xlu0 %v156
      %v298 = vpop.xlane.xlu0 %297
      %299 = vmax.xlane.f32.xlu0 %v157
      %v300 = vpop.xlane.xlu0 %299
      %301 = vmax.xlane.f32.xlu0 %v158
      %v302 = vpop.xlane.xlu0 %301
      %303 = vmax.xlane.f32.xlu0 %v159
      %v304 = vpop.xlane.xlu0 %303
      %305 = vmax.xlane.f32.xlu0 %v160
      %v306 = vpop.xlane.xlu0 %305
      %307 = vmax.xlane.f32.xlu0 %v161
      %v308 = vpop.xlane.xlu0 %307
      %309 = vmax.xlane.f32.xlu0 %v162
      %v310 = vpop.xlane.xlu0 %309
      %311 = vmax.xlane.f32.xlu0 %v163
      %v312 = vpop.xlane.xlu0 %311
      %313 = vmax.xlane.f32.xlu0 %v164
      %v314 = vpop.xlane.xlu0 %313
      %315 = vmax.xlane.f32.xlu0 %v165
      %v316 = vpop.xlane.xlu0 %315
      %317 = vmax.xlane.f32.xlu0 %v166
      %v318 = vpop.xlane.xlu0 %317
      %319 = vmax.xlane.f32.xlu0 %v167
      %v320 = vpop.xlane.xlu0 %319
      %321 = vmax.xlane.f32.xlu0 %v168
      %v322 = vpop.xlane.xlu0 %321
      %323 = vmax.xlane.f32.xlu0 %v169
      %v324 = vpop.xlane.xlu0 %323
      %325 = vmax.xlane.f32.xlu0 %v170
      %v326 = vpop.xlane.xlu0 %325
      %327 = vmax.xlane.f32.xlu0 %v171
      %v328 = vpop.xlane.xlu0 %327
      %329 = vmax.xlane.f32.xlu0 %v172
      %v330 = vpop.xlane.xlu0 %329
      %331 = vmax.xlane.f32.xlu0 %v173
      %v332 = vpop.xlane.xlu0 %331
      %333 = vmax.xlane.f32.xlu0 %v174
      %v334 = vpop.xlane.xlu0 %333
      %v335 = vmax.f32 %v106, %v272
      %v336 = vmax.f32 %v107, %v274
      %v337 = vmax.f32 %v108, %v276
      %v338 = vmax.f32 %v109, %v278
      %v339 = vmax.f32 %v110, %v280
      %v340 = vmax.f32 %v111, %v282
      %v341 = vmax.f32 %v112, %v284
      %v342 = vmax.f32 %v113, %v286
      %v343 = vmax.f32 %v114, %v288
      %v344 = vmax.f32 %v115, %v290
      %v345 = vmax.f32 %v116, %v292
      %v346 = vmax.f32 %v117, %v294
      %v347 = vmax.f32 %v118, %v296
      %v348 = vmax.f32 %v119, %v298
      %v349 = vmax.f32 %v120, %v300
      %v350 = vmax.f32 %v121, %v302
      %v351 = vmax.f32 %v122, %v304
      %v352 = vmax.f32 %v123, %v306
      %v353 = vmax.f32 %v124, %v308
      %v354 = vmax.f32 %v125, %v310
      %v355 = vmax.f32 %v126, %v312
      %v356 = vmax.f32 %v127, %v314
      %v357 = vmax.f32 %v128, %v316
      %v358 = vmax.f32 %v129, %v318
      %v359 = vmax.f32 %v130, %v320
      %v360 = vmax.f32 %v131, %v322
      %v361 = vmax.f32 %v132, %v324
      %v362 = vmax.f32 %v133, %v326
      %v363 = vmax.f32 %v134, %v328
      %v364 = vmax.f32 %v135, %v330
      %v365 = vmax.f32 %v136, %v332
      %v366 = vmax.f32 %v137, %v334
    $region46: #{tpu_custom_call.1} parent=1 // loop_footer
      %s73 = sadd.s32 1, %s69
    $region47: #{tpu_custom_call.1} parent=1 // loop_footer_branch
      %68 = sbr.rel target = $region43
    $region48: #{tpu_custom_call.1} parent=1 // loop_exit
      _
    %v367 = vmul.f32 %v74, 0.00390625
    %v368 = vmul.f32 %v75, 0.00390625
    %v369 = vmul.f32 %v76, 0.00390625
    %v370 = vmul.f32 %v77, 0.00390625
    %v371 = vmul.f32 %v78, 0.00390625
    %v372 = vmul.f32 %v79, 0.00390625
    %v373 = vmul.f32 %v80, 0.00390625
    %v374 = vmul.f32 %v81, 0.00390625
    %v375 = vmul.f32 %v82, 0.00390625
    %v376 = vmul.f32 %v83, 0.00390625
    %v377 = vmul.f32 %v84, 0.00390625
    %v378 = vmul.f32 %v85, 0.00390625
    %v379 = vmul.f32 %v86, 0.00390625
    %v380 = vmul.f32 %v87, 0.00390625
    %v381 = vmul.f32 %v88, 0.00390625
    %v382 = vmul.f32 %v89, 0.00390625
    %v383 = vmul.f32 %v90, 0.00390625
    %v384 = vmul.f32 %v91, 0.00390625
    %v385 = vmul.f32 %v92, 0.00390625
    %v386 = vmul.f32 %v93, 0.00390625
    %v387 = vmul.f32 %v94, 0.00390625
    %v388 = vmul.f32 %v95, 0.00390625
    %v389 = vmul.f32 %v96, 0.00390625
    %v390 = vmul.f32 %v97, 0.00390625
    %v391 = vmul.f32 %v98, 0.00390625
    %v392 = vmul.f32 %v99, 0.00390625
    %v393 = vmul.f32 %v100, 0.00390625
    %v394 = vmul.f32 %v101, 0.00390625
    %v395 = vmul.f32 %v102, 0.00390625
    %v396 = vmul.f32 %v103, 0.00390625
    %v397 = vmul.f32 %v104, 0.00390625
    %v398 = vmul.f32 %v105, 0.00390625
    %v431 = vlaneseq
    %v432 = vand.u32 %v431, 127
    %v433 = vlaneseq
    %v434 = vshrl.u32 %v433, 7
    %v435 = vsub.s32 %v432, %v434
    %v436 = vrot.slane %v367, %v435
    %v437 = vadd.s32 %v432, 4294967288
    %v438 = vlaneseq
    %v439 = vshrl.u32 %v438, 7
    %v440 = vsub.s32 %v437, %v439
    %v441 = vrot.slane %v368, %v440
    %vm442 = vcmask 130112
    %v443 = vsel %vm442, %v441, %v436
    %v444 = vadd.s32 %v432, 4294967280
    %v445 = vlaneseq
    %v446 = vshrl.u32 %v445, 7
    %v447 = vsub.s32 %v444, %v446
    %v448 = vrot.slane %v369, %v447
    %vm449 = vcmask 195712
    %v450 = vsel %vm449, %v448, %v443
    %v451 = vadd.s32 %v432, 4294967272
    %v452 = vlaneseq
    %v453 = vshrl.u32 %v452, 7
    %v454 = vsub.s32 %v451, %v453
    %v455 = vrot.slane %v370, %v454
    %vm456 = vcmask 261312
    %v457 = vsel %vm456, %v455, %v450
    %v458 = vlaneseq
    %v459 = vshrl.u32 %v458, 7
    %v460 = vsub.s32 %v432, %v459
    %v461 = vrot.slane %v371, %v460
    %v462 = vlaneseq
    %v463 = vshrl.u32 %v462, 7
    %v464 = vsub.s32 %v437, %v463
    %v465 = vrot.slane %v372, %v464
    %v466 = vsel %vm442, %v465, %v461
    %v467 = vlaneseq
    %v468 = vshrl.u32 %v467, 7
    %v469 = vsub.s32 %v444, %v468
    %v470 = vrot.slane %v373, %v469
    %v471 = vsel %vm449, %v470, %v466
    %v472 = vlaneseq
    %v473 = vshrl.u32 %v472, 7
    %v474 = vsub.s32 %v451, %v473
    %v475 = vrot.slane %v374, %v474
    %v476 = vsel %vm456, %v475, %v471
    %v477 = vlaneseq
    %v478 = vshrl.u32 %v477, 7
    %v479 = vsub.s32 %v432, %v478
    %v480 = vrot.slane %v375, %v479
    %v481 = vlaneseq
    %v482 = vshrl.u32 %v481, 7
    %v483 = vsub.s32 %v437, %v482
    %v484 = vrot.slane %v376, %v483
    %v485 = vsel %vm442, %v484, %v480
    %v486 = vlaneseq
    %v487 = vshrl.u32 %v486, 7
    %v488 = vsub.s32 %v444, %v487
    %v489 = vrot.slane %v377, %v488
    %v490 = vsel %vm449, %v489, %v485
    %v491 = vlaneseq
    %v492 = vshrl.u32 %v491, 7
    %v493 = vsub.s32 %v451, %v492
    %v494 = vrot.slane %v378, %v493
    %v495 = vsel %vm456, %v494, %v490
    %v496 = vlaneseq
    %v497 = vshrl.u32 %v496, 7
    %v498 = vsub.s32 %v432, %v497
    %v499 = vrot.slane %v379, %v498
    %v500 = vlaneseq
    %v501 = vshrl.u32 %v500, 7
    %v502 = vsub.s32 %v437, %v501
    %v503 = vrot.slane %v380, %v502
    %v504 = vsel %vm442, %v503, %v499
    %v505 = vlaneseq
    %v506 = vshrl.u32 %v505, 7
    %v507 = vsub.s32 %v444, %v506
    %v508 = vrot.slane %v381, %v507
    %v509 = vsel %vm449, %v508, %v504
    %v510 = vlaneseq
    %v511 = vshrl.u32 %v510, 7
    %v512 = vsub.s32 %v451, %v511
    %v513 = vrot.slane %v382, %v512
    %v514 = vsel %vm456, %v513, %v509
    %v515 = vlaneseq
    %v516 = vshrl.u32 %v515, 7
    %v517 = vsub.s32 %v432, %v516
    %v518 = vrot.slane %v383, %v517
    %v519 = vlaneseq
    %v520 = vshrl.u32 %v519, 7
    %v521 = vsub.s32 %v437, %v520
    %v522 = vrot.slane %v384, %v521
    %v523 = vsel %vm442, %v522, %v518
    %v524 = vlaneseq
    %v525 = vshrl.u32 %v524, 7
    %v526 = vsub.s32 %v444, %v525
    %v527 = vrot.slane %v385, %v526
    %v528 = vsel %vm449, %v527, %v523
    %v529 = vlaneseq
    %v530 = vshrl.u32 %v529, 7
    %v531 = vsub.s32 %v451, %v530
    %v532 = vrot.slane %v386, %v531
    %v533 = vsel %vm456, %v532, %v528
    %v534 = vlaneseq
    %v535 = vshrl.u32 %v534, 7
    %v536 = vsub.s32 %v432, %v535
    %v537 = vrot.slane %v387, %v536
    %v538 = vlaneseq
    %v539 = vshrl.u32 %v538, 7
    %v540 = vsub.s32 %v437, %v539
    %v541 = vrot.slane %v388, %v540
    %v542 = vsel %vm442, %v541, %v537
    %v543 = vlaneseq
    %v544 = vshrl.u32 %v543, 7
    %v545 = vsub.s32 %v444, %v544
    %v546 = vrot.slane %v389, %v545
    %v547 = vsel %vm449, %v546, %v542
    %v548 = vlaneseq
    %v549 = vshrl.u32 %v548, 7
    %v550 = vsub.s32 %v451, %v549
    %v551 = vrot.slane %v390, %v550
    %v552 = vsel %vm456, %v551, %v547
    %v553 = vlaneseq
    %v554 = vshrl.u32 %v553, 7
    %v555 = vsub.s32 %v432, %v554
    %v556 = vrot.slane %v391, %v555
    %v557 = vlaneseq
    %v558 = vshrl.u32 %v557, 7
    %v559 = vsub.s32 %v437, %v558
    %v560 = vrot.slane %v392, %v559
    %v561 = vsel %vm442, %v560, %v556
    %v562 = vlaneseq
    %v563 = vshrl.u32 %v562, 7
    %v564 = vsub.s32 %v444, %v563
    %v565 = vrot.slane %v393, %v564
    %v566 = vsel %vm449, %v565, %v561
    %v567 = vlaneseq
    %v568 = vshrl.u32 %v567, 7
    %v569 = vsub.s32 %v451, %v568
    %v570 = vrot.slane %v394, %v569
    %v571 = vsel %vm456, %v570, %v566
    %v572 = vlaneseq
    %v573 = vshrl.u32 %v572, 7
    %v574 = vsub.s32 %v432, %v573
    %v575 = vrot.slane %v395, %v574
    %v576 = vlaneseq
    %v577 = vshrl.u32 %v576, 7
    %v578 = vsub.s32 %v437, %v577
    %v579 = vrot.slane %v396, %v578
    %v580 = vsel %vm442, %v579, %v575
    %v581 = vlaneseq
    %v582 = vshrl.u32 %v581, 7
    %v583 = vsub.s32 %v444, %v582
    %v584 = vrot.slane %v397, %v583
    %v585 = vsel %vm449, %v584, %v580
    %v586 = vlaneseq
    %v587 = vshrl.u32 %v586, 7
    %v588 = vsub.s32 %v451, %v587
    %v589 = vrot.slane %v398, %v588
    %v590 = vsel %vm456, %v589, %v585
    %vm591 = vcmask 1041409
    %v592 = vsel %vm591, %v476, %v457
    %vm593 = vcmask 1042434
    %v594 = vsel %vm593, %v495, %v592
    %vm595 = vcmask 1043459
    %v596 = vsel %vm595, %v514, %v594
    %vm597 = vcmask 1044484
    %v598 = vsel %vm597, %v533, %v596
    %vm599 = vcmask 1045509
    %v600 = vsel %vm599, %v552, %v598
    %vm601 = vcmask 1046534
    %v602 = vsel %vm601, %v571, %v600
    %vm603 = vcmask 1047559
    %v604 = vsel %vm603, %v590, %v602
    %v637 = vlaneseq
    %v638 = vshrl.u32 %v637, 7
    %v639 = vsub.s32 %v432, %v638
    %v640 = vrot.slane %v106, %v639
    %v641 = vlaneseq
    %v642 = vshrl.u32 %v641, 7
    %v643 = vsub.s32 %v437, %v642
    %v644 = vrot.slane %v107, %v643
    %v645 = vsel %vm442, %v644, %v640
    %v646 = vlaneseq
    %v647 = vshrl.u32 %v646, 7
    %v648 = vsub.s32 %v444, %v647
    %v649 = vrot.slane %v108, %v648
    %v650 = vsel %vm449, %v649, %v645
    %v651 = vlaneseq
    %v652 = vshrl.u32 %v651, 7
    %v653 = vsub.s32 %v451, %v652
    %v654 = vrot.slane %v109, %v653
    %v655 = vsel %vm456, %v654, %v650
    %v656 = vlaneseq
    %v657 = vshrl.u32 %v656, 7
    %v658 = vsub.s32 %v432, %v657
    %v659 = vrot.slane %v110, %v658
    %v660 = vlaneseq
    %v661 = vshrl.u32 %v660, 7
    %v662 = vsub.s32 %v437, %v661
    %v663 = vrot.slane %v111, %v662
    %v664 = vsel %vm442, %v663, %v659
    %v665 = vlaneseq
    %v666 = vshrl.u32 %v665, 7
    %v667 = vsub.s32 %v444, %v666
    %v668 = vrot.slane %v112, %v667
    %v669 = vsel %vm449, %v668, %v664
    %v670 = vlaneseq
    %v671 = vshrl.u32 %v670, 7
    %v672 = vsub.s32 %v451, %v671
    %v673 = vrot.slane %v113, %v672
    %v674 = vsel %vm456, %v673, %v669
    %v675 = vlaneseq
    %v676 = vshrl.u32 %v675, 7
    %v677 = vsub.s32 %v432, %v676
    %v678 = vrot.slane %v114, %v677
    %v679 = vlaneseq
    %v680 = vshrl.u32 %v679, 7
    %v681 = vsub.s32 %v437, %v680
    %v682 = vrot.slane %v115, %v681
    %v683 = vsel %vm442, %v682, %v678
    %v684 = vlaneseq
    %v685 = vshrl.u32 %v684, 7
    %v686 = vsub.s32 %v444, %v685
    %v687 = vrot.slane %v116, %v686
    %v688 = vsel %vm449, %v687, %v683
    %v689 = vlaneseq
    %v690 = vshrl.u32 %v689, 7
    %v691 = vsub.s32 %v451, %v690
    %v692 = vrot.slane %v117, %v691
    %v693 = vsel %vm456, %v692, %v688
    %v694 = vlaneseq
    %v695 = vshrl.u32 %v694, 7
    %v696 = vsub.s32 %v432, %v695
    %v697 = vrot.slane %v118, %v696
    %v698 = vlaneseq
    %v699 = vshrl.u32 %v698, 7
    %v700 = vsub.s32 %v437, %v699
    %v701 = vrot.slane %v119, %v700
    %v702 = vsel %vm442, %v701, %v697
    %v703 = vlaneseq
    %v704 = vshrl.u32 %v703, 7
    %v705 = vsub.s32 %v444, %v704
    %v706 = vrot.slane %v120, %v705
    %v707 = vsel %vm449, %v706, %v702
    %v708 = vlaneseq
    %v709 = vshrl.u32 %v708, 7
    %v710 = vsub.s32 %v451, %v709
    %v711 = vrot.slane %v121, %v710
    %v712 = vsel %vm456, %v711, %v707
    %v713 = vlaneseq
    %v714 = vshrl.u32 %v713, 7
    %v715 = vsub.s32 %v432, %v714
    %v716 = vrot.slane %v122, %v715
    %v717 = vlaneseq
    %v718 = vshrl.u32 %v717, 7
    %v719 = vsub.s32 %v437, %v718
    %v720 = vrot.slane %v123, %v719
    %v721 = vsel %vm442, %v720, %v716
    %v722 = vlaneseq
    %v723 = vshrl.u32 %v722, 7
    %v724 = vsub.s32 %v444, %v723
    %v725 = vrot.slane %v124, %v724
    %v726 = vsel %vm449, %v725, %v721
    %v727 = vlaneseq
    %v728 = vshrl.u32 %v727, 7
    %v729 = vsub.s32 %v451, %v728
    %v730 = vrot.slane %v125, %v729
    %v731 = vsel %vm456, %v730, %v726
    %v732 = vlaneseq
    %v733 = vshrl.u32 %v732, 7
    %v734 = vsub.s32 %v432, %v733
    %v735 = vrot.slane %v126, %v734
    %v736 = vlaneseq
    %v737 = vshrl.u32 %v736, 7
    %v738 = vsub.s32 %v437, %v737
    %v739 = vrot.slane %v127, %v738
    %v740 = vsel %vm442, %v739, %v735
    %v741 = vlaneseq
    %v742 = vshrl.u32 %v741, 7
    %v743 = vsub.s32 %v444, %v742
    %v744 = vrot.slane %v128, %v743
    %v745 = vsel %vm449, %v744, %v740
    %v746 = vlaneseq
    %v747 = vshrl.u32 %v746, 7
    %v748 = vsub.s32 %v451, %v747
    %v749 = vrot.slane %v129, %v748
    %v750 = vsel %vm456, %v749, %v745
    %v751 = vlaneseq
    %v752 = vshrl.u32 %v751, 7
    %v753 = vsub.s32 %v432, %v752
    %v754 = vrot.slane %v130, %v753
    %v755 = vlaneseq
    %v756 = vshrl.u32 %v755, 7
    %v757 = vsub.s32 %v437, %v756
    %v758 = vrot.slane %v131, %v757
    %v759 = vsel %vm442, %v758, %v754
    %v760 = vlaneseq
    %v761 = vshrl.u32 %v760, 7
    %v762 = vsub.s32 %v444, %v761
    %v763 = vrot.slane %v132, %v762
    %v764 = vsel %vm449, %v763, %v759
    %v765 = vlaneseq
    %v766 = vshrl.u32 %v765, 7
    %v767 = vsub.s32 %v451, %v766
    %v768 = vrot.slane %v133, %v767
    %v769 = vsel %vm456, %v768, %v764
    %v770 = vlaneseq
    %v771 = vshrl.u32 %v770, 7
    %v772 = vsub.s32 %v432, %v771
    %v773 = vrot.slane %v134, %v772
    %v774 = vlaneseq
    %v775 = vshrl.u32 %v774, 7
    %v776 = vsub.s32 %v437, %v775
    %v777 = vrot.slane %v135, %v776
    %v778 = vsel %vm442, %v777, %v773
    %v779 = vlaneseq
    %v780 = vshrl.u32 %v779, 7
    %v781 = vsub.s32 %v444, %v780
    %v782 = vrot.slane %v136, %v781
    %v783 = vsel %vm449, %v782, %v778
    %v784 = vlaneseq
    %v785 = vshrl.u32 %v784, 7
    %v786 = vsub.s32 %v451, %v785
    %v787 = vrot.slane %v137, %v786
    %v788 = vsel %vm456, %v787, %v783
    %v789 = vsel %vm591, %v674, %v655
    %v790 = vsel %vm593, %v693, %v789
    %v791 = vsel %vm595, %v712, %v790
    %v792 = vsel %vm597, %v731, %v791
    %v793 = vsel %vm599, %v750, %v792
    %v794 = vsel %vm601, %v769, %v793
    %v795 = vsel %vm603, %v788, %v794
    %v796 = vld [vmem:[%s1] sm:$0xff]
    %v797 = vld [vmem:[%s1 + $0x8] sm:$0xff]
    %v798 = vld [vmem:[%s1 + $0x10] sm:$0xff]
    %v799 = vld [vmem:[%s1 + $0x18] sm:$0xff]
    %v800 = vld [vmem:[%s2] sm:$0x1]
    %v802 = vlaneseq
    %v803 = vshrl.u32 %v802, 7
    %v804 = vsub.s32 0, %v803
    %v805 = vrot.slane %v800, %v804
    %vm807 = vcmask 261120
    %v808 = vsel %vm807, %v604, 0
    %v810 = vsel %vm807, %v795, 0
    %812 = vmatprep.subr.mxu0 0.0
    %813 = vmatpush1.msra.mxu0 %v796
    %814 = vmatprep.subr.mxu0 0.0
    %815 = vmatpush1.msra.mxu0 %v797
    %816 = vmatprep.subr.mxu0 0.0
    %817 = vmatpush1.msra.mxu0 %v798
    %818 = vmatprep.subr.mxu0 0.0
    %819 = vmatpush1.msra.mxu0 %v799
    %820 = vmatprep.subr.mxu0 0.0
    %821 = vmatpush1.msra.mxu0 0.0
    %822 = vmatprep.subr.mxu0 0.0
    %823 = vmatpush1.msra.mxu0 0.0
    %824 = vmatprep.subr.mxu0 0.0
    %825 = vmatpush1.msra.mxu0 0.0
    %826 = vmatprep.subr.mxu0 0.0
    %827 = vmatpush1.msra.mxu0 0.0
    %828 = vmatprep.subr.mxu0 0.0
    %829 = vmatpush1.msra.mxu0 0.0
    %830 = vmatprep.subr.mxu0 0.0
    %831 = vmatpush1.msra.mxu0 0.0
    %832 = vmatprep.subr.mxu0 0.0
    %833 = vmatpush1.msra.mxu0 0.0
    %834 = vmatprep.subr.mxu0 0.0
    %835 = vmatpush1.msra.mxu0 0.0
    %836 = vmatprep.subr.mxu0 0.0
    %837 = vmatpush1.msra.mxu0 0.0
    %838 = vmatprep.subr.mxu0 0.0
    %839 = vmatpush1.msra.mxu0 0.0
    %840 = vmatprep.subr.mxu0 0.0
    %841 = vmatpush1.msra.mxu0 0.0
    %842 = vmatprep.subr.mxu0 0.0
    %843 = vmatpush1.msra.mxu0 0.0
    %844 = vmatprep.subr.mxu0 0.0
    %845 = vmatpush1.msra.mxu0 0.0
    %846 = vmatprep.subr.mxu0 0.0
    %847 = vmatpush1.msra.mxu0 0.0
    %848 = vmatprep.subr.mxu0 0.0
    %849 = vmatpush1.msra.mxu0 0.0
    %850 = vmatprep.subr.mxu0 0.0
    %851 = vmatpush1.msra.mxu0 0.0
    %852 = vmatprep.subr.mxu0 0.0
    %853 = vmatpush1.msra.mxu0 0.0
    %854 = vmatprep.subr.mxu0 0.0
    %855 = vmatpush1.msra.mxu0 0.0
    %856 = vmatprep.subr.mxu0 0.0
    %857 = vmatpush1.msra.mxu0 0.0
    %858 = vmatprep.subr.mxu0 0.0
    %859 = vmatpush1.msra.mxu0 0.0
    %860 = vmatprep.subr.mxu0 0.0
    %861 = vmatpush1.msra.mxu0 0.0
    %862 = vmatprep.subr.mxu0 0.0
    %863 = vmatpush1.msra.mxu0 0.0
    %864 = vmatprep.subr.mxu0 0.0
    %865 = vmatpush1.msra.mxu0 0.0
    %866 = vmatprep.subr.mxu0 0.0
    %867 = vmatpush1.msra.mxu0 0.0
    %868 = vmatprep.subr.mxu0 0.0
    %869 = vmatpush1.msra.mxu0 0.0
    %870 = vmatprep.subr.mxu0 0.0
    %871 = vmatpush1.msra.mxu0 0.0
    %872 = vmatprep.subr.mxu0 0.0
    %873 = vmatpush1.msra.mxu0 0.0
    %874 = vmatprep.subr.mxu0 0.0
    %875 = vmatpush1.msra.mxu0 0.0
    %876 = vmatprep.mubr.f32.mxu0 0.0
    %877 = vmatmul.mubr.f32.gmra.mrb[0].mxu0 %v808
    %v878 = vpop.f32.mrb[0].mxu0
    %v879 = vadd.f32 %v805, %v878
    %v880 = vpop.f32.mrb[0].mxu0
    %881 = vmatprep.mubr.f32.mxu0 0.0
    %882 = vmatmul.mubr.f32.gmra.mrb[0].mxu0 %v810
    %v883 = vpop.f32.mrb[0].mxu0
    %v884 = vadd.f32 %v805, %v883
    %v885 = vpop.f32.mrb[0].mxu0
    %886 = vdwg.mxu0
    %v887 = vmax.f32 %v879, 0.0
    %v888 = vmax.f32 %v884, 0.0
    %v889 = vld [vmem:[%s3] sm:$0xff]
    %v890 = vld [vmem:[%s4] sm:$0x1]
    %v892 = vlaneseq
    %v893 = vshrl.u32 %v892, 7
    %v894 = vsub.s32 0, %v893
    %v895 = vrot.slane %v890, %v894
    %vm897 = vcmask 64512
    %v899 = vsel %vm897, %v887, 0
    %v902 = vsel %vm897, %v888, 0
    %904 = vmatprep.subr.mxu0 0.0
    %905 = vmatpush1.msra.mxu0 %v889
    %906 = vmatprep.subr.mxu0 0.0
    %907 = vmatpush1.msra.mxu0 0.0
    %908 = vmatprep.subr.mxu0 0.0
    %909 = vmatpush1.msra.mxu0 0.0
    %910 = vmatprep.subr.mxu0 0.0
    %911 = vmatpush1.msra.mxu0 0.0
    %912 = vmatprep.subr.mxu0 0.0
    %913 = vmatpush1.msra.mxu0 0.0
    %914 = vmatprep.subr.mxu0 0.0
    %915 = vmatpush1.msra.mxu0 0.0
    %916 = vmatprep.subr.mxu0 0.0
    %917 = vmatpush1.msra.mxu0 0.0
    %918 = vmatprep.subr.mxu0 0.0
    %919 = vmatpush1.msra.mxu0 0.0
    %920 = vmatprep.subr.mxu0 0.0
    %921 = vmatpush1.msra.mxu0 0.0
    %922 = vmatprep.subr.mxu0 0.0
    %923 = vmatpush1.msra.mxu0 0.0
    %924 = vmatprep.subr.mxu0 0.0
    %925 = vmatpush1.msra.mxu0 0.0
    %926 = vmatprep.subr.mxu0 0.0
    %927 = vmatpush1.msra.mxu0 0.0
    %928 = vmatprep.subr.mxu0 0.0
    %929 = vmatpush1.msra.mxu0 0.0
    %930 = vmatprep.subr.mxu0 0.0
    %931 = vmatpush1.msra.mxu0 0.0
    %932 = vmatprep.subr.mxu0 0.0
    %933 = vmatpush1.msra.mxu0 0.0
    %934 = vmatprep.subr.mxu0 0.0
    %935 = vmatpush1.msra.mxu0 0.0
    %936 = vmatprep.subr.mxu0 0.0
    %937 = vmatpush1.msra.mxu0 0.0
    %938 = vmatprep.subr.mxu0 0.0
    %939 = vmatpush1.msra.mxu0 0.0
    %940 = vmatprep.subr.mxu0 0.0
    %941 = vmatpush1.msra.mxu0 0.0
    %942 = vmatprep.subr.mxu0 0.0
    %943 = vmatpush1.msra.mxu0 0.0
    %944 = vmatprep.subr.mxu0 0.0
    %945 = vmatpush1.msra.mxu0 0.0
    %946 = vmatprep.subr.mxu0 0.0
    %947 = vmatpush1.msra.mxu0 0.0
    %948 = vmatprep.subr.mxu0 0.0
    %949 = vmatpush1.msra.mxu0 0.0
    %950 = vmatprep.subr.mxu0 0.0
    %951 = vmatpush1.msra.mxu0 0.0
    %952 = vmatprep.subr.mxu0 0.0
    %953 = vmatpush1.msra.mxu0 0.0
    %954 = vmatprep.subr.mxu0 0.0
    %955 = vmatpush1.msra.mxu0 0.0
    %956 = vmatprep.subr.mxu0 0.0
    %957 = vmatpush1.msra.mxu0 0.0
    %958 = vmatprep.subr.mxu0 0.0
    %959 = vmatpush1.msra.mxu0 0.0
    %960 = vmatprep.subr.mxu0 0.0
    %961 = vmatpush1.msra.mxu0 0.0
    %962 = vmatprep.subr.mxu0 0.0
    %963 = vmatpush1.msra.mxu0 0.0
    %964 = vmatprep.subr.mxu0 0.0
    %965 = vmatpush1.msra.mxu0 0.0
    %966 = vmatprep.subr.mxu0 0.0
    %967 = vmatpush1.msra.mxu0 0.0
    %968 = vmatprep.mubr.f32.mxu0 0.0
    %969 = vmatmul.mubr.f32.gmra.mrb[0].mxu0 %v899
    %v970 = vpop.f32.mrb[0].mxu0
    %v971 = vadd.f32 %v895, %v970
    %v972 = vpop.f32.mrb[0].mxu0
    %973 = vmatprep.mubr.f32.mxu0 0.0
    %974 = vmatmul.mubr.f32.gmra.mrb[0].mxu0 %v902
    %v975 = vpop.f32.mrb[0].mxu0
    %v976 = vadd.f32 %v895, %v975
    %v977 = vpop.f32.mrb[0].mxu0
    %978 = vdwg.mxu0
    %v979 = vadd.f32 %v971, %v976
    %v980 = vxor.u32 %v979, 2147483648
    %v981 = vmul.f32 %v980, 1.442695
    %v982 = vpow.pop %v981
    %v983 = vadd.f32 %v982, 1.0
    %v984 = vrcp.pop %v983
    %v985 = vmul.f32 1.0, %v984
    %v986 = vlaneseq
    %v987 = vshrl.u32 %v986, 7
    %v988 = vsub.s32 0, %v987
    %v989 = vrot.slane %v985, %v988
    %991 = vbcast.lane.b32.xlu0 %v989, 256
    %v992 = vpop.permute.xlu0 %991
    %s994 = sor.u32 256, 8
    %995 = vbcast.lane.b32.xlu0 %v989, %s994
    %v996 = vpop.permute.xlu0 %995
    %s998 = sor.u32 256, 16
    %999 = vbcast.lane.b32.xlu0 %v989, %s998
    %v1000 = vpop.permute.xlu0 %999
    %s1002 = sor.u32 256, 24
    %1003 = vbcast.lane.b32.xlu0 %v989, %s1002
    %v1004 = vpop.permute.xlu0 %1003
    %v1005 = vlaneseq
    %v1006 = vshrl.u32 %v1005, 7
    %v1007 = vsub.s32 1, %v1006
    %v1008 = vrot.slane %v985, %v1007
    %1010 = vbcast.lane.b32.xlu0 %v1008, 256
    %v1011 = vpop.permute.xlu0 %1010
    %s1013 = sor.u32 256, 8
    %1014 = vbcast.lane.b32.xlu0 %v1008, %s1013
    %v1015 = vpop.permute.xlu0 %1014
    %s1017 = sor.u32 256, 16
    %1018 = vbcast.lane.b32.xlu0 %v1008, %s1017
    %v1019 = vpop.permute.xlu0 %1018
    %s1021 = sor.u32 256, 24
    %1022 = vbcast.lane.b32.xlu0 %v1008, %s1021
    %v1023 = vpop.permute.xlu0 %1022
    %v1024 = vlaneseq
    %v1025 = vshrl.u32 %v1024, 7
    %v1026 = vsub.s32 2, %v1025
    %v1027 = vrot.slane %v985, %v1026
    %1029 = vbcast.lane.b32.xlu0 %v1027, 256
    %v1030 = vpop.permute.xlu0 %1029
    %s1032 = sor.u32 256, 8
    %1033 = vbcast.lane.b32.xlu0 %v1027, %s1032
    %v1034 = vpop.permute.xlu0 %1033
    %s1036 = sor.u32 256, 16
    %1037 = vbcast.lane.b32.xlu0 %v1027, %s1036
    %v1038 = vpop.permute.xlu0 %1037
    %s1040 = sor.u32 256, 24
    %1041 = vbcast.lane.b32.xlu0 %v1027, %s1040
    %v1042 = vpop.permute.xlu0 %1041
    %v1043 = vlaneseq
    %v1044 = vshrl.u32 %v1043, 7
    %v1045 = vsub.s32 3, %v1044
    %v1046 = vrot.slane %v985, %v1045
    %1048 = vbcast.lane.b32.xlu0 %v1046, 256
    %v1049 = vpop.permute.xlu0 %1048
    %s1051 = sor.u32 256, 8
    %1052 = vbcast.lane.b32.xlu0 %v1046, %s1051
    %v1053 = vpop.permute.xlu0 %1052
    %s1055 = sor.u32 256, 16
    %1056 = vbcast.lane.b32.xlu0 %v1046, %s1055
    %v1057 = vpop.permute.xlu0 %1056
    %s1059 = sor.u32 256, 24
    %1060 = vbcast.lane.b32.xlu0 %v1046, %s1059
    %v1061 = vpop.permute.xlu0 %1060
    %v1062 = vlaneseq
    %v1063 = vshrl.u32 %v1062, 7
    %v1064 = vsub.s32 4, %v1063
    %v1065 = vrot.slane %v985, %v1064
    %1067 = vbcast.lane.b32.xlu0 %v1065, 256
    %v1068 = vpop.permute.xlu0 %1067
    %s1070 = sor.u32 256, 8
    %1071 = vbcast.lane.b32.xlu0 %v1065, %s1070
    %v1072 = vpop.permute.xlu0 %1071
    %s1074 = sor.u32 256, 16
    %1075 = vbcast.lane.b32.xlu0 %v1065, %s1074
    %v1076 = vpop.permute.xlu0 %1075
    %s1078 = sor.u32 256, 24
    %1079 = vbcast.lane.b32.xlu0 %v1065, %s1078
    %v1080 = vpop.permute.xlu0 %1079
    %v1081 = vlaneseq
    %v1082 = vshrl.u32 %v1081, 7
    %v1083 = vsub.s32 5, %v1082
    %v1084 = vrot.slane %v985, %v1083
    %1086 = vbcast.lane.b32.xlu0 %v1084, 256
    %v1087 = vpop.permute.xlu0 %1086
    %s1089 = sor.u32 256, 8
    %1090 = vbcast.lane.b32.xlu0 %v1084, %s1089
    %v1091 = vpop.permute.xlu0 %1090
    %s1093 = sor.u32 256, 16
    %1094 = vbcast.lane.b32.xlu0 %v1084, %s1093
    %v1095 = vpop.permute.xlu0 %1094
    %s1097 = sor.u32 256, 24
    %1098 = vbcast.lane.b32.xlu0 %v1084, %s1097
    %v1099 = vpop.permute.xlu0 %1098
    %v1100 = vlaneseq
    %v1101 = vshrl.u32 %v1100, 7
    %v1102 = vsub.s32 6, %v1101
    %v1103 = vrot.slane %v985, %v1102
    %1105 = vbcast.lane.b32.xlu0 %v1103, 256
    %v1106 = vpop.permute.xlu0 %1105
    %s1108 = sor.u32 256, 8
    %1109 = vbcast.lane.b32.xlu0 %v1103, %s1108
    %v1110 = vpop.permute.xlu0 %1109
    %s1112 = sor.u32 256, 16
    %1113 = vbcast.lane.b32.xlu0 %v1103, %s1112
    %v1114 = vpop.permute.xlu0 %1113
    %s1116 = sor.u32 256, 24
    %1117 = vbcast.lane.b32.xlu0 %v1103, %s1116
    %v1118 = vpop.permute.xlu0 %1117
    %v1119 = vlaneseq
    %v1120 = vshrl.u32 %v1119, 7
    %v1121 = vsub.s32 7, %v1120
    %v1122 = vrot.slane %v985, %v1121
    %1124 = vbcast.lane.b32.xlu0 %v1122, 256
    %v1125 = vpop.permute.xlu0 %1124
    %s1127 = sor.u32 256, 8
    %1128 = vbcast.lane.b32.xlu0 %v1122, %s1127
    %v1129 = vpop.permute.xlu0 %1128
    %s1131 = sor.u32 256, 16
    %1132 = vbcast.lane.b32.xlu0 %v1122, %s1131
    %v1133 = vpop.permute.xlu0 %1132
    %s1135 = sor.u32 256, 24
    %1136 = vbcast.lane.b32.xlu0 %v1122, %s1135
    %v1137 = vpop.permute.xlu0 %1136
    loop: start=0, step=1, limit=2
    $region49: #{tpu_custom_call.1} parent=1 // loop_pre_header
      _
    $region50: #{tpu_custom_call.1} parent=1 // loop_header
      %s1139 = sphi 0, %s1143
      %p1140 = scmp.ge.s32.totalorder %s1139, 2
    $region51: #{tpu_custom_call.1} parent=1 // loop_header_branch
      %1142 = sbr.rel (%p1140) target = $region55
    $region52: #{tpu_custom_call.1} parent=1 // loop_body
      %s1144 = smul.u32 %s1139, 128
      %s1145 = sshra.s32 %s1144, 7
      %s1146 = sand.u32 %s1144, 127
      %s1147 = smul.addr %s1145, 8
      %s1148 = scalar_lea.vmem [#allocation4], %s1147
      %v1149 = vld [vmem:[%s1148] sm:$0xff]
      %v1150 = vld [vmem:[%s1148 + $0x10] sm:$0xff]
      %v1151 = vld [vmem:[%s1148 + $0x20] sm:$0xff]
      %v1152 = vld [vmem:[%s1148 + $0x30] sm:$0xff]
      %v1153 = vld [vmem:[%s1148 + $0x40] sm:$0xff]
      %v1154 = vld [vmem:[%s1148 + $0x50] sm:$0xff]
      %v1155 = vld [vmem:[%s1148 + $0x60] sm:$0xff]
      %v1156 = vld [vmem:[%s1148 + $0x70] sm:$0xff]
      %v1157 = vld [vmem:[%s1148 + $0x80] sm:$0xff]
      %v1158 = vld [vmem:[%s1148 + $0x90] sm:$0xff]
      %v1159 = vld [vmem:[%s1148 + $0xa0] sm:$0xff]
      %v1160 = vld [vmem:[%s1148 + $0xb0] sm:$0xff]
      %v1161 = vld [vmem:[%s1148 + $0xc0] sm:$0xff]
      %v1162 = vld [vmem:[%s1148 + $0xd0] sm:$0xff]
      %v1163 = vld [vmem:[%s1148 + $0xe0] sm:$0xff]
      %v1164 = vld [vmem:[%s1148 + $0xf0] sm:$0xff]
      %v1165 = vld [vmem:[%s1148 + $0x100] sm:$0xff]
      %v1166 = vld [vmem:[%s1148 + $0x110] sm:$0xff]
      %v1167 = vld [vmem:[%s1148 + $0x120] sm:$0xff]
      %v1168 = vld [vmem:[%s1148 + $0x130] sm:$0xff]
      %v1169 = vld [vmem:[%s1148 + $0x140] sm:$0xff]
      %v1170 = vld [vmem:[%s1148 + $0x150] sm:$0xff]
      %v1171 = vld [vmem:[%s1148 + $0x160] sm:$0xff]
      %v1172 = vld [vmem:[%s1148 + $0x170] sm:$0xff]
      %v1173 = vld [vmem:[%s1148 + $0x180] sm:$0xff]
      %v1174 = vld [vmem:[%s1148 + $0x190] sm:$0xff]
      %v1175 = vld [vmem:[%s1148 + $0x1a0] sm:$0xff]
      %v1176 = vld [vmem:[%s1148 + $0x1b0] sm:$0xff]
      %v1177 = vld [vmem:[%s1148 + $0x1c0] sm:$0xff]
      %v1178 = vld [vmem:[%s1148 + $0x1d0] sm:$0xff]
      %v1179 = vld [vmem:[%s1148 + $0x1e0] sm:$0xff]
      %v1180 = vld [vmem:[%s1148 + $0x1f0] sm:$0xff]
      %v1181 = vmul.f32 %v1149, %v992
      %v1182 = vmul.f32 %v1150, %v996
      %v1183 = vmul.f32 %v1151, %v1000
      %v1184 = vmul.f32 %v1152, %v1004
      %v1185 = vmul.f32 %v1153, %v1011
      %v1186 = vmul.f32 %v1154, %v1015
      %v1187 = vmul.f32 %v1155, %v1019
      %v1188 = vmul.f32 %v1156, %v1023
      %v1189 = vmul.f32 %v1157, %v1030
      %v1190 = vmul.f32 %v1158, %v1034
      %v1191 = vmul.f32 %v1159, %v1038
      %v1192 = vmul.f32 %v1160, %v1042
      %v1193 = vmul.f32 %v1161, %v1049
      %v1194 = vmul.f32 %v1162, %v1053
      %v1195 = vmul.f32 %v1163, %v1057
      %v1196 = vmul.f32 %v1164, %v1061
      %v1197 = vmul.f32 %v1165, %v1068
      %v1198 = vmul.f32 %v1166, %v1072
      %v1199 = vmul.f32 %v1167, %v1076
      %v1200 = vmul.f32 %v1168, %v1080
      %v1201 = vmul.f32 %v1169, %v1087
      %v1202 = vmul.f32 %v1170, %v1091
      %v1203 = vmul.f32 %v1171, %v1095
      %v1204 = vmul.f32 %v1172, %v1099
      %v1205 = vmul.f32 %v1173, %v1106
      %v1206 = vmul.f32 %v1174, %v1110
      %v1207 = vmul.f32 %v1175, %v1114
      %v1208 = vmul.f32 %v1176, %v1118
      %v1209 = vmul.f32 %v1177, %v1125
      %v1210 = vmul.f32 %v1178, %v1129
      %v1211 = vmul.f32 %v1179, %v1133
      %v1212 = vmul.f32 %v1180, %v1137
      %v1213 = vmax.f32 %v1181, %v1182
      %v1214 = vmax.f32 %v1213, %v1183
      %v1215 = vmax.f32 %v1214, %v1184
      %v1216 = vrot.slane %v1215, 4
      %v1217 = vmax.f32 %v1215, %v1216
      %v1218 = vrot.slane %v1217, 2
      %v1219 = vmax.f32 %v1217, %v1218
      %v1220 = vrot.slane %v1219, 1
      %v1221 = vmax.f32 %v1219, %v1220
      %v1222 = vmax.f32 %v1185, %v1186
      %v1223 = vmax.f32 %v1222, %v1187
      %v1224 = vmax.f32 %v1223, %v1188
      %v1225 = vrot.slane %v1224, 4
      %v1226 = vmax.f32 %v1224, %v1225
      %v1227 = vrot.slane %v1226, 2
      %v1228 = vmax.f32 %v1226, %v1227
      %v1229 = vrot.slane %v1228, 1
      %v1230 = vmax.f32 %v1228, %v1229
      %v1231 = vmax.f32 %v1189, %v1190
      %v1232 = vmax.f32 %v1231, %v1191
      %v1233 = vmax.f32 %v1232, %v1192
      %v1234 = vrot.slane %v1233, 4
      %v1235 = vmax.f32 %v1233, %v1234
      %v1236 = vrot.slane %v1235, 2
      %v1237 = vmax.f32 %v1235, %v1236
      %v1238 = vrot.slane %v1237, 1
      %v1239 = vmax.f32 %v1237, %v1238
      %v1240 = vmax.f32 %v1193, %v1194
      %v1241 = vmax.f32 %v1240, %v1195
      %v1242 = vmax.f32 %v1241, %v1196
      %v1243 = vrot.slane %v1242, 4
      %v1244 = vmax.f32 %v1242, %v1243
      %v1245 = vrot.slane %v1244, 2
      %v1246 = vmax.f32 %v1244, %v1245
      %v1247 = vrot.slane %v1246, 1
      %v1248 = vmax.f32 %v1246, %v1247
      %v1249 = vmax.f32 %v1197, %v1198
      %v1250 = vmax.f32 %v1249, %v1199
      %v1251 = vmax.f32 %v1250, %v1200
      %v1252 = vrot.slane %v1251, 4
      %v1253 = vmax.f32 %v1251, %v1252
      %v1254 = vrot.slane %v1253, 2
      %v1255 = vmax.f32 %v1253, %v1254
      %v1256 = vrot.slane %v1255, 1
      %v1257 = vmax.f32 %v1255, %v1256
      %v1258 = vmax.f32 %v1201, %v1202
      %v1259 = vmax.f32 %v1258, %v1203
      %v1260 = vmax.f32 %v1259, %v1204
      %v1261 = vrot.slane %v1260, 4
      %v1262 = vmax.f32 %v1260, %v1261
      %v1263 = vrot.slane %v1262, 2
      %v1264 = vmax.f32 %v1262, %v1263
      %v1265 = vrot.slane %v1264, 1
      %v1266 = vmax.f32 %v1264, %v1265
      %v1267 = vmax.f32 %v1205, %v1206
      %v1268 = vmax.f32 %v1267, %v1207
      %v1269 = vmax.f32 %v1268, %v1208
      %v1270 = vrot.slane %v1269, 4
      %v1271 = vmax.f32 %v1269, %v1270
      %v1272 = vrot.slane %v1271, 2
      %v1273 = vmax.f32 %v1271, %v1272
      %v1274 = vrot.slane %v1273, 1
      %v1275 = vmax.f32 %v1273, %v1274
      %v1276 = vmax.f32 %v1209, %v1210
      %v1277 = vmax.f32 %v1276, %v1211
      %v1278 = vmax.f32 %v1277, %v1212
      %v1279 = vrot.slane %v1278, 4
      %v1280 = vmax.f32 %v1278, %v1279
      %v1281 = vrot.slane %v1280, 2
      %v1282 = vmax.f32 %v1280, %v1281
      %v1283 = vrot.slane %v1282, 1
      %v1284 = vmax.f32 %v1282, %v1283
      %v1293 = vsel %vm591, %v1230, %v1221
      %v1294 = vsel %vm593, %v1239, %v1293
      %v1295 = vsel %vm595, %v1248, %v1294
      %v1296 = vsel %vm597, %v1257, %v1295
      %v1297 = vsel %vm599, %v1266, %v1296
      %v1298 = vsel %vm601, %v1275, %v1297
      %v1299 = vsel %vm603, %v1284, %v1298
      %s1301 = smul.addr %s1145, 8
      %s1302 = scalar_lea.vmem [#allocation2], %s1301
      %1303 = vst [vmem:[%s1302] sm:$0xff] %v1299
      %s1304 = sadd.s32 %s1144, 256
      %v1305 = vadd.f32 %v1181, %v1182
      %v1306 = vadd.f32 %v1305, %v1183
      %v1307 = vadd.f32 %v1306, %v1184
      %v1308 = vrot.slane %v1307, 4
      %v1309 = vadd.f32 %v1307, %v1308
      %v1310 = vrot.slane %v1309, 2
      %v1311 = vadd.f32 %v1309, %v1310
      %v1312 = vrot.slane %v1311, 1
      %v1313 = vadd.f32 %v1311, %v1312
      %v1314 = vadd.f32 %v1185, %v1186
      %v1315 = vadd.f32 %v1314, %v1187
      %v1316 = vadd.f32 %v1315, %v1188
      %v1317 = vrot.slane %v1316, 4
      %v1318 = vadd.f32 %v1316, %v1317
      %v1319 = vrot.slane %v1318, 2
      %v1320 = vadd.f32 %v1318, %v1319
      %v1321 = vrot.slane %v1320, 1
      %v1322 = vadd.f32 %v1320, %v1321
      %v1323 = vadd.f32 %v1189, %v1190
      %v1324 = vadd.f32 %v1323, %v1191
      %v1325 = vadd.f32 %v1324, %v1192
      %v1326 = vrot.slane %v1325, 4
      %v1327 = vadd.f32 %v1325, %v1326
      %v1328 = vrot.slane %v1327, 2
      %v1329 = vadd.f32 %v1327, %v1328
      %v1330 = vrot.slane %v1329, 1
      %v1331 = vadd.f32 %v1329, %v1330
      %v1332 = vadd.f32 %v1193, %v1194
      %v1333 = vadd.f32 %v1332, %v1195
      %v1334 = vadd.f32 %v1333, %v1196
      %v1335 = vrot.slane %v1334, 4
      %v1336 = vadd.f32 %v1334, %v1335
      %v1337 = vrot.slane %v1336, 2
      %v1338 = vadd.f32 %v1336, %v1337
      %v1339 = vrot.slane %v1338, 1
      %v1340 = vadd.f32 %v1338, %v1339
      %v1341 = vadd.f32 %v1197, %v1198
      %v1342 = vadd.f32 %v1341, %v1199
      %v1343 = vadd.f32 %v1342, %v1200
      %v1344 = vrot.slane %v1343, 4
      %v1345 = vadd.f32 %v1343, %v1344
      %v1346 = vrot.slane %v1345, 2
      %v1347 = vadd.f32 %v1345, %v1346
      %v1348 = vrot.slane %v1347, 1
      %v1349 = vadd.f32 %v1347, %v1348
      %v1350 = vadd.f32 %v1201, %v1202
      %v1351 = vadd.f32 %v1350, %v1203
      %v1352 = vadd.f32 %v1351, %v1204
      %v1353 = vrot.slane %v1352, 4
      %v1354 = vadd.f32 %v1352, %v1353
      %v1355 = vrot.slane %v1354, 2
      %v1356 = vadd.f32 %v1354, %v1355
      %v1357 = vrot.slane %v1356, 1
      %v1358 = vadd.f32 %v1356, %v1357
      %v1359 = vadd.f32 %v1205, %v1206
      %v1360 = vadd.f32 %v1359, %v1207
      %v1361 = vadd.f32 %v1360, %v1208
      %v1362 = vrot.slane %v1361, 4
      %v1363 = vadd.f32 %v1361, %v1362
      %v1364 = vrot.slane %v1363, 2
      %v1365 = vadd.f32 %v1363, %v1364
      %v1366 = vrot.slane %v1365, 1
      %v1367 = vadd.f32 %v1365, %v1366
      %v1368 = vadd.f32 %v1209, %v1210
      %v1369 = vadd.f32 %v1368, %v1211
      %v1370 = vadd.f32 %v1369, %v1212
      %v1371 = vrot.slane %v1370, 4
      %v1372 = vadd.f32 %v1370, %v1371
      %v1373 = vrot.slane %v1372, 2
      %v1374 = vadd.f32 %v1372, %v1373
      %v1375 = vrot.slane %v1374, 1
      %v1376 = vadd.f32 %v1374, %v1375
      %v1377 = vmul.f32 %v1313, 0.03125
      %v1378 = vmul.f32 %v1322, 0.03125
      %v1379 = vmul.f32 %v1331, 0.03125
      %v1380 = vmul.f32 %v1340, 0.03125
      %v1381 = vmul.f32 %v1349, 0.03125
      %v1382 = vmul.f32 %v1358, 0.03125
      %v1383 = vmul.f32 %v1367, 0.03125
      %v1384 = vmul.f32 %v1376, 0.03125
      %v1393 = vsel %vm591, %v1378, %v1377
      %v1394 = vsel %vm593, %v1379, %v1393
      %v1395 = vsel %vm595, %v1380, %v1394
      %v1396 = vsel %vm597, %v1381, %v1395
      %v1397 = vsel %vm599, %v1382, %v1396
      %v1398 = vsel %vm601, %v1383, %v1397
      %v1399 = vsel %vm603, %v1384, %v1398
      %s1401 = sshra.s32 %s1304, 7
      %s1402 = sand.u32 %s1304, 127
      %s1403 = smul.addr %s1401, 8
      %s1404 = scalar_lea.vmem [#allocation2], %s1403
      %1405 = vst [vmem:[%s1404] sm:$0xff] %v1399
    $region53: #{tpu_custom_call.1} parent=1 // loop_footer
      %s1143 = sadd.s32 1, %s1139
    $region54: #{tpu_custom_call.1} parent=1 // loop_footer_branch
      %1138 = sbr.rel target = $region50
    $region55: #{tpu_custom_call.1} parent=1 // loop_exit
      _
    %v1406 = vld [vmem:[#allocation2] sm:$0xff]
    %v1407 = vld [vmem:[#allocation2 + $0x8] sm:$0xff]
    %v1408 = vld [vmem:[#allocation2 + $0x10] sm:$0xff]
    %v1409 = vld [vmem:[#allocation2 + $0x18] sm:$0xff]
    %v1410 = vpack.c.bf16 %v1406, %v1406
    %v1411 = vpack.c.bf16 %v1407, %v1407
    %v1412 = vpack.c.bf16 %v1408, %v1408
    %v1413 = vpack.c.bf16 %v1409, %v1409
    %v1414 = vld [vmem:[#allocation8] sm:$0xff]
    %v1415 = vld [vmem:[#allocation8 + $0x8] sm:$0xff]
    %v1416 = vld [vmem:[#allocation8 + $0x10] sm:$0xff]
    %v1417 = vld [vmem:[#allocation8 + $0x18] sm:$0xff]
    %v1418 = vld [vmem:[#allocation8 + $0x20] sm:$0xff]
    %v1419 = vld [vmem:[#allocation8 + $0x28] sm:$0xff]
    %v1420 = vld [vmem:[#allocation8 + $0x30] sm:$0xff]
    %v1421 = vld [vmem:[#allocation8 + $0x38] sm:$0xff]
    %v1422 = vld [vmem:[#allocation8 + $0x40] sm:$0xff]
    %v1423 = vld [vmem:[#allocation8 + $0x48] sm:$0xff]
    %v1424 = vld [vmem:[#allocation8 + $0x50] sm:$0xff]
    %v1425 = vld [vmem:[#allocation8 + $0x58] sm:$0xff]
    %v1426 = vld [vmem:[#allocation8 + $0x60] sm:$0xff]
    %v1427 = vld [vmem:[#allocation8 + $0x68] sm:$0xff]
    %v1428 = vld [vmem:[#allocation8 + $0x70] sm:$0xff]
    %v1429 = vld [vmem:[#allocation8 + $0x78] sm:$0xff]
    %v1430 = vld [vmem:[#allocation8 + $0x80] sm:$0xff]
    %v1431 = vld [vmem:[#allocation8 + $0x88] sm:$0xff]
    %v1432 = vld [vmem:[#allocation8 + $0x90] sm:$0xff]
    %v1433 = vld [vmem:[#allocation8 + $0x98] sm:$0xff]
    %v1434 = vld [vmem:[#allocation8 + $0xa0] sm:$0xff]
    %v1435 = vld [vmem:[#allocation8 + $0xa8] sm:$0xff]
    %v1436 = vld [vmem:[#allocation8 + $0xb0] sm:$0xff]
    %v1437 = vld [vmem:[#allocation8 + $0xb8] sm:$0xff]
    %v1438 = vld [vmem:[#allocation8 + $0xc0] sm:$0xff]
    %v1439 = vld [vmem:[#allocation8 + $0xc8] sm:$0xff]
    %v1440 = vld [vmem:[#allocation8 + $0xd0] sm:$0xff]
    %v1441 = vld [vmem:[#allocation8 + $0xd8] sm:$0xff]
    %v1442 = vld [vmem:[#allocation8 + $0xe0] sm:$0xff]
    %v1443 = vld [vmem:[#allocation8 + $0xe8] sm:$0xff]
    %v1444 = vld [vmem:[#allocation8 + $0xf0] sm:$0xff]
    %v1445 = vld [vmem:[#allocation8 + $0xf8] sm:$0xff]
    %v1446 = vld [vmem:[#allocation8 + $0x100] sm:$0xff]
    %v1447 = vld [vmem:[#allocation8 + $0x108] sm:$0xff]
    %v1448 = vld [vmem:[#allocation8 + $0x110] sm:$0xff]
    %v1449 = vld [vmem:[#allocation8 + $0x118] sm:$0xff]
    %v1450 = vld [vmem:[#allocation8 + $0x120] sm:$0xff]
    %v1451 = vld [vmem:[#allocation8 + $0x128] sm:$0xff]
    %v1452 = vld [vmem:[#allocation8 + $0x130] sm:$0xff]
    %v1453 = vld [vmem:[#allocation8 + $0x138] sm:$0xff]
    %v1454 = vld [vmem:[#allocation8 + $0x140] sm:$0xff]
    %v1455 = vld [vmem:[#allocation8 + $0x148] sm:$0xff]
    %v1456 = vld [vmem:[#allocation8 + $0x150] sm:$0xff]
    %v1457 = vld [vmem:[#allocation8 + $0x158] sm:$0xff]
    %v1458 = vld [vmem:[#allocation8 + $0x160] sm:$0xff]
    %v1459 = vld [vmem:[#allocation8 + $0x168] sm:$0xff]
    %v1460 = vld [vmem:[#allocation8 + $0x170] sm:$0xff]
    %v1461 = vld [vmem:[#allocation8 + $0x178] sm:$0xff]
    %v1462 = vld [vmem:[#allocation8 + $0x180] sm:$0xff]
    %v1463 = vld [vmem:[#allocation8 + $0x188] sm:$0xff]
    %v1464 = vld [vmem:[#allocation8 + $0x190] sm:$0xff]
    %v1465 = vld [vmem:[#allocation8 + $0x198] sm:$0xff]
    %v1466 = vld [vmem:[#allocation8 + $0x1a0] sm:$0xff]
    %v1467 = vld [vmem:[#allocation8 + $0x1a8] sm:$0xff]
    %v1468 = vld [vmem:[#allocation8 + $0x1b0] sm:$0xff]
    %v1469 = vld [vmem:[#allocation8 + $0x1b8] sm:$0xff]
    %v1470 = vld [vmem:[#allocation8 + $0x1c0] sm:$0xff]
    %v1471 = vld [vmem:[#allocation8 + $0x1c8] sm:$0xff]
    %v1472 = vld [vmem:[#allocation8 + $0x1d0] sm:$0xff]
    %v1473 = vld [vmem:[#allocation8 + $0x1d8] sm:$0xff]
    %v1474 = vld [vmem:[#allocation8 + $0x1e0] sm:$0xff]
    %v1475 = vld [vmem:[#allocation8 + $0x1e8] sm:$0xff]
    %v1476 = vld [vmem:[#allocation8 + $0x1f0] sm:$0xff]
    %v1477 = vld [vmem:[#allocation8 + $0x1f8] sm:$0xff]
    %v1542 = vunpack.c.l.b16 %v1414
    %v1543 = vunpack.c.h.b16 %v1414
    %v1544 = vunpack.c.l.b16 %v1415
    %v1545 = vunpack.c.h.b16 %v1415
    %v1546 = vunpack.c.l.b16 %v1416
    %v1547 = vunpack.c.h.b16 %v1416
    %v1548 = vunpack.c.l.b16 %v1417
    %v1549 = vunpack.c.h.b16 %v1417
    %v1550 = vunpack.c.l.b16 %v1418
    %v1551 = vunpack.c.h.b16 %v1418
    %v1552 = vunpack.c.l.b16 %v1419
    %v1553 = vunpack.c.h.b16 %v1419
    %v1554 = vunpack.c.l.b16 %v1420
    %v1555 = vunpack.c.h.b16 %v1420
    %v1556 = vunpack.c.l.b16 %v1421
    %v1557 = vunpack.c.h.b16 %v1421
    %v1558 = vunpack.c.l.b16 %v1422
    %v1559 = vunpack.c.h.b16 %v1422
    %v1560 = vunpack.c.l.b16 %v1423
    %v1561 = vunpack.c.h.b16 %v1423
    %v1562 = vunpack.c.l.b16 %v1424
    %v1563 = vunpack.c.h.b16 %v1424
    %v1564 = vunpack.c.l.b16 %v1425
    %v1565 = vunpack.c.h.b16 %v1425
    %v1566 = vunpack.c.l.b16 %v1426
    %v1567 = vunpack.c.h.b16 %v1426
    %v1568 = vunpack.c.l.b16 %v1427
    %v1569 = vunpack.c.h.b16 %v1427
    %v1570 = vunpack.c.l.b16 %v1428
    %v1571 = vunpack.c.h.b16 %v1428
    %v1572 = vunpack.c.l.b16 %v1429
    %v1573 = vunpack.c.h.b16 %v1429
    %v1574 = vunpack.c.l.b16 %v1430
    %v1575 = vunpack.c.h.b16 %v1430
    %v1576 = vunpack.c.l.b16 %v1431
    %v1577 = vunpack.c.h.b16 %v1431
    %v1578 = vunpack.c.l.b16 %v1432
    %v1579 = vunpack.c.h.b16 %v1432
    %v1580 = vunpack.c.l.b16 %v1433
    %v1581 = vunpack.c.h.b16 %v1433
    %v1582 = vunpack.c.l.b16 %v1434
    %v1583 = vunpack.c.h.b16 %v1434
    %v1584 = vunpack.c.l.b16 %v1435
    %v1585 = vunpack.c.h.b16 %v1435
    %v1586 = vunpack.c.l.b16 %v1436
    %v1587 = vunpack.c.h.b16 %v1436
    %v1588 = vunpack.c.l.b16 %v1437
    %v1589 = vunpack.c.h.b16 %v1437
    %v1590 = vunpack.c.l.b16 %v1438
    %v1591 = vunpack.c.h.b16 %v1438
    %v1592 = vunpack.c.l.b16 %v1439
    %v1593 = vunpack.c.h.b16 %v1439
    %v1594 = vunpack.c.l.b16 %v1440
    %v1595 = vunpack.c.h.b16 %v1440
    %v1596 = vunpack.c.l.b16 %v1441
    %v1597 = vunpack.c.h.b16 %v1441
    %v1598 = vunpack.c.l.b16 %v1442
    %v1599 = vunpack.c.h.b16 %v1442
    %v1600 = vunpack.c.l.b16 %v1443
    %v1601 = vunpack.c.h.b16 %v1443
    %v1602 = vunpack.c.l.b16 %v1444
    %v1603 = vunpack.c.h.b16 %v1444
    %v1604 = vunpack.c.l.b16 %v1445
    %v1605 = vunpack.c.h.b16 %v1445
    %v1606 = vunpack.c.l.b16 %v1446
    %v1607 = vunpack.c.h.b16 %v1446
    %v1608 = vunpack.c.l.b16 %v1447
    %v1609 = vunpack.c.h.b16 %v1447
    %v1610 = vunpack.c.l.b16 %v1448
    %v1611 = vunpack.c.h.b16 %v1448
    %v1612 = vunpack.c.l.b16 %v1449
    %v1613 = vunpack.c.h.b16 %v1449
    %v1614 = vunpack.c.l.b16 %v1450
    %v1615 = vunpack.c.h.b16 %v1450
    %v1616 = vunpack.c.l.b16 %v1451
    %v1617 = vunpack.c.h.b16 %v1451
    %v1618 = vunpack.c.l.b16 %v1452
    %v1619 = vunpack.c.h.b16 %v1452
    %v1620 = vunpack.c.l.b16 %v1453
    %v1621 = vunpack.c.h.b16 %v1453
    %v1622 = vunpack.c.l.b16 %v1454
    %v1623 = vunpack.c.h.b16 %v1454
    %v1624 = vunpack.c.l.b16 %v1455
    %v1625 = vunpack.c.h.b16 %v1455
    %v1626 = vunpack.c.l.b16 %v1456
    %v1627 = vunpack.c.h.b16 %v1456
    %v1628 = vunpack.c.l.b16 %v1457
    %v1629 = vunpack.c.h.b16 %v1457
    %v1630 = vunpack.c.l.b16 %v1458
    %v1631 = vunpack.c.h.b16 %v1458
    %v1632 = vunpack.c.l.b16 %v1459
    %v1633 = vunpack.c.h.b16 %v1459
    %v1634 = vunpack.c.l.b16 %v1460
    %v1635 = vunpack.c.h.b16 %v1460
    %v1636 = vunpack.c.l.b16 %v1461
    %v1637 = vunpack.c.h.b16 %v1461
    %v1638 = vunpack.c.l.b16 %v1462
    %v1639 = vunpack.c.h.b16 %v1462
    %v1640 = vunpack.c.l.b16 %v1463
    %v1641 = vunpack.c.h.b16 %v1463
    %v1642 = vunpack.c.l.b16 %v1464
    %v1643 = vunpack.c.h.b16 %v1464
    %v1644 = vunpack.c.l.b16 %v1465
    %v1645 = vunpack.c.h.b16 %v1465
    %v1646 = vunpack.c.l.b16 %v1466
    %v1647 = vunpack.c.h.b16 %v1466
    %v1648 = vunpack.c.l.b16 %v1467
    %v1649 = vunpack.c.h.b16 %v1467
    %v1650 = vunpack.c.l.b16 %v1468
    %v1651 = vunpack.c.h.b16 %v1468
    %v1652 = vunpack.c.l.b16 %v1469
    %v1653 = vunpack.c.h.b16 %v1469
    %v1654 = vunpack.c.l.b16 %v1470
    %v1655 = vunpack.c.h.b16 %v1470
    %v1656 = vunpack.c.l.b16 %v1471
    %v1657 = vunpack.c.h.b16 %v1471
    %v1658 = vunpack.c.l.b16 %v1472
    %v1659 = vunpack.c.h.b16 %v1472
    %v1660 = vunpack.c.l.b16 %v1473
    %v1661 = vunpack.c.h.b16 %v1473
    %v1662 = vunpack.c.l.b16 %v1474
    %v1663 = vunpack.c.h.b16 %v1474
    %v1664 = vunpack.c.l.b16 %v1475
    %v1665 = vunpack.c.h.b16 %v1475
    %v1666 = vunpack.c.l.b16 %v1476
    %v1667 = vunpack.c.h.b16 %v1476
    %v1668 = vunpack.c.l.b16 %v1477
    %v1669 = vunpack.c.h.b16 %v1477
    %v1670 = vpack.c.b16 %v1544, %v1542
    %v1671 = vpack.c.b16 %v1545, %v1543
    %v1672 = vpack.c.b16 %v1548, %v1546
    %v1673 = vpack.c.b16 %v1549, %v1547
    %v1674 = vpack.c.b16 %v1552, %v1550
    %v1675 = vpack.c.b16 %v1553, %v1551
    %v1676 = vpack.c.b16 %v1556, %v1554
    %v1677 = vpack.c.b16 %v1557, %v1555
    %v1678 = vpack.c.b16 %v1560, %v1558
    %v1679 = vpack.c.b16 %v1561, %v1559
    %v1680 = vpack.c.b16 %v1564, %v1562
    %v1681 = vpack.c.b16 %v1565, %v1563
    %v1682 = vpack.c.b16 %v1568, %v1566
    %v1683 = vpack.c.b16 %v1569, %v1567
    %v1684 = vpack.c.b16 %v1572, %v1570
    %v1685 = vpack.c.b16 %v1573, %v1571
    %v1686 = vpack.c.b16 %v1576, %v1574
    %v1687 = vpack.c.b16 %v1577, %v1575
    %v1688 = vpack.c.b16 %v1580, %v1578
    %v1689 = vpack.c.b16 %v1581, %v1579
    %v1690 = vpack.c.b16 %v1584, %v1582
    %v1691 = vpack.c.b16 %v1585, %v1583
    %v1692 = vpack.c.b16 %v1588, %v1586
    %v1693 = vpack.c.b16 %v1589, %v1587
    %v1694 = vpack.c.b16 %v1592, %v1590
    %v1695 = vpack.c.b16 %v1593, %v1591
    %v1696 = vpack.c.b16 %v1596, %v1594
    %v1697 = vpack.c.b16 %v1597, %v1595
    %v1698 = vpack.c.b16 %v1600, %v1598
    %v1699 = vpack.c.b16 %v1601, %v1599
    %v1700 = vpack.c.b16 %v1604, %v1602
    %v1701 = vpack.c.b16 %v1605, %v1603
    %v1702 = vpack.c.b16 %v1608, %v1606
    %v1703 = vpack.c.b16 %v1609, %v1607
    %v1704 = vpack.c.b16 %v1612, %v1610
    %v1705 = vpack.c.b16 %v1613, %v1611
    %v1706 = vpack.c.b16 %v1616, %v1614
    %v1707 = vpack.c.b16 %v1617, %v1615
    %v1708 = vpack.c.b16 %v1620, %v1618
    %v1709 = vpack.c.b16 %v1621, %v1619
    %v1710 = vpack.c.b16 %v1624, %v1622
    %v1711 = vpack.c.b16 %v1625, %v1623
    %v1712 = vpack.c.b16 %v1628, %v1626
    %v1713 = vpack.c.b16 %v1629, %v1627
    %v1714 = vpack.c.b16 %v1632, %v1630
    %v1715 = vpack.c.b16 %v1633, %v1631
    %v1716 = vpack.c.b16 %v1636, %v1634
    %v1717 = vpack.c.b16 %v1637, %v1635
    %v1718 = vpack.c.b16 %v1640, %v1638
    %v1719 = vpack.c.b16 %v1641, %v1639
    %v1720 = vpack.c.b16 %v1644, %v1642
    %v1721 = vpack.c.b16 %v1645, %v1643
    %v1722 = vpack.c.b16 %v1648, %v1646
    %v1723 = vpack.c.b16 %v1649, %v1647
    %v1724 = vpack.c.b16 %v1652, %v1650
    %v1725 = vpack.c.b16 %v1653, %v1651
    %v1726 = vpack.c.b16 %v1656, %v1654
    %v1727 = vpack.c.b16 %v1657, %v1655
    %v1728 = vpack.c.b16 %v1660, %v1658
    %v1729 = vpack.c.b16 %v1661, %v1659
    %v1730 = vpack.c.b16 %v1664, %v1662
    %v1731 = vpack.c.b16 %v1665, %v1663
    %v1732 = vpack.c.b16 %v1668, %v1666
    %v1733 = vpack.c.b16 %v1669, %v1667
    %1798 = vmatprep.subr.bf16.mxu0 %v1671
    %1799 = vmatpush1.bf16.msra.mxu0 %v1670
    %1800 = vmatprep.subr.bf16.mxu0 %v1673
    %1801 = vmatpush1.bf16.msra.mxu0 %v1672
    %1802 = vmatprep.subr.bf16.mxu0 %v1675
    %1803 = vmatpush1.bf16.msra.mxu0 %v1674
    %1804 = vmatprep.subr.bf16.mxu0 %v1677
    %1805 = vmatpush1.bf16.msra.mxu0 %v1676
    %1806 = vmatprep.subr.bf16.mxu0 %v1679
    %1807 = vmatpush1.bf16.msra.mxu0 %v1678
    %1808 = vmatprep.subr.bf16.mxu0 %v1681
    %1809 = vmatpush1.bf16.msra.mxu0 %v1680
    %1810 = vmatprep.subr.bf16.mxu0 %v1683
    %1811 = vmatpush1.bf16.msra.mxu0 %v1682
    %1812 = vmatprep.subr.bf16.mxu0 %v1685
    %1813 = vmatpush1.bf16.msra.mxu0 %v1684
    %1814 = vmatprep.subr.bf16.mxu0 %v1687
    %1815 = vmatpush1.bf16.msra.mxu0 %v1686
    %1816 = vmatprep.subr.bf16.mxu0 %v1689
    %1817 = vmatpush1.bf16.msra.mxu0 %v1688
    %1818 = vmatprep.subr.bf16.mxu0 %v1691
    %1819 = vmatpush1.bf16.msra.mxu0 %v1690
    %1820 = vmatprep.subr.bf16.mxu0 %v1693
    %1821 = vmatpush1.bf16.msra.mxu0 %v1692
    %1822 = vmatprep.subr.bf16.mxu0 %v1695
    %1823 = vmatpush1.bf16.msra.mxu0 %v1694
    %1824 = vmatprep.subr.bf16.mxu0 %v1697
    %1825 = vmatpush1.bf16.msra.mxu0 %v1696
    %1826 = vmatprep.subr.bf16.mxu0 %v1699
    %1827 = vmatpush1.bf16.msra.mxu0 %v1698
    %1828 = vmatprep.subr.bf16.mxu0 %v1701
    %1829 = vmatpush1.bf16.msra.mxu0 %v1700
    %1830 = vmatprep.mubr.bf16.mxu0 %v1411
    %1831 = vmatmul.mubr.bf16.gmra.mrb[0].mxu0 %v1410
    %v1832 = vpop.f32.mrb[0].mxu0
    %v1833 = vadd.f32 0.0, %v1832
    %v1834 = vpop.f32.mrb[0].mxu0
    %v1835 = vadd.f32 0.0, %v1834
    %v1836 = vpop.f32.mrb[0].mxu0
    %v1837 = vpop.f32.mrb[0].mxu0
    %1838 = vdwg.mxu0
    %1839 = vmatprep.subr.bf16.mxu0 %v1703
    %1840 = vmatpush1.bf16.msra.mxu0 %v1702
    %1841 = vmatprep.subr.bf16.mxu0 %v1705
    %1842 = vmatpush1.bf16.msra.mxu0 %v1704
    %1843 = vmatprep.subr.bf16.mxu0 %v1707
    %1844 = vmatpush1.bf16.msra.mxu0 %v1706
    %1845 = vmatprep.subr.bf16.mxu0 %v1709
    %1846 = vmatpush1.bf16.msra.mxu0 %v1708
    %1847 = vmatprep.subr.bf16.mxu0 %v1711
    %1848 = vmatpush1.bf16.msra.mxu0 %v1710
    %1849 = vmatprep.subr.bf16.mxu0 %v1713
    %1850 = vmatpush1.bf16.msra.mxu0 %v1712
    %1851 = vmatprep.subr.bf16.mxu0 %v1715
    %1852 = vmatpush1.bf16.msra.mxu0 %v1714
    %1853 = vmatprep.subr.bf16.mxu0 %v1717
    %1854 = vmatpush1.bf16.msra.mxu0 %v1716
    %1855 = vmatprep.subr.bf16.mxu0 %v1719
    %1856 = vmatpush1.bf16.msra.mxu0 %v1718
    %1857 = vmatprep.subr.bf16.mxu0 %v1721
    %1858 = vmatpush1.bf16.msra.mxu0 %v1720
    %1859 = vmatprep.subr.bf16.mxu0 %v1723
    %1860 = vmatpush1.bf16.msra.mxu0 %v1722
    %1861 = vmatprep.subr.bf16.mxu0 %v1725
    %1862 = vmatpush1.bf16.msra.mxu0 %v1724
    %1863 = vmatprep.subr.bf16.mxu0 %v1727
    %1864 = vmatpush1.bf16.msra.mxu0 %v1726
    %1865 = vmatprep.subr.bf16.mxu0 %v1729
    %1866 = vmatpush1.bf16.msra.mxu0 %v1728
    %1867 = vmatprep.subr.bf16.mxu0 %v1731
    %1868 = vmatpush1.bf16.msra.mxu0 %v1730
    %1869 = vmatprep.subr.bf16.mxu0 %v1733
    %1870 = vmatpush1.bf16.msra.mxu0 %v1732
    %1871 = vmatprep.mubr.bf16.mxu0 %v1413
    %1872 = vmatmul.mubr.bf16.gmra.mrb[0].mxu0 %v1412
    %v1873 = vpop.f32.mrb[0].mxu0
    %v1874 = vadd.f32 %v1833, %v1873
    %v1875 = vpop.f32.mrb[0].mxu0
    %v1876 = vadd.f32 %v1835, %v1875
    %v1877 = vpop.f32.mrb[0].mxu0
    %v1878 = vpop.f32.mrb[0].mxu0
    %1879 = vdwg.mxu0
    %s1880 = sld [smem:[#allocation10]]
    %v1881 = vstv %s1880
    %v1882 = vmul.f32 %v1874, %v1881
    %v1883 = vmul.f32 %v1876, %v1881
    %s1884 = sld [smem:[#allocation10 + $0x1]]
    %v1885 = vstv %s1884
    %v1886 = vadd.f32 %v1882, %v1885
    %v1887 = vadd.f32 %v1883, %v1885
    %v1888 = vxor.u32 %v1886, 2147483648
    %v1889 = vxor.u32 %v1887, 2147483648
    %v1890 = vmul.f32 %v1888, 1.442695
    %v1891 = vpow.pop %v1890
    %v1892 = vmul.f32 %v1889, 1.442695
    %v1893 = vpow.pop %v1892
    %v1894 = vadd.f32 %v1891, 1.0
    %v1895 = vadd.f32 %v1893, 1.0
    %v1896 = vrcp.pop %v1894
    %v1897 = vmul.f32 1.0, %v1896
    %v1898 = vrcp.pop %v1895
    %v1899 = vmul.f32 1.0, %v1898
    %1900 = vst [vmem:[#allocation3] sm:$0xff] %v1897
    %1901 = vst [vmem:[#allocation3 + $0x8] sm:$0xff] %v1899
    loop: start=0, step=1, limit=2
    $region56: #{tpu_custom_call.1} parent=1 // loop_pre_header
      _
    $region57: #{tpu_custom_call.1} parent=1 // loop_header
      %s1903 = sphi 0, %s1907
      %p1904 = scmp.ge.s32.totalorder %s1903, 2
    $region58: #{tpu_custom_call.1} parent=1 // loop_header_branch
      %1906 = sbr.rel (%p1904) target = $region62
    $region59: #{tpu_custom_call.1} parent=1 // loop_body
      %s1908 = smul.u32 %s1903, 128
      %s1909 = sshra.s32 %s1908, 7
      %s1910 = sand.u32 %s1908, 127
      %s1911 = smul.addr %s1909, 8
      %s1912 = scalar_lea.vmem [#allocation4], %s1911
      %v1913 = vld [vmem:[%s1912] sm:$0xff]
      %v1914 = vld [vmem:[%s1912 + $0x10] sm:$0xff]
      %v1915 = vld [vmem:[%s1912 + $0x20] sm:$0xff]
      %v1916 = vld [vmem:[%s1912 + $0x30] sm:$0xff]
      %v1917 = vld [vmem:[%s1912 + $0x40] sm:$0xff]
      %v1918 = vld [vmem:[%s1912 + $0x50] sm:$0xff]
      %v1919 = vld [vmem:[%s1912 + $0x60] sm:$0xff]
      %v1920 = vld [vmem:[%s1912 + $0x70] sm:$0xff]
      %v1921 = vld [vmem:[%s1912 + $0x80] sm:$0xff]
      %v1922 = vld [vmem:[%s1912 + $0x90] sm:$0xff]
      %v1923 = vld [vmem:[%s1912 + $0xa0] sm:$0xff]
      %v1924 = vld [vmem:[%s1912 + $0xb0] sm:$0xff]
      %v1925 = vld [vmem:[%s1912 + $0xc0] sm:$0xff]
      %v1926 = vld [vmem:[%s1912 + $0xd0] sm:$0xff]
      %v1927 = vld [vmem:[%s1912 + $0xe0] sm:$0xff]
      %v1928 = vld [vmem:[%s1912 + $0xf0] sm:$0xff]
      %v1929 = vld [vmem:[%s1912 + $0x100] sm:$0xff]
      %v1930 = vld [vmem:[%s1912 + $0x110] sm:$0xff]
      %v1931 = vld [vmem:[%s1912 + $0x120] sm:$0xff]
      %v1932 = vld [vmem:[%s1912 + $0x130] sm:$0xff]
      %v1933 = vld [vmem:[%s1912 + $0x140] sm:$0xff]
      %v1934 = vld [vmem:[%s1912 + $0x150] sm:$0xff]
      %v1935 = vld [vmem:[%s1912 + $0x160] sm:$0xff]
      %v1936 = vld [vmem:[%s1912 + $0x170] sm:$0xff]
      %v1937 = vld [vmem:[%s1912 + $0x180] sm:$0xff]
      %v1938 = vld [vmem:[%s1912 + $0x190] sm:$0xff]
      %v1939 = vld [vmem:[%s1912 + $0x1a0] sm:$0xff]
      %v1940 = vld [vmem:[%s1912 + $0x1b0] sm:$0xff]
      %v1941 = vld [vmem:[%s1912 + $0x1c0] sm:$0xff]
      %v1942 = vld [vmem:[%s1912 + $0x1d0] sm:$0xff]
      %v1943 = vld [vmem:[%s1912 + $0x1e0] sm:$0xff]
      %v1944 = vld [vmem:[%s1912 + $0x1f0] sm:$0xff]
      %s1945 = smul.addr %s1909, 8
      %s1946 = scalar_lea.vmem [#allocation3], %s1945
      %v1947 = vld [vmem:[%s1946] sm:$0xff]
      %v1949 = vcombine.high %v1947, %v1947
      %v1951 = vunpack.c.l.s4 1966171168
      %v1952 = vunpack.c.0.s8 %v1951
      %v1953 = vlaneseq
      %v1954 = vshrl.u32 %v1953, 7
      %v1955 = vsub.s32 %v1952, %v1954
      %v1956 = vrot.slane %v1947, %v1955
      %v1958 = vunpack.c.l.s4 1966171168
      %v1959 = vunpack.c.0.s8 %v1958
      %v1960 = vlaneseq
      %v1961 = vshrl.u32 %v1960, 7
      %v1962 = vsub.s32 %v1959, %v1961
      %v1963 = vrot.slane %v1949, %v1962
      %v1964 = vcombine.high %v1956, %v1956
      %v1965 = vcombine.high %v1963, %v1963
      %v1967 = vunpack.c.l.s4 1966171168
      %v1968 = vunpack.c.0.s8 %v1967
      %v1969 = vlaneseq
      %v1970 = vshrl.u32 %v1969, 7
      %v1971 = vsub.s32 %v1968, %v1970
      %v1972 = vrot.slane %v1956, %v1971
      %v1974 = vunpack.c.l.s4 1966171168
      %v1975 = vunpack.c.0.s8 %v1974
      %v1976 = vlaneseq
      %v1977 = vshrl.u32 %v1976, 7
      %v1978 = vsub.s32 %v1975, %v1977
      %v1979 = vrot.slane %v1963, %v1978
      %v1981 = vunpack.c.l.s4 1966171168
      %v1982 = vunpack.c.0.s8 %v1981
      %v1983 = vlaneseq
      %v1984 = vshrl.u32 %v1983, 7
      %v1985 = vsub.s32 %v1982, %v1984
      %v1986 = vrot.slane %v1964, %v1985
      %v1988 = vunpack.c.l.s4 1966171168
      %v1989 = vunpack.c.0.s8 %v1988
      %v1990 = vlaneseq
      %v1991 = vshrl.u32 %v1990, 7
      %v1992 = vsub.s32 %v1989, %v1991
      %v1993 = vrot.slane %v1965, %v1992
      %v1994 = vcombine.high %v1972, %v1972
      %v1995 = vcombine.high %v1979, %v1979
      %v1996 = vcombine.high %v1986, %v1986
      %v1997 = vcombine.high %v1993, %v1993
      %v1998 = vmul.f32 %v1913, %v992
      %v1999 = vmul.f32 %v1914, %v996
      %v2000 = vmul.f32 %v1915, %v1000
      %v2001 = vmul.f32 %v1916, %v1004
      %v2002 = vmul.f32 %v1917, %v1011
      %v2003 = vmul.f32 %v1918, %v1015
      %v2004 = vmul.f32 %v1919, %v1019
      %v2005 = vmul.f32 %v1920, %v1023
      %v2006 = vmul.f32 %v1921, %v1030
      %v2007 = vmul.f32 %v1922, %v1034
      %v2008 = vmul.f32 %v1923, %v1038
      %v2009 = vmul.f32 %v1924, %v1042
      %v2010 = vmul.f32 %v1925, %v1049
      %v2011 = vmul.f32 %v1926, %v1053
      %v2012 = vmul.f32 %v1927, %v1057
      %v2013 = vmul.f32 %v1928, %v1061
      %v2014 = vmul.f32 %v1929, %v1068
      %v2015 = vmul.f32 %v1930, %v1072
      %v2016 = vmul.f32 %v1931, %v1076
      %v2017 = vmul.f32 %v1932, %v1080
      %v2018 = vmul.f32 %v1933, %v1087
      %v2019 = vmul.f32 %v1934, %v1091
      %v2020 = vmul.f32 %v1935, %v1095
      %v2021 = vmul.f32 %v1936, %v1099
      %v2022 = vmul.f32 %v1937, %v1106
      %v2023 = vmul.f32 %v1938, %v1110
      %v2024 = vmul.f32 %v1939, %v1114
      %v2025 = vmul.f32 %v1940, %v1118
      %v2026 = vmul.f32 %v1941, %v1125
      %v2027 = vmul.f32 %v1942, %v1129
      %v2028 = vmul.f32 %v1943, %v1133
      %v2029 = vmul.f32 %v1944, %v1137
      %v2030 = vlaneseq
      %v2031 = vshrl.u32 %v2030, 7
      %v2032 = vsub.s32 0, %v2031
      %v2033 = vrot.slane %v1972, %v2032
      %v2034 = vlaneseq
      %v2035 = vshrl.u32 %v2034, 7
      %v2036 = vsub.s32 0, %v2035
      %v2037 = vrot.slane %v1986, %v2036
      %v2038 = vlaneseq
      %v2039 = vshrl.u32 %v2038, 7
      %v2040 = vsub.s32 0, %v2039
      %v2041 = vrot.slane %v1994, %v2040
      %v2042 = vlaneseq
      %v2043 = vshrl.u32 %v2042, 7
      %v2044 = vsub.s32 0, %v2043
      %v2045 = vrot.slane %v1996, %v2044
      %v2046 = vlaneseq
      %v2047 = vshrl.u32 %v2046, 7
      %v2048 = vsub.s32 0, %v2047
      %v2049 = vrot.slane %v1979, %v2048
      %v2050 = vlaneseq
      %v2051 = vshrl.u32 %v2050, 7
      %v2052 = vsub.s32 0, %v2051
      %v2053 = vrot.slane %v1993, %v2052
      %v2054 = vlaneseq
      %v2055 = vshrl.u32 %v2054, 7
      %v2056 = vsub.s32 0, %v2055
      %v2057 = vrot.slane %v1995, %v2056
      %v2058 = vlaneseq
      %v2059 = vshrl.u32 %v2058, 7
      %v2060 = vsub.s32 0, %v2059
      %v2061 = vrot.slane %v1997, %v2060
      %v2070 = vmul.f32 %v1998, %v2033
      %v2071 = vmul.f32 %v1999, %v2033
      %v2072 = vmul.f32 %v2000, %v2033
      %v2073 = vmul.f32 %v2001, %v2033
      %v2074 = vmul.f32 %v2002, %v2037
      %v2075 = vmul.f32 %v2003, %v2037
      %v2076 = vmul.f32 %v2004, %v2037
      %v2077 = vmul.f32 %v2005, %v2037
      %v2078 = vmul.f32 %v2006, %v2041
      %v2079 = vmul.f32 %v2007, %v2041
      %v2080 = vmul.f32 %v2008, %v2041
      %v2081 = vmul.f32 %v2009, %v2041
      %v2082 = vmul.f32 %v2010, %v2045
      %v2083 = vmul.f32 %v2011, %v2045
      %v2084 = vmul.f32 %v2012, %v2045
      %v2085 = vmul.f32 %v2013, %v2045
      %v2086 = vmul.f32 %v2014, %v2049
      %v2087 = vmul.f32 %v2015, %v2049
      %v2088 = vmul.f32 %v2016, %v2049
      %v2089 = vmul.f32 %v2017, %v2049
      %v2090 = vmul.f32 %v2018, %v2053
      %v2091 = vmul.f32 %v2019, %v2053
      %v2092 = vmul.f32 %v2020, %v2053
      %v2093 = vmul.f32 %v2021, %v2053
      %v2094 = vmul.f32 %v2022, %v2057
      %v2095 = vmul.f32 %v2023, %v2057
      %v2096 = vmul.f32 %v2024, %v2057
      %v2097 = vmul.f32 %v2025, %v2057
      %v2098 = vmul.f32 %v2026, %v2061
      %v2099 = vmul.f32 %v2027, %v2061
      %v2100 = vmul.f32 %v2028, %v2061
      %v2101 = vmul.f32 %v2029, %v2061
      %s2102 = smul.addr %s1909, 8
      %s2103 = scalar_lea.vmem [#allocation11], %s2102
      %2104 = vst [vmem:[%s2103] sm:$0xff] %v2070
      %2105 = vst [vmem:[%s2103 + $0x10] sm:$0xff] %v2071
      %2106 = vst [vmem:[%s2103 + $0x20] sm:$0xff] %v2072
      %2107 = vst [vmem:[%s2103 + $0x30] sm:$0xff] %v2073
      %2108 = vst [vmem:[%s2103 + $0x40] sm:$0xff] %v2074
      %2109 = vst [vmem:[%s2103 + $0x50] sm:$0xff] %v2075
      %2110 = vst [vmem:[%s2103 + $0x60] sm:$0xff] %v2076
      %2111 = vst [vmem:[%s2103 + $0x70] sm:$0xff] %v2077
      %2112 = vst [vmem:[%s2103 + $0x80] sm:$0xff] %v2078
      %2113 = vst [vmem:[%s2103 + $0x90] sm:$0xff] %v2079
      %2114 = vst [vmem:[%s2103 + $0xa0] sm:$0xff] %v2080
      %2115 = vst [vmem:[%s2103 + $0xb0] sm:$0xff] %v2081
      %2116 = vst [vmem:[%s2103 + $0xc0] sm:$0xff] %v2082
      %2117 = vst [vmem:[%s2103 + $0xd0] sm:$0xff] %v2083
      %2118 = vst [vmem:[%s2103 + $0xe0] sm:$0xff] %v2084
      %2119 = vst [vmem:[%s2103 + $0xf0] sm:$0xff] %v2085
      %2120 = vst [vmem:[%s2103 + $0x100] sm:$0xff] %v2086
      %2121 = vst [vmem:[%s2103 + $0x110] sm:$0xff] %v2087
      %2122 = vst [vmem:[%s2103 + $0x120] sm:$0xff] %v2088
      %2123 = vst [vmem:[%s2103 + $0x130] sm:$0xff] %v2089
      %2124 = vst [vmem:[%s2103 + $0x140] sm:$0xff] %v2090
      %2125 = vst [vmem:[%s2103 + $0x150] sm:$0xff] %v2091
      %2126 = vst [vmem:[%s2103 + $0x160] sm:$0xff] %v2092
      %2127 = vst [vmem:[%s2103 + $0x170] sm:$0xff] %v2093
      %2128 = vst [vmem:[%s2103 + $0x180] sm:$0xff] %v2094
      %2129 = vst [vmem:[%s2103 + $0x190] sm:$0xff] %v2095
      %2130 = vst [vmem:[%s2103 + $0x1a0] sm:$0xff] %v2096
      %2131 = vst [vmem:[%s2103 + $0x1b0] sm:$0xff] %v2097
      %2132 = vst [vmem:[%s2103 + $0x1c0] sm:$0xff] %v2098
      %2133 = vst [vmem:[%s2103 + $0x1d0] sm:$0xff] %v2099
      %2134 = vst [vmem:[%s2103 + $0x1e0] sm:$0xff] %v2100
      %2135 = vst [vmem:[%s2103 + $0x1f0] sm:$0xff] %v2101
    $region60: #{tpu_custom_call.1} parent=1 // loop_footer
      %s1907 = sadd.s32 1, %s1903
    $region61: #{tpu_custom_call.1} parent=1 // loop_footer_branch
      %1902 = sbr.rel target = $region57
    $region62: #{tpu_custom_call.1} parent=1 // loop_exit
      _
    // Predicated region
    $region63: #{tpu_custom_call.1} parent=1 // pred_check
      _
    $region64: #{tpu_custom_call.1} parent=1 // pred_check_branch
      %2137 = sbr.rel (0) target = $region66
    $region65: #{tpu_custom_call.1} parent=1 // pred_region
      %s2139 = ssub.s32 8192, 8192
      %2140 = vsyncadd [#allocation6], %s2139
      %s2141 = sshll.u32 [#allocation11], 4
      %s2142 = int_to_ptr.vmem [resolvable:$true] %s2141
      %2147 = dma.vmem_to_hbm [thread:$0]  %s2142, 8192, %s7, [#allocation6], 256, 256, 16
    $region66: #{tpu_custom_call.1} parent=1 // pred_fallthru
      _
    // Predicated region
    $region67: #{tpu_custom_call.1} parent=1 // pred_check
      _
    $region68: #{tpu_custom_call.1} parent=1 // pred_check_branch
      %2149 = sbr.rel (0) target = $region70
    $region69: #{tpu_custom_call.1} parent=1 // pred_region
      %2150 = dma.done [#allocation6], 8192
    $region70: #{tpu_custom_call.1} parent=1 // pred_fallthru
      _
    %2151 = vsyncpa [#allocation5], 1
    %2152 = vsyncpa [#allocation9], 1
    %2153 = vsyncpa [#allocation6], 1
    %2154 = vsyncpa [#allocation7], 1

</llo_original>
